<compile_context>
chip_gen: v7x
topology: tpu7x:2x2x1
jax: 0.10.0
libtpu: 0.0.40
codegen_flags: <defaults>
</compile_context>

<pallas_src>
import functools

import numpy as np
import jax
import jax.numpy as jnp
from jax.experimental import pallas as pl
from jax.experimental.pallas import tpu as pltpu  # noqa: F401  (TPU backend)


def _round_up(x, m):
    return (x + m - 1) // m * m


# ----------------------------------------------------------------------------
# Fused Pallas kernel: conv1 (pre-im2col'ed GEMM) -> conv2 -> conv3 -> conv4(+4b)
# All matmuls accumulate in f32 on the MXU; the inter-layer "im2col" is done
# with constant 0/1 gather matrices, so it is also just jnp.dot.
# ----------------------------------------------------------------------------
def _encoder_kernel(p1_ref, w1_ref, b1_ref,
                    g2_ref, w2_ref, b2_ref,
                    g3_ref, w3_ref, b3_ref,
                    g4_ref, w4_ref, b4_ref,
                    o_ref):
    f32 = jnp.float32

    def conv_from_gathers(act_in, g_ref, w_ref, b_ref, relu):
        # out[m, oc] = sum_k sum_c act_in[sel(m, k), c] * W[k, c, oc] + b[oc]
        # where sel(., k) is encoded in the 0/1 matrix g_ref[k] (exact gather).
        kk = g_ref.shape[0]
        acc = None
        for k in range(kk):                 # unrolled at trace time (kk <= 9)
            patch = jnp.dot(g_ref[k], act_in, preferred_element_type=f32)
            term = jnp.dot(patch, w_ref[k], preferred_element_type=f32)
            acc = term if acc is None else acc + term
        acc = acc + b_ref[...]              # (1, C_out) broadcasts over rows
        if relu:
            acc = jnp.maximum(acc, 0.0)
        return acc

    # conv1 + ReLU: input was im2col'ed outside -> a single GEMM.
    act1 = jnp.dot(p1_ref[...], w1_ref[...], preferred_element_type=f32)
    act1 = jnp.maximum(act1 + b1_ref[...], 0.0)

    act2 = conv_from_gathers(act1, g2_ref, w2_ref, b2_ref, relu=True)
    act3 = conv_from_gathers(act2, g3_ref, w3_ref, b3_ref, relu=True)
    # conv4 (and conv4b when present) merged into one head matmul.
    act4 = conv_from_gathers(act3, g4_ref, w4_ref, b4_ref, relu=False)
    o_ref[...] = act4.astype(o_ref.dtype)


def _full_block(shape):
    if len(shape) == 2:
        return pl.BlockSpec(shape, lambda: (0, 0))
    return pl.BlockSpec(shape, lambda: (0, 0, 0))


def _fused_encoder_call(patches1, kp):
    args = (patches1,
            kp["w1"], kp["b1"],
            kp["g2"], kp["w2"], kp["b2"],
            kp["g3"], kp["w3"], kp["b3"],
            kp["g4"], kp["w4"], kp["b4"])
    m_out = kp["g4"].shape[1]
    c_out = kp["w4"].shape[-1]
    return pl.pallas_call(
        _encoder_kernel,
        out_shape=jax.ShapeDtypeStruct((m_out, c_out), jnp.float32),
        in_specs=[_full_block(a.shape) for a in args],
        out_specs=_full_block((m_out, c_out)),
    )(*args)


# ----------------------------------------------------------------------------
# Host-side, one-time layout preparation (gather matrices + kernel-ready weights)
# ----------------------------------------------------------------------------
def _im2col_c1(x, k, stride):
    """x: (B, 1, H, W) -> (B*OH*OW, k*k), columns ordered (kh, kw)."""
    B, _, H, W = x.shape
    OH = (H - k) // stride + 1
    OW = (W - k) // stride + 1
    cols = []
    for i in range(k):
        for j in range(k):
            cols.append(x[:, 0,
                          i:i + stride * (OH - 1) + 1:stride,
                          j:j + stride * (OW - 1) + 1:stride])   # (B, OH, OW)
    p = jnp.stack(cols, axis=-1)                                 # (B, OH, OW, k*k)
    return p.reshape(B * OH * OW, k * k)


def _gather_mats(batch, h_in, w_in, k, stride, m_in_pad, m_out_pad):
    """Constant 0/1 matrices G[k*k, m_out_pad, m_in_pad] encoding the im2col row
    selection for one conv layer (row order (b, oh, ow), input rows (b, h, w))."""
    oh_n = (h_in - k) // stride + 1
    ow_n = (w_in - k) // stride + 1
    g = np.zeros((k * k, m_out_pad, m_in_pad), np.float32)
    for kh in range(k):
        for kw in range(k):
            kk = kh * k + kw
            for b in range(batch):
                for i in range(oh_n):
                    for j in range(ow_n):
                        mo = (b * oh_n + i) * ow_n + j
                        mi = (b * h_in + stride * i + kh) * w_in + (stride * j + kw)
                        g[kk, mo, mi] = 1.0
    return g


def prepare_encoder_params(params, batch, hid_dim, stgs, img_hw=(28, 28)):
    """One-time prep: weights in (K, N) matmul layout (K / C padded to multiples
    of 8), mu/logstd heads merged, plus the constant inter-layer gather mats."""
    H, W = img_hw

    def conv_out(h, w, k, s):
        return (h - k) // s + 1, (w - k) // s + 1

    oh1, ow1 = conv_out(H, W, 5, 2)          # 12, 12
    oh2, ow2 = conv_out(oh1, ow1, 3, 2)      # 5, 5
    oh3, ow3 = conv_out(oh2, ow2, 3, 2)      # 2, 2

    c2h = 2 * hid_dim
    m1 = _round_up(batch * oh1 * ow1, 8)     # rows of act1
    m2 = _round_up(batch * oh2 * ow2, 8)     # rows of act2 (padded rows never read)
    m3 = _round_up(batch * oh3 * ow3, 8)     # rows of act3
    m4 = _round_up(batch, 8)                 # rows of the 1x1-spatial head output

    # conv1: (6, 1, 5, 5) -> (32, 8) GEMM weight, zero padded (K 25->32, C 6->8)
    w1 = params["w1"].reshape(6, 25).T
    w1p = jnp.zeros((32, 8), jnp.float32).at[:25, :6].set(w1)
    b1p = jnp.zeros((1, 8), jnp.float32).at[0, :6].set(params["b1"])

    # conv2: (16, 6, 3, 3) -> per-tap (8-padded C_in, 16)
    w2 = jnp.transpose(params["w2"], (2, 3, 1, 0)).reshape(9, 6, 16)
    w2p = jnp.zeros((9, 8, 16), jnp.float32).at[:, :6, :].set(w2)
    b2p = params["b2"].reshape(1, 16)

    # conv3: (2h, 16, 3, 3) -> per-tap (16, 2h)
    w3p = jnp.transpose(params["w3"], (2, 3, 1, 0)).reshape(9, 16, c2h)
    b3p = params["b3"].reshape(1, c2h)

    # conv4 (+ conv4b merged when stgs=False): per-tap (2h, h or 2h)
    w4p = jnp.transpose(params["w4"], (2, 3, 1, 0)).reshape(4, c2h, hid_dim)
    b4 = params["b4"]
    if not stgs:
        w4b = jnp.transpose(params["w4b"], (2, 3, 1, 0)).reshape(4, c2h, hid_dim)
        w4p = jnp.concatenate([w4p, w4b], axis=-1)         # merged mu/logstd heads
        b4 = jnp.concatenate([b4, params["b4b"]])
    b4p = b4.reshape(1, -1)

    g2 = jnp.asarray(_gather_mats(batch, oh1, ow1, 3, 2, m1, m2))
    g3 = jnp.asarray(_gather_mats(batch, oh2, ow2, 3, 2, m2, m3))
    g4 = jnp.asarray(_gather_mats(batch, oh3, ow3, 2, 1, m3, m4))

    return dict(w1=w1p, b1=b1p, g2=g2, w2=w2p, b2=b2p,
                g3=g3, w3=w3p, b3=b3p, g4=g4, w4=w4p, b4=b4p)


# ----------------------------------------------------------------------------
# Jitted forward pass (mirrors the PyTorch module)
# ----------------------------------------------------------------------------
@functools.partial(jax.jit, static_argnums=(2, 3))
def encoder_forward(kparams, x, hid_dim, stgs):
    B = x.shape[0]
    patches = _im2col_c1(x, 5, 2)                              # (B*144, 25)
    m1 = kparams["g2"].shape[2]
    k1p = kparams["w1"].shape[0]
    patches = jnp.pad(patches, ((0, m1 - patches.shape[0]),
                                (0, k1p - patches.shape[1])))  # (m1, 32)
    out = _fused_encoder_call(patches, kparams)                # (m4, heads)
    if not stgs:
        mu = out[:B, :hid_dim].reshape(B, hid_dim, 1, 1)
        logstd = out[:B, hid_dim:2 * hid_dim].reshape(B, hid_dim, 1, 1)
        return mu, logstd
    return out[:B, :hid_dim]                                   # == x.view(-1, hid_dim)


# ----------------------------------------------------------------------------
# Deterministic parameter init (Conv2d-style uniform(-1/sqrt(fan_in), +))
# ----------------------------------------------------------------------------
def init_params(key, hid_dim, stgs):
    def conv_init(k, oc, ic, kh, kw):
        kw_, kb_ = jax.random.split(k)
        bound = 1.0 / jnp.sqrt(ic * kh * kw)
        w = jax.random.uniform(kw_, (oc, ic, kh, kw), jnp.float32, -bound, bound)
        b = jax.random.uniform(kb_, (oc,), jnp.float32, -bound, bound)
        return w, b

    keys = jax.random.split(key, 5)
    params = {}
    params["w1"], params["b1"] = conv_init(keys[0], 6, 1, 5, 5)
    params["w2"], params["b2"] = conv_init(keys[1], 16, 6, 3, 3)
    params["w3"], params["b3"] = conv_init(keys[2], 2 * hid_dim, 16, 3, 3)
    params["w4"], params["b4"] = conv_init(keys[3], hid_dim, 2 * hid_dim, 2, 2)
    if not stgs:
        params["w4b"], params["b4b"] = conv_init(keys[4], hid_dim, 2 * hid_dim, 2, 2)
    return params


# ----------------------------------------------------------------------------
# Pure-JAX reference (lax.conv) for correctness check
# ----------------------------------------------------------------------------
def _ref_conv(x, w, b, stride):
    y = jax.lax.conv_general_dilated(
        x, w, window_strides=(stride, stride), padding="VALID",
        dimension_numbers=("NCHW", "OIHW", "NCHW"))
    return y + b.reshape(1, -1, 1, 1)


def encoder_ref(params, x, hid_dim, stgs):
    x = jax.nn.relu(_ref_conv(x, params["w1"], params["b1"], 2))
    x = jax.nn.relu(_ref_conv(x, params["w2"], params["b2"], 2))
    x = jax.nn.relu(_ref_conv(x, params["w3"], params["b3"], 2))
    if not stgs:
        return (_ref_conv(x, params["w4"], params["b4"], 1),
                _ref_conv(x, params["w4b"], params["b4b"], 1))
    return _ref_conv(x, params["w4"], params["b4"], 1).reshape(-1, hid_dim)


if __name__ == "__main__":
    hid_dim = 8
    batch = 2

    key = jax.random.PRNGKey(0)
    kp, kx = jax.random.split(key)
    params = init_params(kp, hid_dim, stgs=False)
    # 28x28 single-channel input (conv stack implies 28 -> 12 -> 5 -> 2 -> 1)
    x = jax.random.normal(kx, (batch, 1, 28, 28), dtype=jnp.float32)

    # --- stgs=False (VAE): merged mu/logstd heads -----------------------------
    kparams = prepare_encoder_params(params, batch, hid_dim, stgs=False)
    mu, logstd = encoder_forward(kparams, x, hid_dim, False)
    mu, logstd = jax.block_until_ready((mu, logstd))

    mu_ref, logstd_ref = encoder_ref(params, x, hid_dim, False)
    assert mu.shape == (batch, hid_dim, 1, 1) and logstd.shape == (batch, hid_dim, 1, 1)
    assert jnp.allclose(mu, mu_ref, atol=1e-4, rtol=1e-4)
    assert jnp.allclose(logstd, logstd_ref, atol=1e-4, rtol=1e-4)

    # --- stgs=True: single head, flattened output -----------------------------
    kparams_s = prepare_encoder_params(params, batch, hid_dim, stgs=True)
    flat = encoder_forward(kparams_s, x, hid_dim, True)
    flat = jax.block_until_ready(flat)
    flat_ref = encoder_ref(params, x, hid_dim, True)
    assert flat.shape == (batch, hid_dim)
    assert jnp.allclose(flat, flat_ref, atol=1e-4, rtol=1e-4)

    print("KERNEL_OK")
</pallas_src>

<mosaic_0001>
module attributes {stable_mosaic.version = 11 : i64} {
  func.func @_encoder_kernel(%arg0: memref<288x32xf32, #tpu.memory_space<vmem>>, %arg1: memref<32x8xf32, #tpu.memory_space<vmem>>, %arg2: memref<1x8xf32, #tpu.memory_space<vmem>>, %arg3: memref<9x56x288xf32, #tpu.memory_space<vmem>>, %arg4: memref<9x8x16xf32, #tpu.memory_space<vmem>>, %arg5: memref<1x16xf32, #tpu.memory_space<vmem>>, %arg6: memref<9x8x56xf32, #tpu.memory_space<vmem>>, %arg7: memref<9x16x16xf32, #tpu.memory_space<vmem>>, %arg8: memref<1x16xf32, #tpu.memory_space<vmem>>, %arg9: memref<4x8x8xf32, #tpu.memory_space<vmem>>, %arg10: memref<4x16x16xf32, #tpu.memory_space<vmem>>, %arg11: memref<1x16xf32, #tpu.memory_space<vmem>>, %arg12: memref<8x16xf32, #tpu.memory_space<vmem>>) attributes {dimension_semantics = [], scalar_prefetch = 0 : i64, scratch_operands = 0 : i64, tpu.core_type = #tpu.core_type<tc>} {
    %c0 = arith.constant 0 : index
    %c0_0 = arith.constant 0 : index
    %0 = vector.load %arg0[%c0, %c0_0] : memref<288x32xf32, #tpu.memory_space<vmem>>, vector<288x32xf32>
    %c0_1 = arith.constant 0 : index
    %c0_2 = arith.constant 0 : index
    %1 = vector.load %arg1[%c0_1, %c0_2] : memref<32x8xf32, #tpu.memory_space<vmem>>, vector<32x8xf32>
    %cst = arith.constant dense<0.000000e+00> : vector<288x8xf32>
    %2 = tpu.matmul %0, %1, %cst {dimension_numbers = #tpu.dot_dimension_numbers<[1], [0], [0], [1], [0, 0, 1, 1], [], []>} : vector<288x32xf32>, vector<32x8xf32>, vector<288x8xf32> -> vector<288x8xf32>
    %c0_3 = arith.constant 0 : index
    %c0_4 = arith.constant 0 : index
    %3 = vector.load %arg2[%c0_3, %c0_4] : memref<1x8xf32, #tpu.memory_space<vmem>>, vector<1x8xf32>
    %4 = vector.broadcast %3 : vector<1x8xf32> to vector<288x8xf32>
    %5 = arith.addf %2, %4 : vector<288x8xf32>
    %cst_5 = arith.constant 0.000000e+00 : f32
    %6 = vector.broadcast %cst_5 : f32 to vector<288x8xf32>
    %7 = arith.maximumf %5, %6 : vector<288x8xf32>
    %c0_6 = arith.constant 0 : index
    %c0_7 = arith.constant 0 : index
    %c0_8 = arith.constant 0 : index
    %8 = vector.load %arg3[%c0_6, %c0_7, %c0_8] : memref<9x56x288xf32, #tpu.memory_space<vmem>>, vector<1x56x288xf32>
    %9 = vector.shape_cast %8 : vector<1x56x288xf32> to vector<56x288xf32>
    %cst_9 = arith.constant dense<0.000000e+00> : vector<56x8xf32>
    %10 = tpu.matmul %9, %7, %cst_9 {dimension_numbers = #tpu.dot_dimension_numbers<[1], [0], [0], [1], [0, 0, 1, 1], [], []>} : vector<56x288xf32>, vector<288x8xf32>, vector<56x8xf32> -> vector<56x8xf32>
    %c0_10 = arith.constant 0 : index
    %c0_11 = arith.constant 0 : index
    %c0_12 = arith.constant 0 : index
    %11 = vector.load %arg4[%c0_10, %c0_11, %c0_12] : memref<9x8x16xf32, #tpu.memory_space<vmem>>, vector<1x8x16xf32>
    %12 = vector.shape_cast %11 : vector<1x8x16xf32> to vector<8x16xf32>
    %cst_13 = arith.constant dense<0.000000e+00> : vector<56x16xf32>
    %13 = tpu.matmul %10, %12, %cst_13 {dimension_numbers = #tpu.dot_dimension_numbers<[1], [0], [0], [1], [0, 0, 1, 1], [], []>} : vector<56x8xf32>, vector<8x16xf32>, vector<56x16xf32> -> vector<56x16xf32>
    %c1 = arith.constant 1 : index
    %c0_14 = arith.constant 0 : index
    %c0_15 = arith.constant 0 : index
    %14 = vector.load %arg3[%c1, %c0_14, %c0_15] : memref<9x56x288xf32, #tpu.memory_space<vmem>>, vector<1x56x288xf32>
    %15 = vector.shape_cast %14 : vector<1x56x288xf32> to vector<56x288xf32>
    %cst_16 = arith.constant dense<0.000000e+00> : vector<56x8xf32>
    %16 = tpu.matmul %15, %7, %cst_16 {dimension_numbers = #tpu.dot_dimension_numbers<[1], [0], [0], [1], [0, 0, 1, 1], [], []>} : vector<56x288xf32>, vector<288x8xf32>, vector<56x8xf32> -> vector<56x8xf32>
    %c1_17 = arith.constant 1 : index
    %c0_18 = arith.constant 0 : index
    %c0_19 = arith.constant 0 : index
    %17 = vector.load %arg4[%c1_17, %c0_18, %c0_19] : memref<9x8x16xf32, #tpu.memory_space<vmem>>, vector<1x8x16xf32>
    %18 = vector.shape_cast %17 : vector<1x8x16xf32> to vector<8x16xf32>
    %cst_20 = arith.constant dense<0.000000e+00> : vector<56x16xf32>
    %19 = tpu.matmul %16, %18, %cst_20 {dimension_numbers = #tpu.dot_dimension_numbers<[1], [0], [0], [1], [0, 0, 1, 1], [], []>} : vector<56x8xf32>, vector<8x16xf32>, vector<56x16xf32> -> vector<56x16xf32>
    %20 = arith.addf %13, %19 : vector<56x16xf32>
    %c2 = arith.constant 2 : index
    %c0_21 = arith.constant 0 : index
    %c0_22 = arith.constant 0 : index
    %21 = vector.load %arg3[%c2, %c0_21, %c0_22] : memref<9x56x288xf32, #tpu.memory_space<vmem>>, vector<1x56x288xf32>
    %22 = vector.shape_cast %21 : vector<1x56x288xf32> to vector<56x288xf32>
    %cst_23 = arith.constant dense<0.000000e+00> : vector<56x8xf32>
    %23 = tpu.matmul %22, %7, %cst_23 {dimension_numbers = #tpu.dot_dimension_numbers<[1], [0], [0], [1], [0, 0, 1, 1], [], []>} : vector<56x288xf32>, vector<288x8xf32>, vector<56x8xf32> -> vector<56x8xf32>
    %c2_24 = arith.constant 2 : index
    %c0_25 = arith.constant 0 : index
    %c0_26 = arith.constant 0 : index
    %24 = vector.load %arg4[%c2_24, %c0_25, %c0_26] : memref<9x8x16xf32, #tpu.memory_space<vmem>>, vector<1x8x16xf32>
    %25 = vector.shape_cast %24 : vector<1x8x16xf32> to vector<8x16xf32>
    %cst_27 = arith.constant dense<0.000000e+00> : vector<56x16xf32>
    %26 = tpu.matmul %23, %25, %cst_27 {dimension_numbers = #tpu.dot_dimension_numbers<[1], [0], [0], [1], [0, 0, 1, 1], [], []>} : vector<56x8xf32>, vector<8x16xf32>, vector<56x16xf32> -> vector<56x16xf32>
    %27 = arith.addf %20, %26 : vector<56x16xf32>
    %c3 = arith.constant 3 : index
    %c0_28 = arith.constant 0 : index
    %c0_29 = arith.constant 0 : index
    %28 = vector.load %arg3[%c3, %c0_28, %c0_29] : memref<9x56x288xf32, #tpu.memory_space<vmem>>, vector<1x56x288xf32>
    %29 = vector.shape_cast %28 : vector<1x56x288xf32> to vector<56x288xf32>
    %cst_30 = arith.constant dense<0.000000e+00> : vector<56x8xf32>
    %30 = tpu.matmul %29, %7, %cst_30 {dimension_numbers = #tpu.dot_dimension_numbers<[1], [0], [0], [1], [0, 0, 1, 1], [], []>} : vector<56x288xf32>, vector<288x8xf32>, vector<56x8xf32> -> vector<56x8xf32>
    %c3_31 = arith.constant 3 : index
    %c0_32 = arith.constant 0 : index
    %c0_33 = arith.constant 0 : index
    %31 = vector.load %arg4[%c3_31, %c0_32, %c0_33] : memref<9x8x16xf32, #tpu.memory_space<vmem>>, vector<1x8x16xf32>
    %32 = vector.shape_cast %31 : vector<1x8x16xf32> to vector<8x16xf32>
    %cst_34 = arith.constant dense<0.000000e+00> : vector<56x16xf32>
    %33 = tpu.matmul %30, %32, %cst_34 {dimension_numbers = #tpu.dot_dimension_numbers<[1], [0], [0], [1], [0, 0, 1, 1], [], []>} : vector<56x8xf32>, vector<8x16xf32>, vector<56x16xf32> -> vector<56x16xf32>
    %34 = arith.addf %27, %33 : vector<56x16xf32>
    %c4 = arith.constant 4 : index
    %c0_35 = arith.constant 0 : index
    %c0_36 = arith.constant 0 : index
    %35 = vector.load %arg3[%c4, %c0_35, %c0_36] : memref<9x56x288xf32, #tpu.memory_space<vmem>>, vector<1x56x288xf32>
    %36 = vector.shape_cast %35 : vector<1x56x288xf32> to vector<56x288xf32>
    %cst_37 = arith.constant dense<0.000000e+00> : vector<56x8xf32>
    %37 = tpu.matmul %36, %7, %cst_37 {dimension_numbers = #tpu.dot_dimension_numbers<[1], [0], [0], [1], [0, 0, 1, 1], [], []>} : vector<56x288xf32>, vector<288x8xf32>, vector<56x8xf32> -> vector<56x8xf32>
    %c4_38 = arith.constant 4 : index
    %c0_39 = arith.constant 0 : index
    %c0_40 = arith.constant 0 : index
    %38 = vector.load %arg4[%c4_38, %c0_39, %c0_40] : memref<9x8x16xf32, #tpu.memory_space<vmem>>, vector<1x8x16xf32>
    %39 = vector.shape_cast %38 : vector<1x8x16xf32> to vector<8x16xf32>
    %cst_41 = arith.constant dense<0.000000e+00> : vector<56x16xf32>
    %40 = tpu.matmul %37, %39, %cst_41 {dimension_numbers = #tpu.dot_dimension_numbers<[1], [0], [0], [1], [0, 0, 1, 1], [], []>} : vector<56x8xf32>, vector<8x16xf32>, vector<56x16xf32> -> vector<56x16xf32>
    %41 = arith.addf %34, %40 : vector<56x16xf32>
    %c5 = arith.constant 5 : index
    %c0_42 = arith.constant 0 : index
    %c0_43 = arith.constant 0 : index
    %42 = vector.load %arg3[%c5, %c0_42, %c0_43] : memref<9x56x288xf32, #tpu.memory_space<vmem>>, vector<1x56x288xf32>
    %43 = vector.shape_cast %42 : vector<1x56x288xf32> to vector<56x288xf32>
    %cst_44 = arith.constant dense<0.000000e+00> : vector<56x8xf32>
    %44 = tpu.matmul %43, %7, %cst_44 {dimension_numbers = #tpu.dot_dimension_numbers<[1], [0], [0], [1], [0, 0, 1, 1], [], []>} : vector<56x288xf32>, vector<288x8xf32>, vector<56x8xf32> -> vector<56x8xf32>
    %c5_45 = arith.constant 5 : index
    %c0_46 = arith.constant 0 : index
    %c0_47 = arith.constant 0 : index
    %45 = vector.load %arg4[%c5_45, %c0_46, %c0_47] : memref<9x8x16xf32, #tpu.memory_space<vmem>>, vector<1x8x16xf32>
    %46 = vector.shape_cast %45 : vector<1x8x16xf32> to vector<8x16xf32>
    %cst_48 = arith.constant dense<0.000000e+00> : vector<56x16xf32>
    %47 = tpu.matmul %44, %46, %cst_48 {dimension_numbers = #tpu.dot_dimension_numbers<[1], [0], [0], [1], [0, 0, 1, 1], [], []>} : vector<56x8xf32>, vector<8x16xf32>, vector<56x16xf32> -> vector<56x16xf32>
    %48 = arith.addf %41, %47 : vector<56x16xf32>
    %c6 = arith.constant 6 : index
    %c0_49 = arith.constant 0 : index
    %c0_50 = arith.constant 0 : index
    %49 = vector.load %arg3[%c6, %c0_49, %c0_50] : memref<9x56x288xf32, #tpu.memory_space<vmem>>, vector<1x56x288xf32>
    %50 = vector.shape_cast %49 : vector<1x56x288xf32> to vector<56x288xf32>
    %cst_51 = arith.constant dense<0.000000e+00> : vector<56x8xf32>
    %51 = tpu.matmul %50, %7, %cst_51 {dimension_numbers = #tpu.dot_dimension_numbers<[1], [0], [0], [1], [0, 0, 1, 1], [], []>} : vector<56x288xf32>, vector<288x8xf32>, vector<56x8xf32> -> vector<56x8xf32>
    %c6_52 = arith.constant 6 : index
    %c0_53 = arith.constant 0 : index
    %c0_54 = arith.constant 0 : index
    %52 = vector.load %arg4[%c6_52, %c0_53, %c0_54] : memref<9x8x16xf32, #tpu.memory_space<vmem>>, vector<1x8x16xf32>
    %53 = vector.shape_cast %52 : vector<1x8x16xf32> to vector<8x16xf32>
    %cst_55 = arith.constant dense<0.000000e+00> : vector<56x16xf32>
    %54 = tpu.matmul %51, %53, %cst_55 {dimension_numbers = #tpu.dot_dimension_numbers<[1], [0], [0], [1], [0, 0, 1, 1], [], []>} : vector<56x8xf32>, vector<8x16xf32>, vector<56x16xf32> -> vector<56x16xf32>
    %55 = arith.addf %48, %54 : vector<56x16xf32>
    %c7 = arith.constant 7 : index
    %c0_56 = arith.constant 0 : index
    %c0_57 = arith.constant 0 : index
    %56 = vector.load %arg3[%c7, %c0_56, %c0_57] : memref<9x56x288xf32, #tpu.memory_space<vmem>>, vector<1x56x288xf32>
    %57 = vector.shape_cast %56 : vector<1x56x288xf32> to vector<56x288xf32>
    %cst_58 = arith.constant dense<0.000000e+00> : vector<56x8xf32>
    %58 = tpu.matmul %57, %7, %cst_58 {dimension_numbers = #tpu.dot_dimension_numbers<[1], [0], [0], [1], [0, 0, 1, 1], [], []>} : vector<56x288xf32>, vector<288x8xf32>, vector<56x8xf32> -> vector<56x8xf32>
    %c7_59 = arith.constant 7 : index
    %c0_60 = arith.constant 0 : index
    %c0_61 = arith.constant 0 : index
    %59 = vector.load %arg4[%c7_59, %c0_60, %c0_61] : memref<9x8x16xf32, #tpu.memory_space<vmem>>, vector<1x8x16xf32>
    %60 = vector.shape_cast %59 : vector<1x8x16xf32> to vector<8x16xf32>
    %cst_62 = arith.constant dense<0.000000e+00> : vector<56x16xf32>
    %61 = tpu.matmul %58, %60, %cst_62 {dimension_numbers = #tpu.dot_dimension_numbers<[1], [0], [0], [1], [0, 0, 1, 1], [], []>} : vector<56x8xf32>, vector<8x16xf32>, vector<56x16xf32> -> vector<56x16xf32>
    %62 = arith.addf %55, %61 : vector<56x16xf32>
    %c8 = arith.constant 8 : index
    %c0_63 = arith.constant 0 : index
    %c0_64 = arith.constant 0 : index
    %63 = vector.load %arg3[%c8, %c0_63, %c0_64] : memref<9x56x288xf32, #tpu.memory_space<vmem>>, vector<1x56x288xf32>
    %64 = vector.shape_cast %63 : vector<1x56x288xf32> to vector<56x288xf32>
    %cst_65 = arith.constant dense<0.000000e+00> : vector<56x8xf32>
    %65 = tpu.matmul %64, %7, %cst_65 {dimension_numbers = #tpu.dot_dimension_numbers<[1], [0], [0], [1], [0, 0, 1, 1], [], []>} : vector<56x288xf32>, vector<288x8xf32>, vector<56x8xf32> -> vector<56x8xf32>
    %c8_66 = arith.constant 8 : index
    %c0_67 = arith.constant 0 : index
    %c0_68 = arith.constant 0 : index
    %66 = vector.load %arg4[%c8_66, %c0_67, %c0_68] : memref<9x8x16xf32, #tpu.memory_space<vmem>>, vector<1x8x16xf32>
    %67 = vector.shape_cast %66 : vector<1x8x16xf32> to vector<8x16xf32>
    %cst_69 = arith.constant dense<0.000000e+00> : vector<56x16xf32>
    %68 = tpu.matmul %65, %67, %cst_69 {dimension_numbers = #tpu.dot_dimension_numbers<[1], [0], [0], [1], [0, 0, 1, 1], [], []>} : vector<56x8xf32>, vector<8x16xf32>, vector<56x16xf32> -> vector<56x16xf32>
    %69 = arith.addf %62, %68 : vector<56x16xf32>
    %c0_70 = arith.constant 0 : index
    %c0_71 = arith.constant 0 : index
    %70 = vector.load %arg5[%c0_70, %c0_71] : memref<1x16xf32, #tpu.memory_space<vmem>>, vector<1x16xf32>
    %71 = vector.broadcast %70 : vector<1x16xf32> to vector<56x16xf32>
    %72 = arith.addf %69, %71 : vector<56x16xf32>
    %cst_72 = arith.constant 0.000000e+00 : f32
    %73 = vector.broadcast %cst_72 : f32 to vector<56x16xf32>
    %74 = arith.maximumf %72, %73 : vector<56x16xf32>
    %c0_73 = arith.constant 0 : index
    %c0_74 = arith.constant 0 : index
    %c0_75 = arith.constant 0 : index
    %75 = vector.load %arg6[%c0_73, %c0_74, %c0_75] : memref<9x8x56xf32, #tpu.memory_space<vmem>>, vector<1x8x56xf32>
    %76 = vector.shape_cast %75 : vector<1x8x56xf32> to vector<8x56xf32>
    %cst_76 = arith.constant dense<0.000000e+00> : vector<8x16xf32>
    %77 = tpu.matmul %76, %74, %cst_76 {dimension_numbers = #tpu.dot_dimension_numbers<[1], [0], [0], [1], [0, 0, 1, 1], [], []>} : vector<8x56xf32>, vector<56x16xf32>, vector<8x16xf32> -> vector<8x16xf32>
    %c0_77 = arith.constant 0 : index
    %c0_78 = arith.constant 0 : index
    %c0_79 = arith.constant 0 : index
    %78 = vector.load %arg7[%c0_77, %c0_78, %c0_79] : memref<9x16x16xf32, #tpu.memory_space<vmem>>, vector<1x16x16xf32>
    %79 = vector.shape_cast %78 : vector<1x16x16xf32> to vector<16x16xf32>
    %cst_80 = arith.constant dense<0.000000e+00> : vector<8x16xf32>
    %80 = tpu.matmul %77, %79, %cst_80 {dimension_numbers = #tpu.dot_dimension_numbers<[1], [0], [0], [1], [0, 0, 1, 1], [], []>} : vector<8x16xf32>, vector<16x16xf32>, vector<8x16xf32> -> vector<8x16xf32>
    %c1_81 = arith.constant 1 : index
    %c0_82 = arith.constant 0 : index
    %c0_83 = arith.constant 0 : index
    %81 = vector.load %arg6[%c1_81, %c0_82, %c0_83] : memref<9x8x56xf32, #tpu.memory_space<vmem>>, vector<1x8x56xf32>
    %82 = vector.shape_cast %81 : vector<1x8x56xf32> to vector<8x56xf32>
    %cst_84 = arith.constant dense<0.000000e+00> : vector<8x16xf32>
    %83 = tpu.matmul %82, %74, %cst_84 {dimension_numbers = #tpu.dot_dimension_numbers<[1], [0], [0], [1], [0, 0, 1, 1], [], []>} : vector<8x56xf32>, vector<56x16xf32>, vector<8x16xf32> -> vector<8x16xf32>
    %c1_85 = arith.constant 1 : index
    %c0_86 = arith.constant 0 : index
    %c0_87 = arith.constant 0 : index
    %84 = vector.load %arg7[%c1_85, %c0_86, %c0_87] : memref<9x16x16xf32, #tpu.memory_space<vmem>>, vector<1x16x16xf32>
    %85 = vector.shape_cast %84 : vector<1x16x16xf32> to vector<16x16xf32>
    %cst_88 = arith.constant dense<0.000000e+00> : vector<8x16xf32>
    %86 = tpu.matmul %83, %85, %cst_88 {dimension_numbers = #tpu.dot_dimension_numbers<[1], [0], [0], [1], [0, 0, 1, 1], [], []>} : vector<8x16xf32>, vector<16x16xf32>, vector<8x16xf32> -> vector<8x16xf32>
    %87 = arith.addf %80, %86 : vector<8x16xf32>
    %c2_89 = arith.constant 2 : index
    %c0_90 = arith.constant 0 : index
    %c0_91 = arith.constant 0 : index
    %88 = vector.load %arg6[%c2_89, %c0_90, %c0_91] : memref<9x8x56xf32, #tpu.memory_space<vmem>>, vector<1x8x56xf32>
    %89 = vector.shape_cast %88 : vector<1x8x56xf32> to vector<8x56xf32>
    %cst_92 = arith.constant dense<0.000000e+00> : vector<8x16xf32>
    %90 = tpu.matmul %89, %74, %cst_92 {dimension_numbers = #tpu.dot_dimension_numbers<[1], [0], [0], [1], [0, 0, 1, 1], [], []>} : vector<8x56xf32>, vector<56x16xf32>, vector<8x16xf32> -> vector<8x16xf32>
    %c2_93 = arith.constant 2 : index
    %c0_94 = arith.constant 0 : index
    %c0_95 = arith.constant 0 : index
    %91 = vector.load %arg7[%c2_93, %c0_94, %c0_95] : memref<9x16x16xf32, #tpu.memory_space<vmem>>, vector<1x16x16xf32>
    %92 = vector.shape_cast %91 : vector<1x16x16xf32> to vector<16x16xf32>
    %cst_96 = arith.constant dense<0.000000e+00> : vector<8x16xf32>
    %93 = tpu.matmul %90, %92, %cst_96 {dimension_numbers = #tpu.dot_dimension_numbers<[1], [0], [0], [1], [0, 0, 1, 1], [], []>} : vector<8x16xf32>, vector<16x16xf32>, vector<8x16xf32> -> vector<8x16xf32>
    %94 = arith.addf %87, %93 : vector<8x16xf32>
    %c3_97 = arith.constant 3 : index
    %c0_98 = arith.constant 0 : index
    %c0_99 = arith.constant 0 : index
    %95 = vector.load %arg6[%c3_97, %c0_98, %c0_99] : memref<9x8x56xf32, #tpu.memory_space<vmem>>, vector<1x8x56xf32>
    %96 = vector.shape_cast %95 : vector<1x8x56xf32> to vector<8x56xf32>
    %cst_100 = arith.constant dense<0.000000e+00> : vector<8x16xf32>
    %97 = tpu.matmul %96, %74, %cst_100 {dimension_numbers = #tpu.dot_dimension_numbers<[1], [0], [0], [1], [0, 0, 1, 1], [], []>} : vector<8x56xf32>, vector<56x16xf32>, vector<8x16xf32> -> vector<8x16xf32>
    %c3_101 = arith.constant 3 : index
    %c0_102 = arith.constant 0 : index
    %c0_103 = arith.constant 0 : index
    %98 = vector.load %arg7[%c3_101, %c0_102, %c0_103] : memref<9x16x16xf32, #tpu.memory_space<vmem>>, vector<1x16x16xf32>
    %99 = vector.shape_cast %98 : vector<1x16x16xf32> to vector<16x16xf32>
    %cst_104 = arith.constant dense<0.000000e+00> : vector<8x16xf32>
    %100 = tpu.matmul %97, %99, %cst_104 {dimension_numbers = #tpu.dot_dimension_numbers<[1], [0], [0], [1], [0, 0, 1, 1], [], []>} : vector<8x16xf32>, vector<16x16xf32>, vector<8x16xf32> -> vector<8x16xf32>
    %101 = arith.addf %94, %100 : vector<8x16xf32>
    %c4_105 = arith.constant 4 : index
    %c0_106 = arith.constant 0 : index
    %c0_107 = arith.constant 0 : index
    %102 = vector.load %arg6[%c4_105, %c0_106, %c0_107] : memref<9x8x56xf32, #tpu.memory_space<vmem>>, vector<1x8x56xf32>
    %103 = vector.shape_cast %102 : vector<1x8x56xf32> to vector<8x56xf32>
    %cst_108 = arith.constant dense<0.000000e+00> : vector<8x16xf32>
    %104 = tpu.matmul %103, %74, %cst_108 {dimension_numbers = #tpu.dot_dimension_numbers<[1], [0], [0], [1], [0, 0, 1, 1], [], []>} : vector<8x56xf32>, vector<56x16xf32>, vector<8x16xf32> -> vector<8x16xf32>
    %c4_109 = arith.constant 4 : index
    %c0_110 = arith.constant 0 : index
    %c0_111 = arith.constant 0 : index
    %105 = vector.load %arg7[%c4_109, %c0_110, %c0_111] : memref<9x16x16xf32, #tpu.memory_space<vmem>>, vector<1x16x16xf32>
    %106 = vector.shape_cast %105 : vector<1x16x16xf32> to vector<16x16xf32>
    %cst_112 = arith.constant dense<0.000000e+00> : vector<8x16xf32>
    %107 = tpu.matmul %104, %106, %cst_112 {dimension_numbers = #tpu.dot_dimension_numbers<[1], [0], [0], [1], [0, 0, 1, 1], [], []>} : vector<8x16xf32>, vector<16x16xf32>, vector<8x16xf32> -> vector<8x16xf32>
    %108 = arith.addf %101, %107 : vector<8x16xf32>
    %c5_113 = arith.constant 5 : index
    %c0_114 = arith.constant 0 : index
    %c0_115 = arith.constant 0 : index
    %109 = vector.load %arg6[%c5_113, %c0_114, %c0_115] : memref<9x8x56xf32, #tpu.memory_space<vmem>>, vector<1x8x56xf32>
    %110 = vector.shape_cast %109 : vector<1x8x56xf32> to vector<8x56xf32>
    %cst_116 = arith.constant dense<0.000000e+00> : vector<8x16xf32>
    %111 = tpu.matmul %110, %74, %cst_116 {dimension_numbers = #tpu.dot_dimension_numbers<[1], [0], [0], [1], [0, 0, 1, 1], [], []>} : vector<8x56xf32>, vector<56x16xf32>, vector<8x16xf32> -> vector<8x16xf32>
    %c5_117 = arith.constant 5 : index
    %c0_118 = arith.constant 0 : index
    %c0_119 = arith.constant 0 : index
    %112 = vector.load %arg7[%c5_117, %c0_118, %c0_119] : memref<9x16x16xf32, #tpu.memory_space<vmem>>, vector<1x16x16xf32>
    %113 = vector.shape_cast %112 : vector<1x16x16xf32> to vector<16x16xf32>
    %cst_120 = arith.constant dense<0.000000e+00> : vector<8x16xf32>
    %114 = tpu.matmul %111, %113, %cst_120 {dimension_numbers = #tpu.dot_dimension_numbers<[1], [0], [0], [1], [0, 0, 1, 1], [], []>} : vector<8x16xf32>, vector<16x16xf32>, vector<8x16xf32> -> vector<8x16xf32>
    %115 = arith.addf %108, %114 : vector<8x16xf32>
    %c6_121 = arith.constant 6 : index
    %c0_122 = arith.constant 0 : index
    %c0_123 = arith.constant 0 : index
    %116 = vector.load %arg6[%c6_121, %c0_122, %c0_123] : memref<9x8x56xf32, #tpu.memory_space<vmem>>, vector<1x8x56xf32>
    %117 = vector.shape_cast %116 : vector<1x8x56xf32> to vector<8x56xf32>
    %cst_124 = arith.constant dense<0.000000e+00> : vector<8x16xf32>
    %118 = tpu.matmul %117, %74, %cst_124 {dimension_numbers = #tpu.dot_dimension_numbers<[1], [0], [0], [1], [0, 0, 1, 1], [], []>} : vector<8x56xf32>, vector<56x16xf32>, vector<8x16xf32> -> vector<8x16xf32>
    %c6_125 = arith.constant 6 : index
    %c0_126 = arith.constant 0 : index
    %c0_127 = arith.constant 0 : index
    %119 = vector.load %arg7[%c6_125, %c0_126, %c0_127] : memref<9x16x16xf32, #tpu.memory_space<vmem>>, vector<1x16x16xf32>
    %120 = vector.shape_cast %119 : vector<1x16x16xf32> to vector<16x16xf32>
    %cst_128 = arith.constant dense<0.000000e+00> : vector<8x16xf32>
    %121 = tpu.matmul %118, %120, %cst_128 {dimension_numbers = #tpu.dot_dimension_numbers<[1], [0], [0], [1], [0, 0, 1, 1], [], []>} : vector<8x16xf32>, vector<16x16xf32>, vector<8x16xf32> -> vector<8x16xf32>
    %122 = arith.addf %115, %121 : vector<8x16xf32>
    %c7_129 = arith.constant 7 : index
    %c0_130 = arith.constant 0 : index
    %c0_131 = arith.constant 0 : index
    %123 = vector.load %arg6[%c7_129, %c0_130, %c0_131] : memref<9x8x56xf32, #tpu.memory_space<vmem>>, vector<1x8x56xf32>
    %124 = vector.shape_cast %123 : vector<1x8x56xf32> to vector<8x56xf32>
    %cst_132 = arith.constant dense<0.000000e+00> : vector<8x16xf32>
    %125 = tpu.matmul %124, %74, %cst_132 {dimension_numbers = #tpu.dot_dimension_numbers<[1], [0], [0], [1], [0, 0, 1, 1], [], []>} : vector<8x56xf32>, vector<56x16xf32>, vector<8x16xf32> -> vector<8x16xf32>
    %c7_133 = arith.constant 7 : index
    %c0_134 = arith.constant 0 : index
    %c0_135 = arith.constant 0 : index
    %126 = vector.load %arg7[%c7_133, %c0_134, %c0_135] : memref<9x16x16xf32, #tpu.memory_space<vmem>>, vector<1x16x16xf32>
    %127 = vector.shape_cast %126 : vector<1x16x16xf32> to vector<16x16xf32>
    %cst_136 = arith.constant dense<0.000000e+00> : vector<8x16xf32>
    %128 = tpu.matmul %125, %127, %cst_136 {dimension_numbers = #tpu.dot_dimension_numbers<[1], [0], [0], [1], [0, 0, 1, 1], [], []>} : vector<8x16xf32>, vector<16x16xf32>, vector<8x16xf32> -> vector<8x16xf32>
    %129 = arith.addf %122, %128 : vector<8x16xf32>
    %c8_137 = arith.constant 8 : index
    %c0_138 = arith.constant 0 : index
    %c0_139 = arith.constant 0 : index
    %130 = vector.load %arg6[%c8_137, %c0_138, %c0_139] : memref<9x8x56xf32, #tpu.memory_space<vmem>>, vector<1x8x56xf32>
    %131 = vector.shape_cast %130 : vector<1x8x56xf32> to vector<8x56xf32>
    %cst_140 = arith.constant dense<0.000000e+00> : vector<8x16xf32>
    %132 = tpu.matmul %131, %74, %cst_140 {dimension_numbers = #tpu.dot_dimension_numbers<[1], [0], [0], [1], [0, 0, 1, 1], [], []>} : vector<8x56xf32>, vector<56x16xf32>, vector<8x16xf32> -> vector<8x16xf32>
    %c8_141 = arith.constant 8 : index
    %c0_142 = arith.constant 0 : index
    %c0_143 = arith.constant 0 : index
    %133 = vector.load %arg7[%c8_141, %c0_142, %c0_143] : memref<9x16x16xf32, #tpu.memory_space<vmem>>, vector<1x16x16xf32>
    %134 = vector.shape_cast %133 : vector<1x16x16xf32> to vector<16x16xf32>
    %cst_144 = arith.constant dense<0.000000e+00> : vector<8x16xf32>
    %135 = tpu.matmul %132, %134, %cst_144 {dimension_numbers = #tpu.dot_dimension_numbers<[1], [0], [0], [1], [0, 0, 1, 1], [], []>} : vector<8x16xf32>, vector<16x16xf32>, vector<8x16xf32> -> vector<8x16xf32>
    %136 = arith.addf %129, %135 : vector<8x16xf32>
    %c0_145 = arith.constant 0 : index
    %c0_146 = arith.constant 0 : index
    %137 = vector.load %arg8[%c0_145, %c0_146] : memref<1x16xf32, #tpu.memory_space<vmem>>, vector<1x16xf32>
    %138 = vector.broadcast %137 : vector<1x16xf32> to vector<8x16xf32>
    %139 = arith.addf %136, %138 : vector<8x16xf32>
    %cst_147 = arith.constant 0.000000e+00 : f32
    %140 = vector.broadcast %cst_147 : f32 to vector<8x16xf32>
    %141 = arith.maximumf %139, %140 : vector<8x16xf32>
    %c0_148 = arith.constant 0 : index
    %c0_149 = arith.constant 0 : index
    %c0_150 = arith.constant 0 : index
    %142 = vector.load %arg9[%c0_148, %c0_149, %c0_150] : memref<4x8x8xf32, #tpu.memory_space<vmem>>, vector<1x8x8xf32>
    %143 = vector.shape_cast %142 : vector<1x8x8xf32> to vector<8x8xf32>
    %cst_151 = arith.constant dense<0.000000e+00> : vector<8x16xf32>
    %144 = tpu.matmul %143, %141, %cst_151 {dimension_numbers = #tpu.dot_dimension_numbers<[1], [0], [0], [1], [0, 0, 1, 1], [], []>} : vector<8x8xf32>, vector<8x16xf32>, vector<8x16xf32> -> vector<8x16xf32>
    %c0_152 = arith.constant 0 : index
    %c0_153 = arith.constant 0 : index
    %c0_154 = arith.constant 0 : index
    %145 = vector.load %arg10[%c0_152, %c0_153, %c0_154] : memref<4x16x16xf32, #tpu.memory_space<vmem>>, vector<1x16x16xf32>
    %146 = vector.shape_cast %145 : vector<1x16x16xf32> to vector<16x16xf32>
    %cst_155 = arith.constant dense<0.000000e+00> : vector<8x16xf32>
    %147 = tpu.matmul %144, %146, %cst_155 {dimension_numbers = #tpu.dot_dimension_numbers<[1], [0], [0], [1], [0, 0, 1, 1], [], []>} : vector<8x16xf32>, vector<16x16xf32>, vector<8x16xf32> -> vector<8x16xf32>
    %c1_156 = arith.constant 1 : index
    %c0_157 = arith.constant 0 : index
    %c0_158 = arith.constant 0 : index
    %148 = vector.load %arg9[%c1_156, %c0_157, %c0_158] : memref<4x8x8xf32, #tpu.memory_space<vmem>>, vector<1x8x8xf32>
    %149 = vector.shape_cast %148 : vector<1x8x8xf32> to vector<8x8xf32>
    %cst_159 = arith.constant dense<0.000000e+00> : vector<8x16xf32>
    %150 = tpu.matmul %149, %141, %cst_159 {dimension_numbers = #tpu.dot_dimension_numbers<[1], [0], [0], [1], [0, 0, 1, 1], [], []>} : vector<8x8xf32>, vector<8x16xf32>, vector<8x16xf32> -> vector<8x16xf32>
    %c1_160 = arith.constant 1 : index
    %c0_161 = arith.constant 0 : index
    %c0_162 = arith.constant 0 : index
    %151 = vector.load %arg10[%c1_160, %c0_161, %c0_162] : memref<4x16x16xf32, #tpu.memory_space<vmem>>, vector<1x16x16xf32>
    %152 = vector.shape_cast %151 : vector<1x16x16xf32> to vector<16x16xf32>
    %cst_163 = arith.constant dense<0.000000e+00> : vector<8x16xf32>
    %153 = tpu.matmul %150, %152, %cst_163 {dimension_numbers = #tpu.dot_dimension_numbers<[1], [0], [0], [1], [0, 0, 1, 1], [], []>} : vector<8x16xf32>, vector<16x16xf32>, vector<8x16xf32> -> vector<8x16xf32>
    %154 = arith.addf %147, %153 : vector<8x16xf32>
    %c2_164 = arith.constant 2 : index
    %c0_165 = arith.constant 0 : index
    %c0_166 = arith.constant 0 : index
    %155 = vector.load %arg9[%c2_164, %c0_165, %c0_166] : memref<4x8x8xf32, #tpu.memory_space<vmem>>, vector<1x8x8xf32>
    %156 = vector.shape_cast %155 : vector<1x8x8xf32> to vector<8x8xf32>
    %cst_167 = arith.constant dense<0.000000e+00> : vector<8x16xf32>
    %157 = tpu.matmul %156, %141, %cst_167 {dimension_numbers = #tpu.dot_dimension_numbers<[1], [0], [0], [1], [0, 0, 1, 1], [], []>} : vector<8x8xf32>, vector<8x16xf32>, vector<8x16xf32> -> vector<8x16xf32>
    %c2_168 = arith.constant 2 : index
    %c0_169 = arith.constant 0 : index
    %c0_170 = arith.constant 0 : index
    %158 = vector.load %arg10[%c2_168, %c0_169, %c0_170] : memref<4x16x16xf32, #tpu.memory_space<vmem>>, vector<1x16x16xf32>
    %159 = vector.shape_cast %158 : vector<1x16x16xf32> to vector<16x16xf32>
    %cst_171 = arith.constant dense<0.000000e+00> : vector<8x16xf32>
    %160 = tpu.matmul %157, %159, %cst_171 {dimension_numbers = #tpu.dot_dimension_numbers<[1], [0], [0], [1], [0, 0, 1, 1], [], []>} : vector<8x16xf32>, vector<16x16xf32>, vector<8x16xf32> -> vector<8x16xf32>
    %161 = arith.addf %154, %160 : vector<8x16xf32>
    %c3_172 = arith.constant 3 : index
    %c0_173 = arith.constant 0 : index
    %c0_174 = arith.constant 0 : index
    %162 = vector.load %arg9[%c3_172, %c0_173, %c0_174] : memref<4x8x8xf32, #tpu.memory_space<vmem>>, vector<1x8x8xf32>
    %163 = vector.shape_cast %162 : vector<1x8x8xf32> to vector<8x8xf32>
    %cst_175 = arith.constant dense<0.000000e+00> : vector<8x16xf32>
    %164 = tpu.matmul %163, %141, %cst_175 {dimension_numbers = #tpu.dot_dimension_numbers<[1], [0], [0], [1], [0, 0, 1, 1], [], []>} : vector<8x8xf32>, vector<8x16xf32>, vector<8x16xf32> -> vector<8x16xf32>
    %c3_176 = arith.constant 3 : index
    %c0_177 = arith.constant 0 : index
    %c0_178 = arith.constant 0 : index
    %165 = vector.load %arg10[%c3_176, %c0_177, %c0_178] : memref<4x16x16xf32, #tpu.memory_space<vmem>>, vector<1x16x16xf32>
    %166 = vector.shape_cast %165 : vector<1x16x16xf32> to vector<16x16xf32>
    %cst_179 = arith.constant dense<0.000000e+00> : vector<8x16xf32>
    %167 = tpu.matmul %164, %166, %cst_179 {dimension_numbers = #tpu.dot_dimension_numbers<[1], [0], [0], [1], [0, 0, 1, 1], [], []>} : vector<8x16xf32>, vector<16x16xf32>, vector<8x16xf32> -> vector<8x16xf32>
    %168 = arith.addf %161, %167 : vector<8x16xf32>
    %c0_180 = arith.constant 0 : index
    %c0_181 = arith.constant 0 : index
    %169 = vector.load %arg11[%c0_180, %c0_181] : memref<1x16xf32, #tpu.memory_space<vmem>>, vector<1x16xf32>
    %170 = vector.broadcast %169 : vector<1x16xf32> to vector<8x16xf32>
    %171 = arith.addf %168, %170 : vector<8x16xf32>
    %c0_182 = arith.constant 0 : index
    %c0_183 = arith.constant 0 : index
    %172 = vector.load %arg12[%c0_182, %c0_183] : memref<8x16xf32, #tpu.memory_space<vmem>>, vector<8x16xf32>
    tpu.vector_store %arg12[%c0_182, %c0_183], %171 {strides = array<i32>} : memref<8x16xf32, #tpu.memory_space<vmem>>, vector<8x16xf32>,
    return
  }
}

</mosaic_0001>

<llo_original>
// kernel: encoder_forward.1
$region0: #{encoder_forward.1}
  #allocation0 [shape = 'u32[]', space=smem, size = 0x4, offset = 0x4, fixed_abs, tag = 'smem constant byte address 0x4 - core index']
  #allocation1 [shape = 'u32[144,128]{1,0:T(1,128)}', space=vmem, size = 0x12000, scoped, tag = 'internal scratch']
  %s0 = inlined_call_operand.vmem [shape: f32[288,32], index: 0, kind: input, shape index: {}]
  %s1 = inlined_call_operand.vmem [shape: f32[32,8], index: 1, kind: input, shape index: {}]
  %s2 = inlined_call_operand.vmem [shape: f32[1,8], index: 2, kind: input, shape index: {}]
  %s3 = inlined_call_operand.vmem [shape: f32[9,56,288], index: 3, kind: input, shape index: {}]
  %s4 = inlined_call_operand.vmem [shape: f32[9,8,16], index: 4, kind: input, shape index: {}]
  %s5 = inlined_call_operand.vmem [shape: f32[1,16], index: 5, kind: input, shape index: {}]
  %s6 = inlined_call_operand.vmem [shape: f32[9,8,56], index: 6, kind: input, shape index: {}]
  %s7 = inlined_call_operand.vmem [shape: f32[9,16,16], index: 7, kind: input, shape index: {}]
  %s8 = inlined_call_operand.vmem [shape: f32[1,16], index: 8, kind: input, shape index: {}]
  %s9 = inlined_call_operand.vmem [shape: f32[4,8,8], index: 9, kind: input, shape index: {}]
  %s10 = inlined_call_operand.vmem [shape: f32[4,16,16], index: 10, kind: input, shape index: {}]
  %s11 = inlined_call_operand.vmem [shape: f32[1,16], index: 11, kind: input, shape index: {}]
  %s12 = inlined_call_operand.vmem [shape: f32[8,16], index: 12, kind: output, shape index: {}]
  %s13 = sld [smem:[#allocation0]]
  $region58: #{encoder_forward.1} parent=0
    _
  %s15 = ssub.s32 1, %s13
  %s16 = scalar_select 0, %s15, %s13
  // Predicated region
  $region2: #{encoder_forward.1} parent=0 // pred_check
    _
  $region3: #{encoder_forward.1} parent=0 // pred_check_branch
    %18 = sbr.rel (0) target = $region5
  $region4: #{encoder_forward.1} parent=0 // pred_region
    _
  $region5: #{encoder_forward.1} parent=0 // pred_fallthru
    _
  // Predicated region
  $region6: #{encoder_forward.1} parent=0 // pred_check
    _
  $region7: #{encoder_forward.1} parent=0 // pred_check_branch
    %20 = sbr.rel (0) target = $region9
  $region8: #{encoder_forward.1} parent=0 // pred_region
    _
  $region9: #{encoder_forward.1} parent=0 // pred_fallthru
    _
  // Predicated region
  $region10: #{encoder_forward.1} parent=0 // pred_check
    _
  $region11: #{encoder_forward.1} parent=0 // pred_check_branch
    %22 = sbr.rel (0) target = $region13
  $region12: #{encoder_forward.1} parent=0 // pred_region
    _
  $region13: #{encoder_forward.1} parent=0 // pred_fallthru
    _
  // Predicated region
  $region14: #{encoder_forward.1} parent=0 // pred_check
    _
  $region15: #{encoder_forward.1} parent=0 // pred_check_branch
    %24 = sbr.rel (0) target = $region17
  $region16: #{encoder_forward.1} parent=0 // pred_region
    _
  $region17: #{encoder_forward.1} parent=0 // pred_fallthru
    _
  // Predicated region
  $region18: #{encoder_forward.1} parent=0 // pred_check
    _
  $region19: #{encoder_forward.1} parent=0 // pred_check_branch
    %26 = sbr.rel (0) target = $region21
  $region20: #{encoder_forward.1} parent=0 // pred_region
    _
  $region21: #{encoder_forward.1} parent=0 // pred_fallthru
    _
  // Predicated region
  $region22: #{encoder_forward.1} parent=0 // pred_check
    _
  $region23: #{encoder_forward.1} parent=0 // pred_check_branch
    %28 = sbr.rel (0) target = $region25
  $region24: #{encoder_forward.1} parent=0 // pred_region
    _
  $region25: #{encoder_forward.1} parent=0 // pred_fallthru
    _
  // Predicated region
  $region26: #{encoder_forward.1} parent=0 // pred_check
    _
  $region27: #{encoder_forward.1} parent=0 // pred_check_branch
    %30 = sbr.rel (0) target = $region29
  $region28: #{encoder_forward.1} parent=0 // pred_region
    _
  $region29: #{encoder_forward.1} parent=0 // pred_fallthru
    _
  // Predicated region
  $region30: #{encoder_forward.1} parent=0 // pred_check
    _
  $region31: #{encoder_forward.1} parent=0 // pred_check_branch
    %32 = sbr.rel (0) target = $region33
  $region32: #{encoder_forward.1} parent=0 // pred_region
    _
  $region33: #{encoder_forward.1} parent=0 // pred_fallthru
    _
  // Predicated region
  $region34: #{encoder_forward.1} parent=0 // pred_check
    _
  $region35: #{encoder_forward.1} parent=0 // pred_check_branch
    %34 = sbr.rel (0) target = $region37
  $region36: #{encoder_forward.1} parent=0 // pred_region
    _
  $region37: #{encoder_forward.1} parent=0 // pred_fallthru
    _
  // Predicated region
  $region38: #{encoder_forward.1} parent=0 // pred_check
    _
  $region39: #{encoder_forward.1} parent=0 // pred_check_branch
    %36 = sbr.rel (0) target = $region41
  $region40: #{encoder_forward.1} parent=0 // pred_region
    _
  $region41: #{encoder_forward.1} parent=0 // pred_fallthru
    _
  // Predicated region
  $region42: #{encoder_forward.1} parent=0 // pred_check
    _
  $region43: #{encoder_forward.1} parent=0 // pred_check_branch
    %38 = sbr.rel (0) target = $region45
  $region44: #{encoder_forward.1} parent=0 // pred_region
    _
  $region45: #{encoder_forward.1} parent=0 // pred_fallthru
    _
  // Predicated region
  $region46: #{encoder_forward.1} parent=0 // pred_check
    _
  $region47: #{encoder_forward.1} parent=0 // pred_check_branch
    %40 = sbr.rel (0) target = $region49
  $region48: #{encoder_forward.1} parent=0 // pred_region
    _
  $region49: #{encoder_forward.1} parent=0 // pred_fallthru
    _
  %v41 = vld [vmem:[%s0] sm:$0xff]
  %v42 = vld [vmem:[%s0 + $0x8] sm:$0xff]
  %v43 = vld [vmem:[%s0 + $0x10] sm:$0xff]
  %v44 = vld [vmem:[%s0 + $0x18] sm:$0xff]
  %v45 = vld [vmem:[%s0 + $0x20] sm:$0xff]
  %v46 = vld [vmem:[%s0 + $0x28] sm:$0xff]
  %v47 = vld [vmem:[%s0 + $0x30] sm:$0xff]
  %v48 = vld [vmem:[%s0 + $0x38] sm:$0xff]
  %v49 = vld [vmem:[%s0 + $0x40] sm:$0xff]
  %v50 = vld [vmem:[%s0 + $0x48] sm:$0xff]
  %v51 = vld [vmem:[%s0 + $0x50] sm:$0xff]
  %v52 = vld [vmem:[%s0 + $0x58] sm:$0xff]
  %v53 = vld [vmem:[%s0 + $0x60] sm:$0xff]
  %v54 = vld [vmem:[%s0 + $0x68] sm:$0xff]
  %v55 = vld [vmem:[%s0 + $0x70] sm:$0xff]
  %v56 = vld [vmem:[%s0 + $0x78] sm:$0xff]
  %v57 = vld [vmem:[%s0 + $0x80] sm:$0xff]
  %v58 = vld [vmem:[%s0 + $0x88] sm:$0xff]
  %v59 = vld [vmem:[%s0 + $0x90] sm:$0xff]
  %v60 = vld [vmem:[%s0 + $0x98] sm:$0xff]
  %v61 = vld [vmem:[%s0 + $0xa0] sm:$0xff]
  %v62 = vld [vmem:[%s0 + $0xa8] sm:$0xff]
  %v63 = vld [vmem:[%s0 + $0xb0] sm:$0xff]
  %v64 = vld [vmem:[%s0 + $0xb8] sm:$0xff]
  %v65 = vld [vmem:[%s0 + $0xc0] sm:$0xff]
  %v66 = vld [vmem:[%s0 + $0xc8] sm:$0xff]
  %v67 = vld [vmem:[%s0 + $0xd0] sm:$0xff]
  %v68 = vld [vmem:[%s0 + $0xd8] sm:$0xff]
  %v69 = vld [vmem:[%s0 + $0xe0] sm:$0xff]
  %v70 = vld [vmem:[%s0 + $0xe8] sm:$0xff]
  %v71 = vld [vmem:[%s0 + $0xf0] sm:$0xff]
  %v72 = vld [vmem:[%s0 + $0xf8] sm:$0xff]
  %v73 = vld [vmem:[%s0 + $0x100] sm:$0xff]
  %v74 = vld [vmem:[%s0 + $0x108] sm:$0xff]
  %v75 = vld [vmem:[%s0 + $0x110] sm:$0xff]
  %v76 = vld [vmem:[%s0 + $0x118] sm:$0xff]
  %v77 = vld [vmem:[%s1] sm:$0xff]
  %v78 = vld [vmem:[%s1 + $0x8] sm:$0xff]
  %v79 = vld [vmem:[%s1 + $0x10] sm:$0xff]
  %v80 = vld [vmem:[%s1 + $0x18] sm:$0xff]
  %v81 = vld [vmem:[%s2] sm:$0x1]
  %v83 = vlaneseq
  %v84 = vshrl.u32 %v83, 7
  %v85 = vsub.s32 0, %v84
  %v86 = vrot.slane %v81, %v85
  %vm88 = vcmask 261120
  %v90 = vsel %vm88, %v41, 0
  %v93 = vsel %vm88, %v42, 0
  %v96 = vsel %vm88, %v43, 0
  %v99 = vsel %vm88, %v44, 0
  %v102 = vsel %vm88, %v45, 0
  %v105 = vsel %vm88, %v46, 0
  %v108 = vsel %vm88, %v47, 0
  %v111 = vsel %vm88, %v48, 0
  %v114 = vsel %vm88, %v49, 0
  %v117 = vsel %vm88, %v50, 0
  %v120 = vsel %vm88, %v51, 0
  %v123 = vsel %vm88, %v52, 0
  %v126 = vsel %vm88, %v53, 0
  %v129 = vsel %vm88, %v54, 0
  %v132 = vsel %vm88, %v55, 0
  %v135 = vsel %vm88, %v56, 0
  %v138 = vsel %vm88, %v57, 0
  %v141 = vsel %vm88, %v58, 0
  %v144 = vsel %vm88, %v59, 0
  %v147 = vsel %vm88, %v60, 0
  %v150 = vsel %vm88, %v61, 0
  %v153 = vsel %vm88, %v62, 0
  %v156 = vsel %vm88, %v63, 0
  %v159 = vsel %vm88, %v64, 0
  %v162 = vsel %vm88, %v65, 0
  %v165 = vsel %vm88, %v66, 0
  %v168 = vsel %vm88, %v67, 0
  %v171 = vsel %vm88, %v68, 0
  %v174 = vsel %vm88, %v69, 0
  %v177 = vsel %vm88, %v70, 0
  %v180 = vsel %vm88, %v71, 0
  %v183 = vsel %vm88, %v72, 0
  %v186 = vsel %vm88, %v73, 0
  %v189 = vsel %vm88, %v74, 0
  %v192 = vsel %vm88, %v75, 0
  %v195 = vsel %vm88, %v76, 0
  %197 = vmatprep.subr.mxu0 0.0
  %198 = vmatpush1.msra.mxu0 %v77
  %199 = vmatprep.subr.mxu0 0.0
  %200 = vmatpush1.msra.mxu0 %v78
  %201 = vmatprep.subr.mxu0 0.0
  %202 = vmatpush1.msra.mxu0 %v79
  %203 = vmatprep.subr.mxu0 0.0
  %204 = vmatpush1.msra.mxu0 %v80
  %205 = vmatprep.subr.mxu0 0.0
  %206 = vmatpush1.msra.mxu0 0.0
  %207 = vmatprep.subr.mxu0 0.0
  %208 = vmatpush1.msra.mxu0 0.0
  %209 = vmatprep.subr.mxu0 0.0
  %210 = vmatpush1.msra.mxu0 0.0
  %211 = vmatprep.subr.mxu0 0.0
  %212 = vmatpush1.msra.mxu0 0.0
  %213 = vmatprep.subr.mxu0 0.0
  %214 = vmatpush1.msra.mxu0 0.0
  %215 = vmatprep.subr.mxu0 0.0
  %216 = vmatpush1.msra.mxu0 0.0
  %217 = vmatprep.subr.mxu0 0.0
  %218 = vmatpush1.msra.mxu0 0.0
  %219 = vmatprep.subr.mxu0 0.0
  %220 = vmatpush1.msra.mxu0 0.0
  %221 = vmatprep.subr.mxu0 0.0
  %222 = vmatpush1.msra.mxu0 0.0
  %223 = vmatprep.subr.mxu0 0.0
  %224 = vmatpush1.msra.mxu0 0.0
  %225 = vmatprep.subr.mxu0 0.0
  %226 = vmatpush1.msra.mxu0 0.0
  %227 = vmatprep.subr.mxu0 0.0
  %228 = vmatpush1.msra.mxu0 0.0
  %229 = vmatprep.subr.mxu0 0.0
  %230 = vmatpush1.msra.mxu0 0.0
  %231 = vmatprep.subr.mxu0 0.0
  %232 = vmatpush1.msra.mxu0 0.0
  %233 = vmatprep.subr.mxu0 0.0
  %234 = vmatpush1.msra.mxu0 0.0
  %235 = vmatprep.subr.mxu0 0.0
  %236 = vmatpush1.msra.mxu0 0.0
  %237 = vmatprep.subr.mxu0 0.0
  %238 = vmatpush1.msra.mxu0 0.0
  %239 = vmatprep.subr.mxu0 0.0
  %240 = vmatpush1.msra.mxu0 0.0
  %241 = vmatprep.subr.mxu0 0.0
  %242 = vmatpush1.msra.mxu0 0.0
  %243 = vmatprep.subr.mxu0 0.0
  %244 = vmatpush1.msra.mxu0 0.0
  %245 = vmatprep.subr.mxu0 0.0
  %246 = vmatpush1.msra.mxu0 0.0
  %247 = vmatprep.subr.mxu0 0.0
  %248 = vmatpush1.msra.mxu0 0.0
  %249 = vmatprep.subr.mxu0 0.0
  %250 = vmatpush1.msra.mxu0 0.0
  %251 = vmatprep.subr.mxu0 0.0
  %252 = vmatpush1.msra.mxu0 0.0
  %253 = vmatprep.subr.mxu0 0.0
  %254 = vmatpush1.msra.mxu0 0.0
  %255 = vmatprep.subr.mxu0 0.0
  %256 = vmatpush1.msra.mxu0 0.0
  %257 = vmatprep.subr.mxu0 0.0
  %258 = vmatpush1.msra.mxu0 0.0
  %259 = vmatprep.subr.mxu0 0.0
  %260 = vmatpush1.msra.mxu0 0.0
  %261 = vmatprep.mubr.f32.mxu0 0.0
  %262 = vmatmul.mubr.f32.gmra.mrb[0].mxu0 %v90
  %v263 = vpop.f32.mrb[0].mxu0
  %v264 = vadd.f32 %v86, %v263
  %v265 = vpop.f32.mrb[0].mxu0
  %266 = vmatprep.mubr.f32.mxu0 0.0
  %267 = vmatmul.mubr.f32.gmra.mrb[0].mxu0 %v93
  %v268 = vpop.f32.mrb[0].mxu0
  %v269 = vadd.f32 %v86, %v268
  %v270 = vpop.f32.mrb[0].mxu0
  %271 = vmatprep.mubr.f32.mxu0 0.0
  %272 = vmatmul.mubr.f32.gmra.mrb[0].mxu0 %v96
  %v273 = vpop.f32.mrb[0].mxu0
  %v274 = vadd.f32 %v86, %v273
  %v275 = vpop.f32.mrb[0].mxu0
  %276 = vmatprep.mubr.f32.mxu0 0.0
  %277 = vmatmul.mubr.f32.gmra.mrb[0].mxu0 %v99
  %v278 = vpop.f32.mrb[0].mxu0
  %v279 = vadd.f32 %v86, %v278
  %v280 = vpop.f32.mrb[0].mxu0
  %281 = vmatprep.mubr.f32.mxu0 0.0
  %282 = vmatmul.mubr.f32.gmra.mrb[0].mxu0 %v102
  %v283 = vpop.f32.mrb[0].mxu0
  %v284 = vadd.f32 %v86, %v283
  %v285 = vpop.f32.mrb[0].mxu0
  %286 = vmatprep.mubr.f32.mxu0 0.0
  %287 = vmatmul.mubr.f32.gmra.mrb[0].mxu0 %v105
  %v288 = vpop.f32.mrb[0].mxu0
  %v289 = vadd.f32 %v86, %v288
  %v290 = vpop.f32.mrb[0].mxu0
  %291 = vmatprep.mubr.f32.mxu0 0.0
  %292 = vmatmul.mubr.f32.gmra.mrb[0].mxu0 %v108
  %v293 = vpop.f32.mrb[0].mxu0
  %v294 = vadd.f32 %v86, %v293
  %v295 = vpop.f32.mrb[0].mxu0
  %296 = vmatprep.mubr.f32.mxu0 0.0
  %297 = vmatmul.mubr.f32.gmra.mrb[0].mxu0 %v111
  %v298 = vpop.f32.mrb[0].mxu0
  %v299 = vadd.f32 %v86, %v298
  %v300 = vpop.f32.mrb[0].mxu0
  %301 = vmatprep.mubr.f32.mxu0 0.0
  %302 = vmatmul.mubr.f32.gmra.mrb[0].mxu0 %v114
  %v303 = vpop.f32.mrb[0].mxu0
  %v304 = vadd.f32 %v86, %v303
  %v305 = vpop.f32.mrb[0].mxu0
  %306 = vmatprep.mubr.f32.mxu0 0.0
  %307 = vmatmul.mubr.f32.gmra.mrb[0].mxu0 %v117
  %v308 = vpop.f32.mrb[0].mxu0
  %v309 = vadd.f32 %v86, %v308
  %v310 = vpop.f32.mrb[0].mxu0
  %311 = vmatprep.mubr.f32.mxu0 0.0
  %312 = vmatmul.mubr.f32.gmra.mrb[0].mxu0 %v120
  %v313 = vpop.f32.mrb[0].mxu0
  %v314 = vadd.f32 %v86, %v313
  %v315 = vpop.f32.mrb[0].mxu0
  %316 = vmatprep.mubr.f32.mxu0 0.0
  %317 = vmatmul.mubr.f32.gmra.mrb[0].mxu0 %v123
  %v318 = vpop.f32.mrb[0].mxu0
  %v319 = vadd.f32 %v86, %v318
  %v320 = vpop.f32.mrb[0].mxu0
  %321 = vmatprep.mubr.f32.mxu0 0.0
  %322 = vmatmul.mubr.f32.gmra.mrb[0].mxu0 %v126
  %v323 = vpop.f32.mrb[0].mxu0
  %v324 = vadd.f32 %v86, %v323
  %v325 = vpop.f32.mrb[0].mxu0
  %326 = vmatprep.mubr.f32.mxu0 0.0
  %327 = vmatmul.mubr.f32.gmra.mrb[0].mxu0 %v129
  %v328 = vpop.f32.mrb[0].mxu0
  %v329 = vadd.f32 %v86, %v328
  %v330 = vpop.f32.mrb[0].mxu0
  %331 = vmatprep.mubr.f32.mxu0 0.0
  %332 = vmatmul.mubr.f32.gmra.mrb[0].mxu0 %v132
  %v333 = vpop.f32.mrb[0].mxu0
  %v334 = vadd.f32 %v86, %v333
  %v335 = vpop.f32.mrb[0].mxu0
  %336 = vmatprep.mubr.f32.mxu0 0.0
  %337 = vmatmul.mubr.f32.gmra.mrb[0].mxu0 %v135
  %v338 = vpop.f32.mrb[0].mxu0
  %v339 = vadd.f32 %v86, %v338
  %v340 = vpop.f32.mrb[0].mxu0
  %341 = vmatprep.mubr.f32.mxu0 0.0
  %342 = vmatmul.mubr.f32.gmra.mrb[0].mxu0 %v138
  %v343 = vpop.f32.mrb[0].mxu0
  %v344 = vadd.f32 %v86, %v343
  %v345 = vpop.f32.mrb[0].mxu0
  %346 = vmatprep.mubr.f32.mxu0 0.0
  %347 = vmatmul.mubr.f32.gmra.mrb[0].mxu0 %v141
  %v348 = vpop.f32.mrb[0].mxu0
  %v349 = vadd.f32 %v86, %v348
  %v350 = vpop.f32.mrb[0].mxu0
  %351 = vmatprep.mubr.f32.mxu0 0.0
  %352 = vmatmul.mubr.f32.gmra.mrb[0].mxu0 %v144
  %v353 = vpop.f32.mrb[0].mxu0
  %v354 = vadd.f32 %v86, %v353
  %v355 = vpop.f32.mrb[0].mxu0
  %356 = vmatprep.mubr.f32.mxu0 0.0
  %357 = vmatmul.mubr.f32.gmra.mrb[0].mxu0 %v147
  %v358 = vpop.f32.mrb[0].mxu0
  %v359 = vadd.f32 %v86, %v358
  %v360 = vpop.f32.mrb[0].mxu0
  %361 = vmatprep.mubr.f32.mxu0 0.0
  %362 = vmatmul.mubr.f32.gmra.mrb[0].mxu0 %v150
  %v363 = vpop.f32.mrb[0].mxu0
  %v364 = vadd.f32 %v86, %v363
  %v365 = vpop.f32.mrb[0].mxu0
  %366 = vmatprep.mubr.f32.mxu0 0.0
  %367 = vmatmul.mubr.f32.gmra.mrb[0].mxu0 %v153
  %v368 = vpop.f32.mrb[0].mxu0
  %v369 = vadd.f32 %v86, %v368
  %v370 = vpop.f32.mrb[0].mxu0
  %371 = vmatprep.mubr.f32.mxu0 0.0
  %372 = vmatmul.mubr.f32.gmra.mrb[0].mxu0 %v156
  %v373 = vpop.f32.mrb[0].mxu0
  %v374 = vadd.f32 %v86, %v373
  %v375 = vpop.f32.mrb[0].mxu0
  %376 = vmatprep.mubr.f32.mxu0 0.0
  %377 = vmatmul.mubr.f32.gmra.mrb[0].mxu0 %v159
  %v378 = vpop.f32.mrb[0].mxu0
  %v379 = vadd.f32 %v86, %v378
  %v380 = vpop.f32.mrb[0].mxu0
  %381 = vmatprep.mubr.f32.mxu0 0.0
  %382 = vmatmul.mubr.f32.gmra.mrb[0].mxu0 %v162
  %v383 = vpop.f32.mrb[0].mxu0
  %v384 = vadd.f32 %v86, %v383
  %v385 = vpop.f32.mrb[0].mxu0
  %386 = vmatprep.mubr.f32.mxu0 0.0
  %387 = vmatmul.mubr.f32.gmra.mrb[0].mxu0 %v165
  %v388 = vpop.f32.mrb[0].mxu0
  %v389 = vadd.f32 %v86, %v388
  %v390 = vpop.f32.mrb[0].mxu0
  %391 = vmatprep.mubr.f32.mxu0 0.0
  %392 = vmatmul.mubr.f32.gmra.mrb[0].mxu0 %v168
  %v393 = vpop.f32.mrb[0].mxu0
  %v394 = vadd.f32 %v86, %v393
  %v395 = vpop.f32.mrb[0].mxu0
  %396 = vmatprep.mubr.f32.mxu0 0.0
  %397 = vmatmul.mubr.f32.gmra.mrb[0].mxu0 %v171
  %v398 = vpop.f32.mrb[0].mxu0
  %v399 = vadd.f32 %v86, %v398
  %v400 = vpop.f32.mrb[0].mxu0
  %401 = vmatprep.mubr.f32.mxu0 0.0
  %402 = vmatmul.mubr.f32.gmra.mrb[0].mxu0 %v174
  %v403 = vpop.f32.mrb[0].mxu0
  %v404 = vadd.f32 %v86, %v403
  %v405 = vpop.f32.mrb[0].mxu0
  %406 = vmatprep.mubr.f32.mxu0 0.0
  %407 = vmatmul.mubr.f32.gmra.mrb[0].mxu0 %v177
  %v408 = vpop.f32.mrb[0].mxu0
  %v409 = vadd.f32 %v86, %v408
  %v410 = vpop.f32.mrb[0].mxu0
  %411 = vmatprep.mubr.f32.mxu0 0.0
  %412 = vmatmul.mubr.f32.gmra.mrb[0].mxu0 %v180
  %v413 = vpop.f32.mrb[0].mxu0
  %v414 = vadd.f32 %v86, %v413
  %v415 = vpop.f32.mrb[0].mxu0
  %416 = vmatprep.mubr.f32.mxu0 0.0
  %417 = vmatmul.mubr.f32.gmra.mrb[0].mxu0 %v183
  %v418 = vpop.f32.mrb[0].mxu0
  %v419 = vadd.f32 %v86, %v418
  %v420 = vpop.f32.mrb[0].mxu0
  %421 = vmatprep.mubr.f32.mxu0 0.0
  %422 = vmatmul.mubr.f32.gmra.mrb[0].mxu0 %v186
  %v423 = vpop.f32.mrb[0].mxu0
  %v424 = vadd.f32 %v86, %v423
  %v425 = vpop.f32.mrb[0].mxu0
  %426 = vmatprep.mubr.f32.mxu0 0.0
  %427 = vmatmul.mubr.f32.gmra.mrb[0].mxu0 %v189
  %v428 = vpop.f32.mrb[0].mxu0
  %v429 = vadd.f32 %v86, %v428
  %v430 = vpop.f32.mrb[0].mxu0
  %431 = vmatprep.mubr.f32.mxu0 0.0
  %432 = vmatmul.mubr.f32.gmra.mrb[0].mxu0 %v192
  %v433 = vpop.f32.mrb[0].mxu0
  %v434 = vadd.f32 %v86, %v433
  %v435 = vpop.f32.mrb[0].mxu0
  %436 = vmatprep.mubr.f32.mxu0 0.0
  %437 = vmatmul.mubr.f32.gmra.mrb[0].mxu0 %v195
  %v438 = vpop.f32.mrb[0].mxu0
  %v439 = vadd.f32 %v86, %v438
  %v440 = vpop.f32.mrb[0].mxu0
  %441 = vdwg.mxu0
  %v442 = vmax.f32 %v264, 0.0
  %v443 = vmax.f32 %v269, 0.0
  %v444 = vmax.f32 %v274, 0.0
  %v445 = vmax.f32 %v279, 0.0
  %v446 = vmax.f32 %v284, 0.0
  %v447 = vmax.f32 %v289, 0.0
  %v448 = vmax.f32 %v294, 0.0
  %v449 = vmax.f32 %v299, 0.0
  %v450 = vmax.f32 %v304, 0.0
  %v451 = vmax.f32 %v309, 0.0
  %v452 = vmax.f32 %v314, 0.0
  %v453 = vmax.f32 %v319, 0.0
  %v454 = vmax.f32 %v324, 0.0
  %v455 = vmax.f32 %v329, 0.0
  %v456 = vmax.f32 %v334, 0.0
  %v457 = vmax.f32 %v339, 0.0
  %v458 = vmax.f32 %v344, 0.0
  %v459 = vmax.f32 %v349, 0.0
  %v460 = vmax.f32 %v354, 0.0
  %v461 = vmax.f32 %v359, 0.0
  %v462 = vmax.f32 %v364, 0.0
  %v463 = vmax.f32 %v369, 0.0
  %v464 = vmax.f32 %v374, 0.0
  %v465 = vmax.f32 %v379, 0.0
  %v466 = vmax.f32 %v384, 0.0
  %v467 = vmax.f32 %v389, 0.0
  %v468 = vmax.f32 %v394, 0.0
  %v469 = vmax.f32 %v399, 0.0
  %v470 = vmax.f32 %v404, 0.0
  %v471 = vmax.f32 %v409, 0.0
  %v472 = vmax.f32 %v414, 0.0
  %v473 = vmax.f32 %v419, 0.0
  %v474 = vmax.f32 %v424, 0.0
  %v475 = vmax.f32 %v429, 0.0
  %v476 = vmax.f32 %v434, 0.0
  %v477 = vmax.f32 %v439, 0.0
  %v478 = vld [vmem:[%s3] sm:$0xff]
  %v479 = vld [vmem:[%s3 + $0x8] sm:$0xff]
  %v480 = vld [vmem:[%s3 + $0x10] sm:$0xff]
  %v481 = vld [vmem:[%s3 + $0x18] sm:$0xff]
  %v482 = vld [vmem:[%s3 + $0x20] sm:$0xff]
  %v483 = vld [vmem:[%s3 + $0x28] sm:$0xff]
  %v484 = vld [vmem:[%s3 + $0x30] sm:$0xff]
  %v485 = vld [vmem:[%s3 + $0x38] sm:$0xff]
  %v486 = vld [vmem:[%s3 + $0x40] sm:$0xff]
  %v487 = vld [vmem:[%s3 + $0x48] sm:$0xff]
  %v488 = vld [vmem:[%s3 + $0x50] sm:$0xff]
  %v489 = vld [vmem:[%s3 + $0x58] sm:$0xff]
  %v490 = vld [vmem:[%s3 + $0x60] sm:$0xff]
  %v491 = vld [vmem:[%s3 + $0x68] sm:$0xff]
  %v492 = vld [vmem:[%s3 + $0x70] sm:$0xff]
  %v493 = vld [vmem:[%s3 + $0x78] sm:$0xff]
  %v494 = vld [vmem:[%s3 + $0x80] sm:$0xff]
  %v495 = vld [vmem:[%s3 + $0x88] sm:$0xff]
  %v496 = vld [vmem:[%s3 + $0x90] sm:$0xff]
  %v497 = vld [vmem:[%s3 + $0x98] sm:$0xff]
  %v498 = vld [vmem:[%s3 + $0xa0] sm:$0xff]
  %v500 = vsel %vm88, %v480, 0
  %v503 = vsel %vm88, %v483, 0
  %v506 = vsel %vm88, %v486, 0
  %v509 = vsel %vm88, %v489, 0
  %v512 = vsel %vm88, %v492, 0
  %v515 = vsel %vm88, %v495, 0
  %v518 = vsel %vm88, %v498, 0
  %520 = vmatprep.subr.mxu0 0.0
  %521 = vmatpush1.msra.mxu0 %v442
  %522 = vmatprep.subr.mxu0 0.0
  %523 = vmatpush1.msra.mxu0 %v443
  %524 = vmatprep.subr.mxu0 0.0
  %525 = vmatpush1.msra.mxu0 %v444
  %526 = vmatprep.subr.mxu0 0.0
  %527 = vmatpush1.msra.mxu0 %v445
  %528 = vmatprep.subr.mxu0 0.0
  %529 = vmatpush1.msra.mxu0 %v446
  %530 = vmatprep.subr.mxu0 0.0
  %531 = vmatpush1.msra.mxu0 %v447
  %532 = vmatprep.subr.mxu0 0.0
  %533 = vmatpush1.msra.mxu0 %v448
  %534 = vmatprep.subr.mxu0 0.0
  %535 = vmatpush1.msra.mxu0 %v449
  %536 = vmatprep.subr.mxu0 0.0
  %537 = vmatpush1.msra.mxu0 %v450
  %538 = vmatprep.subr.mxu0 0.0
  %539 = vmatpush1.msra.mxu0 %v451
  %540 = vmatprep.subr.mxu0 0.0
  %541 = vmatpush1.msra.mxu0 %v452
  %542 = vmatprep.subr.mxu0 0.0
  %543 = vmatpush1.msra.mxu0 %v453
  %544 = vmatprep.subr.mxu0 0.0
  %545 = vmatpush1.msra.mxu0 %v454
  %546 = vmatprep.subr.mxu0 0.0
  %547 = vmatpush1.msra.mxu0 %v455
  %548 = vmatprep.subr.mxu0 0.0
  %549 = vmatpush1.msra.mxu0 %v456
  %550 = vmatprep.subr.mxu0 0.0
  %551 = vmatpush1.msra.mxu0 %v457
  %552 = vmatprep.subr.mxu0 0.0
  %553 = vmatpush1.msra.mxu0 %v458
  %554 = vmatprep.subr.mxu0 0.0
  %555 = vmatpush1.msra.mxu0 %v459
  %556 = vmatprep.subr.mxu0 0.0
  %557 = vmatpush1.msra.mxu0 %v460
  %558 = vmatprep.subr.mxu0 0.0
  %559 = vmatpush1.msra.mxu0 %v461
  %560 = vmatprep.subr.mxu0 0.0
  %561 = vmatpush1.msra.mxu0 %v462
  %562 = vmatprep.subr.mxu0 0.0
  %563 = vmatpush1.msra.mxu0 %v463
  %564 = vmatprep.subr.mxu0 0.0
  %565 = vmatpush1.msra.mxu0 %v464
  %566 = vmatprep.subr.mxu0 0.0
  %567 = vmatpush1.msra.mxu0 %v465
  %568 = vmatprep.subr.mxu0 0.0
  %569 = vmatpush1.msra.mxu0 %v466
  %570 = vmatprep.subr.mxu0 0.0
  %571 = vmatpush1.msra.mxu0 %v467
  %572 = vmatprep.subr.mxu0 0.0
  %573 = vmatpush1.msra.mxu0 %v468
  %574 = vmatprep.subr.mxu0 0.0
  %575 = vmatpush1.msra.mxu0 %v469
  %576 = vmatprep.subr.mxu0 0.0
  %577 = vmatpush1.msra.mxu0 %v470
  %578 = vmatprep.subr.mxu0 0.0
  %579 = vmatpush1.msra.mxu0 %v471
  %580 = vmatprep.subr.mxu0 0.0
  %581 = vmatpush1.msra.mxu0 %v472
  %582 = vmatprep.subr.mxu0 0.0
  %583 = vmatpush1.msra.mxu0 %v473
  %584 = vmatprep.mubr.f32.mxu0 %v479
  %585 = vmatmul.mubr.f32.gmra.mrb[0].mxu0 %v478
  %v586 = vpop.f32.mrb[0].mxu0
  %v587 = vadd.f32 0.0, %v586
  %v588 = vpop.f32.mrb[0].mxu0
  %589 = vmatprep.mubr.f32.mxu0 %v482
  %590 = vmatmul.mubr.f32.gmra.mrb[0].mxu0 %v481
  %v591 = vpop.f32.mrb[0].mxu0
  %v592 = vadd.f32 0.0, %v591
  %v593 = vpop.f32.mrb[0].mxu0
  %594 = vmatprep.mubr.f32.mxu0 %v485
  %595 = vmatmul.mubr.f32.gmra.mrb[0].mxu0 %v484
  %v596 = vpop.f32.mrb[0].mxu0
  %v597 = vadd.f32 0.0, %v596
  %v598 = vpop.f32.mrb[0].mxu0
  %599 = vmatprep.mubr.f32.mxu0 %v488
  %600 = vmatmul.mubr.f32.gmra.mrb[0].mxu0 %v487
  %v601 = vpop.f32.mrb[0].mxu0
  %v602 = vadd.f32 0.0, %v601
  %v603 = vpop.f32.mrb[0].mxu0
  %604 = vmatprep.mubr.f32.mxu0 %v491
  %605 = vmatmul.mubr.f32.gmra.mrb[0].mxu0 %v490
  %v606 = vpop.f32.mrb[0].mxu0
  %v607 = vadd.f32 0.0, %v606
  %v608 = vpop.f32.mrb[0].mxu0
  %609 = vmatprep.mubr.f32.mxu0 %v494
  %610 = vmatmul.mubr.f32.gmra.mrb[0].mxu0 %v493
  %v611 = vpop.f32.mrb[0].mxu0
  %v612 = vadd.f32 0.0, %v611
  %v613 = vpop.f32.mrb[0].mxu0
  %614 = vmatprep.mubr.f32.mxu0 %v497
  %615 = vmatmul.mubr.f32.gmra.mrb[0].mxu0 %v496
  %v616 = vpop.f32.mrb[0].mxu0
  %v617 = vadd.f32 0.0, %v616
  %v618 = vpop.f32.mrb[0].mxu0
  %619 = vdwg.mxu0
  %620 = vmatprep.subr.mxu0 0.0
  %621 = vmatpush1.msra.mxu0 %v474
  %622 = vmatprep.subr.mxu0 0.0
  %623 = vmatpush1.msra.mxu0 %v475
  %624 = vmatprep.subr.mxu0 0.0
  %625 = vmatpush1.msra.mxu0 %v476
  %626 = vmatprep.subr.mxu0 0.0
  %627 = vmatpush1.msra.mxu0 %v477
  %628 = vmatprep.subr.mxu0 0.0
  %629 = vmatpush1.msra.mxu0 0.0
  %630 = vmatprep.subr.mxu0 0.0
  %631 = vmatpush1.msra.mxu0 0.0
  %632 = vmatprep.subr.mxu0 0.0
  %633 = vmatpush1.msra.mxu0 0.0
  %634 = vmatprep.subr.mxu0 0.0
  %635 = vmatpush1.msra.mxu0 0.0
  %636 = vmatprep.subr.mxu0 0.0
  %637 = vmatpush1.msra.mxu0 0.0
  %638 = vmatprep.subr.mxu0 0.0
  %639 = vmatpush1.msra.mxu0 0.0
  %640 = vmatprep.subr.mxu0 0.0
  %641 = vmatpush1.msra.mxu0 0.0
  %642 = vmatprep.subr.mxu0 0.0
  %643 = vmatpush1.msra.mxu0 0.0
  %644 = vmatprep.subr.mxu0 0.0
  %645 = vmatpush1.msra.mxu0 0.0
  %646 = vmatprep.subr.mxu0 0.0
  %647 = vmatpush1.msra.mxu0 0.0
  %648 = vmatprep.subr.mxu0 0.0
  %649 = vmatpush1.msra.mxu0 0.0
  %650 = vmatprep.subr.mxu0 0.0
  %651 = vmatpush1.msra.mxu0 0.0
  %652 = vmatprep.subr.mxu0 0.0
  %653 = vmatpush1.msra.mxu0 0.0
  %654 = vmatprep.subr.mxu0 0.0
  %655 = vmatpush1.msra.mxu0 0.0
  %656 = vmatprep.subr.mxu0 0.0
  %657 = vmatpush1.msra.mxu0 0.0
  %658 = vmatprep.subr.mxu0 0.0
  %659 = vmatpush1.msra.mxu0 0.0
  %660 = vmatprep.subr.mxu0 0.0
  %661 = vmatpush1.msra.mxu0 0.0
  %662 = vmatprep.subr.mxu0 0.0
  %663 = vmatpush1.msra.mxu0 0.0
  %664 = vmatprep.subr.mxu0 0.0
  %665 = vmatpush1.msra.mxu0 0.0
  %666 = vmatprep.subr.mxu0 0.0
  %667 = vmatpush1.msra.mxu0 0.0
  %668 = vmatprep.subr.mxu0 0.0
  %669 = vmatpush1.msra.mxu0 0.0
  %670 = vmatprep.subr.mxu0 0.0
  %671 = vmatpush1.msra.mxu0 0.0
  %672 = vmatprep.subr.mxu0 0.0
  %673 = vmatpush1.msra.mxu0 0.0
  %674 = vmatprep.subr.mxu0 0.0
  %675 = vmatpush1.msra.mxu0 0.0
  %676 = vmatprep.subr.mxu0 0.0
  %677 = vmatpush1.msra.mxu0 0.0
  %678 = vmatprep.subr.mxu0 0.0
  %679 = vmatpush1.msra.mxu0 0.0
  %680 = vmatprep.subr.mxu0 0.0
  %681 = vmatpush1.msra.mxu0 0.0
  %682 = vmatprep.subr.mxu0 0.0
  %683 = vmatpush1.msra.mxu0 0.0
  %684 = vmatprep.mubr.f32.mxu0 0.0
  %685 = vmatmul.mubr.f32.gmra.mrb[0].mxu0 %v500
  %v686 = vpop.f32.mrb[0].mxu0
  %v687 = vadd.f32 %v587, %v686
  %v688 = vpop.f32.mrb[0].mxu0
  %689 = vmatprep.mubr.f32.mxu0 0.0
  %690 = vmatmul.mubr.f32.gmra.mrb[0].mxu0 %v503
  %v691 = vpop.f32.mrb[0].mxu0
  %v692 = vadd.f32 %v592, %v691
  %v693 = vpop.f32.mrb[0].mxu0
  %694 = vmatprep.mubr.f32.mxu0 0.0
  %695 = vmatmul.mubr.f32.gmra.mrb[0].mxu0 %v506
  %v696 = vpop.f32.mrb[0].mxu0
  %v697 = vadd.f32 %v597, %v696
  %v698 = vpop.f32.mrb[0].mxu0
  %699 = vmatprep.mubr.f32.mxu0 0.0
  %700 = vmatmul.mubr.f32.gmra.mrb[0].mxu0 %v509
  %v701 = vpop.f32.mrb[0].mxu0
  %v702 = vadd.f32 %v602, %v701
  %v703 = vpop.f32.mrb[0].mxu0
  %704 = vmatprep.mubr.f32.mxu0 0.0
  %705 = vmatmul.mubr.f32.gmra.mrb[0].mxu0 %v512
  %v706 = vpop.f32.mrb[0].mxu0
  %v707 = vadd.f32 %v607, %v706
  %v708 = vpop.f32.mrb[0].mxu0
  %709 = vmatprep.mubr.f32.mxu0 0.0
  %710 = vmatmul.mubr.f32.gmra.mrb[0].mxu0 %v515
  %v711 = vpop.f32.mrb[0].mxu0
  %v712 = vadd.f32 %v612, %v711
  %v713 = vpop.f32.mrb[0].mxu0
  %714 = vmatprep.mubr.f32.mxu0 0.0
  %715 = vmatmul.mubr.f32.gmra.mrb[0].mxu0 %v518
  %v716 = vpop.f32.mrb[0].mxu0
  %v717 = vadd.f32 %v617, %v716
  %v718 = vpop.f32.mrb[0].mxu0
  %719 = vdwg.mxu0
  %v720 = vld [vmem:[%s4] sm:$0xff]
  %s721 = scalar_lea.vmem %s3, 168
  %v722 = vld [vmem:[%s721] sm:$0xff]
  %v723 = vld [vmem:[%s721 + $0x8] sm:$0xff]
  %v724 = vld [vmem:[%s721 + $0x10] sm:$0xff]
  %v725 = vld [vmem:[%s721 + $0x18] sm:$0xff]
  %v726 = vld [vmem:[%s721 + $0x20] sm:$0xff]
  %v727 = vld [vmem:[%s721 + $0x28] sm:$0xff]
  %v728 = vld [vmem:[%s721 + $0x30] sm:$0xff]
  %v729 = vld [vmem:[%s721 + $0x38] sm:$0xff]
  %v730 = vld [vmem:[%s721 + $0x40] sm:$0xff]
  %v731 = vld [vmem:[%s721 + $0x48] sm:$0xff]
  %v732 = vld [vmem:[%s721 + $0x50] sm:$0xff]
  %v733 = vld [vmem:[%s721 + $0x58] sm:$0xff]
  %v734 = vld [vmem:[%s721 + $0x60] sm:$0xff]
  %v735 = vld [vmem:[%s721 + $0x68] sm:$0xff]
  %v736 = vld [vmem:[%s721 + $0x70] sm:$0xff]
  %v737 = vld [vmem:[%s721 + $0x78] sm:$0xff]
  %v738 = vld [vmem:[%s721 + $0x80] sm:$0xff]
  %v739 = vld [vmem:[%s721 + $0x88] sm:$0xff]
  %v740 = vld [vmem:[%s721 + $0x90] sm:$0xff]
  %v741 = vld [vmem:[%s721 + $0x98] sm:$0xff]
  %v742 = vld [vmem:[%s721 + $0xa0] sm:$0xff]
  %v744 = vsel %vm88, %v724, 0
  %v747 = vsel %vm88, %v727, 0
  %v750 = vsel %vm88, %v730, 0
  %v753 = vsel %vm88, %v733, 0
  %v756 = vsel %vm88, %v736, 0
  %v759 = vsel %vm88, %v739, 0
  %v762 = vsel %vm88, %v742, 0
  %764 = vmatprep.subr.mxu0 0.0
  %765 = vmatpush1.msra.mxu0 %v442
  %766 = vmatprep.subr.mxu0 0.0
  %767 = vmatpush1.msra.mxu0 %v443
  %768 = vmatprep.subr.mxu0 0.0
  %769 = vmatpush1.msra.mxu0 %v444
  %770 = vmatprep.subr.mxu0 0.0
  %771 = vmatpush1.msra.mxu0 %v445
  %772 = vmatprep.subr.mxu0 0.0
  %773 = vmatpush1.msra.mxu0 %v446
  %774 = vmatprep.subr.mxu0 0.0
  %775 = vmatpush1.msra.mxu0 %v447
  %776 = vmatprep.subr.mxu0 0.0
  %777 = vmatpush1.msra.mxu0 %v448
  %778 = vmatprep.subr.mxu0 0.0
  %779 = vmatpush1.msra.mxu0 %v449
  %780 = vmatprep.subr.mxu0 0.0
  %781 = vmatpush1.msra.mxu0 %v450
  %782 = vmatprep.subr.mxu0 0.0
  %783 = vmatpush1.msra.mxu0 %v451
  %784 = vmatprep.subr.mxu0 0.0
  %785 = vmatpush1.msra.mxu0 %v452
  %786 = vmatprep.subr.mxu0 0.0
  %787 = vmatpush1.msra.mxu0 %v453
  %788 = vmatprep.subr.mxu0 0.0
  %789 = vmatpush1.msra.mxu0 %v454
  %790 = vmatprep.subr.mxu0 0.0
  %791 = vmatpush1.msra.mxu0 %v455
  %792 = vmatprep.subr.mxu0 0.0
  %793 = vmatpush1.msra.mxu0 %v456
  %794 = vmatprep.subr.mxu0 0.0
  %795 = vmatpush1.msra.mxu0 %v457
  %796 = vmatprep.subr.mxu0 0.0
  %797 = vmatpush1.msra.mxu0 %v458
  %798 = vmatprep.subr.mxu0 0.0
  %799 = vmatpush1.msra.mxu0 %v459
  %800 = vmatprep.subr.mxu0 0.0
  %801 = vmatpush1.msra.mxu0 %v460
  %802 = vmatprep.subr.mxu0 0.0
  %803 = vmatpush1.msra.mxu0 %v461
  %804 = vmatprep.subr.mxu0 0.0
  %805 = vmatpush1.msra.mxu0 %v462
  %806 = vmatprep.subr.mxu0 0.0
  %807 = vmatpush1.msra.mxu0 %v463
  %808 = vmatprep.subr.mxu0 0.0
  %809 = vmatpush1.msra.mxu0 %v464
  %810 = vmatprep.subr.mxu0 0.0
  %811 = vmatpush1.msra.mxu0 %v465
  %812 = vmatprep.subr.mxu0 0.0
  %813 = vmatpush1.msra.mxu0 %v466
  %814 = vmatprep.subr.mxu0 0.0
  %815 = vmatpush1.msra.mxu0 %v467
  %816 = vmatprep.subr.mxu0 0.0
  %817 = vmatpush1.msra.mxu0 %v468
  %818 = vmatprep.subr.mxu0 0.0
  %819 = vmatpush1.msra.mxu0 %v469
  %820 = vmatprep.subr.mxu0 0.0
  %821 = vmatpush1.msra.mxu0 %v470
  %822 = vmatprep.subr.mxu0 0.0
  %823 = vmatpush1.msra.mxu0 %v471
  %824 = vmatprep.subr.mxu0 0.0
  %825 = vmatpush1.msra.mxu0 %v472
  %826 = vmatprep.subr.mxu0 0.0
  %827 = vmatpush1.msra.mxu0 %v473
  %828 = vmatprep.mubr.f32.mxu0 %v723
  %829 = vmatmul.mubr.f32.gmra.mrb[0].mxu0 %v722
  %v830 = vpop.f32.mrb[0].mxu0
  %v831 = vadd.f32 0.0, %v830
  %v832 = vpop.f32.mrb[0].mxu0
  %833 = vmatprep.mubr.f32.mxu0 %v726
  %834 = vmatmul.mubr.f32.gmra.mrb[0].mxu0 %v725
  %v835 = vpop.f32.mrb[0].mxu0
  %v836 = vadd.f32 0.0, %v835
  %v837 = vpop.f32.mrb[0].mxu0
  %838 = vmatprep.mubr.f32.mxu0 %v729
  %839 = vmatmul.mubr.f32.gmra.mrb[0].mxu0 %v728
  %v840 = vpop.f32.mrb[0].mxu0
  %v841 = vadd.f32 0.0, %v840
  %v842 = vpop.f32.mrb[0].mxu0
  %843 = vmatprep.mubr.f32.mxu0 %v732
  %844 = vmatmul.mubr.f32.gmra.mrb[0].mxu0 %v731
  %v845 = vpop.f32.mrb[0].mxu0
  %v846 = vadd.f32 0.0, %v845
  %v847 = vpop.f32.mrb[0].mxu0
  %848 = vmatprep.mubr.f32.mxu0 %v735
  %849 = vmatmul.mubr.f32.gmra.mrb[0].mxu0 %v734
  %v850 = vpop.f32.mrb[0].mxu0
  %v851 = vadd.f32 0.0, %v850
  %v852 = vpop.f32.mrb[0].mxu0
  %853 = vmatprep.mubr.f32.mxu0 %v738
  %854 = vmatmul.mubr.f32.gmra.mrb[0].mxu0 %v737
  %v855 = vpop.f32.mrb[0].mxu0
  %v856 = vadd.f32 0.0, %v855
  %v857 = vpop.f32.mrb[0].mxu0
  %858 = vmatprep.mubr.f32.mxu0 %v741
  %859 = vmatmul.mubr.f32.gmra.mrb[0].mxu0 %v740
  %v860 = vpop.f32.mrb[0].mxu0
  %v861 = vadd.f32 0.0, %v860
  %v862 = vpop.f32.mrb[0].mxu0
  %863 = vdwg.mxu0
  %864 = vmatprep.subr.mxu0 0.0
  %865 = vmatpush1.msra.mxu0 %v474
  %866 = vmatprep.subr.mxu0 0.0
  %867 = vmatpush1.msra.mxu0 %v475
  %868 = vmatprep.subr.mxu0 0.0
  %869 = vmatpush1.msra.mxu0 %v476
  %870 = vmatprep.subr.mxu0 0.0
  %871 = vmatpush1.msra.mxu0 %v477
  %872 = vmatprep.subr.mxu0 0.0
  %873 = vmatpush1.msra.mxu0 0.0
  %874 = vmatprep.subr.mxu0 0.0
  %875 = vmatpush1.msra.mxu0 0.0
  %876 = vmatprep.subr.mxu0 0.0
  %877 = vmatpush1.msra.mxu0 0.0
  %878 = vmatprep.subr.mxu0 0.0
  %879 = vmatpush1.msra.mxu0 0.0
  %880 = vmatprep.subr.mxu0 0.0
  %881 = vmatpush1.msra.mxu0 0.0
  %882 = vmatprep.subr.mxu0 0.0
  %883 = vmatpush1.msra.mxu0 0.0
  %884 = vmatprep.subr.mxu0 0.0
  %885 = vmatpush1.msra.mxu0 0.0
  %886 = vmatprep.subr.mxu0 0.0
  %887 = vmatpush1.msra.mxu0 0.0
  %888 = vmatprep.subr.mxu0 0.0
  %889 = vmatpush1.msra.mxu0 0.0
  %890 = vmatprep.subr.mxu0 0.0
  %891 = vmatpush1.msra.mxu0 0.0
  %892 = vmatprep.subr.mxu0 0.0
  %893 = vmatpush1.msra.mxu0 0.0
  %894 = vmatprep.subr.mxu0 0.0
  %895 = vmatpush1.msra.mxu0 0.0
  %896 = vmatprep.subr.mxu0 0.0
  %897 = vmatpush1.msra.mxu0 0.0
  %898 = vmatprep.subr.mxu0 0.0
  %899 = vmatpush1.msra.mxu0 0.0
  %900 = vmatprep.subr.mxu0 0.0
  %901 = vmatpush1.msra.mxu0 0.0
  %902 = vmatprep.subr.mxu0 0.0
  %903 = vmatpush1.msra.mxu0 0.0
  %904 = vmatprep.subr.mxu0 0.0
  %905 = vmatpush1.msra.mxu0 0.0
  %906 = vmatprep.subr.mxu0 0.0
  %907 = vmatpush1.msra.mxu0 0.0
  %908 = vmatprep.subr.mxu0 0.0
  %909 = vmatpush1.msra.mxu0 0.0
  %910 = vmatprep.subr.mxu0 0.0
  %911 = vmatpush1.msra.mxu0 0.0
  %912 = vmatprep.subr.mxu0 0.0
  %913 = vmatpush1.msra.mxu0 0.0
  %914 = vmatprep.subr.mxu0 0.0
  %915 = vmatpush1.msra.mxu0 0.0
  %916 = vmatprep.subr.mxu0 0.0
  %917 = vmatpush1.msra.mxu0 0.0
  %918 = vmatprep.subr.mxu0 0.0
  %919 = vmatpush1.msra.mxu0 0.0
  %920 = vmatprep.subr.mxu0 0.0
  %921 = vmatpush1.msra.mxu0 0.0
  %922 = vmatprep.subr.mxu0 0.0
  %923 = vmatpush1.msra.mxu0 0.0
  %924 = vmatprep.subr.mxu0 0.0
  %925 = vmatpush1.msra.mxu0 0.0
  %926 = vmatprep.subr.mxu0 0.0
  %927 = vmatpush1.msra.mxu0 0.0
  %928 = vmatprep.mubr.f32.mxu0 0.0
  %929 = vmatmul.mubr.f32.gmra.mrb[0].mxu0 %v744
  %v930 = vpop.f32.mrb[0].mxu0
  %v931 = vadd.f32 %v831, %v930
  %v932 = vpop.f32.mrb[0].mxu0
  %933 = vmatprep.mubr.f32.mxu0 0.0
  %934 = vmatmul.mubr.f32.gmra.mrb[0].mxu0 %v747
  %v935 = vpop.f32.mrb[0].mxu0
  %v936 = vadd.f32 %v836, %v935
  %v937 = vpop.f32.mrb[0].mxu0
  %938 = vmatprep.mubr.f32.mxu0 0.0
  %939 = vmatmul.mubr.f32.gmra.mrb[0].mxu0 %v750
  %v940 = vpop.f32.mrb[0].mxu0
  %v941 = vadd.f32 %v841, %v940
  %v942 = vpop.f32.mrb[0].mxu0
  %943 = vmatprep.mubr.f32.mxu0 0.0
  %944 = vmatmul.mubr.f32.gmra.mrb[0].mxu0 %v753
  %v945 = vpop.f32.mrb[0].mxu0
  %v946 = vadd.f32 %v846, %v945
  %v947 = vpop.f32.mrb[0].mxu0
  %948 = vmatprep.mubr.f32.mxu0 0.0
  %949 = vmatmul.mubr.f32.gmra.mrb[0].mxu0 %v756
  %v950 = vpop.f32.mrb[0].mxu0
  %v951 = vadd.f32 %v851, %v950
  %v952 = vpop.f32.mrb[0].mxu0
  %953 = vmatprep.mubr.f32.mxu0 0.0
  %954 = vmatmul.mubr.f32.gmra.mrb[0].mxu0 %v759
  %v955 = vpop.f32.mrb[0].mxu0
  %v956 = vadd.f32 %v856, %v955
  %v957 = vpop.f32.mrb[0].mxu0
  %958 = vmatprep.mubr.f32.mxu0 0.0
  %959 = vmatmul.mubr.f32.gmra.mrb[0].mxu0 %v762
  %v960 = vpop.f32.mrb[0].mxu0
  %v961 = vadd.f32 %v861, %v960
  %v962 = vpop.f32.mrb[0].mxu0
  %963 = vdwg.mxu0
  %s964 = scalar_lea.vmem %s4, 8
  %v965 = vld [vmem:[%s964] sm:$0xff]
  %vm966 = vcmask 64512
  %v968 = vsel %vm966, %v931, 0
  %v971 = vsel %vm966, %v936, 0
  %v974 = vsel %vm966, %v941, 0
  %v977 = vsel %vm966, %v946, 0
  %v980 = vsel %vm966, %v951, 0
  %v983 = vsel %vm966, %v956, 0
  %v986 = vsel %vm966, %v961, 0
  %988 = vmatprep.subr.mxu0 0.0
  %989 = vmatpush1.msra.mxu0 %v965
  %990 = vmatprep.subr.mxu0 0.0
  %991 = vmatpush1.msra.mxu0 0.0
  %992 = vmatprep.subr.mxu0 0.0
  %993 = vmatpush1.msra.mxu0 0.0
  %994 = vmatprep.subr.mxu0 0.0
  %995 = vmatpush1.msra.mxu0 0.0
  %996 = vmatprep.subr.mxu0 0.0
  %997 = vmatpush1.msra.mxu0 0.0
  %998 = vmatprep.subr.mxu0 0.0
  %999 = vmatpush1.msra.mxu0 0.0
  %1000 = vmatprep.subr.mxu0 0.0
  %1001 = vmatpush1.msra.mxu0 0.0
  %1002 = vmatprep.subr.mxu0 0.0
  %1003 = vmatpush1.msra.mxu0 0.0
  %1004 = vmatprep.subr.mxu0 0.0
  %1005 = vmatpush1.msra.mxu0 0.0
  %1006 = vmatprep.subr.mxu0 0.0
  %1007 = vmatpush1.msra.mxu0 0.0
  %1008 = vmatprep.subr.mxu0 0.0
  %1009 = vmatpush1.msra.mxu0 0.0
  %1010 = vmatprep.subr.mxu0 0.0
  %1011 = vmatpush1.msra.mxu0 0.0
  %1012 = vmatprep.subr.mxu0 0.0
  %1013 = vmatpush1.msra.mxu0 0.0
  %1014 = vmatprep.subr.mxu0 0.0
  %1015 = vmatpush1.msra.mxu0 0.0
  %1016 = vmatprep.subr.mxu0 0.0
  %1017 = vmatpush1.msra.mxu0 0.0
  %1018 = vmatprep.subr.mxu0 0.0
  %1019 = vmatpush1.msra.mxu0 0.0
  %1020 = vmatprep.subr.mxu0 0.0
  %1021 = vmatpush1.msra.mxu0 0.0
  %1022 = vmatprep.subr.mxu0 0.0
  %1023 = vmatpush1.msra.mxu0 0.0
  %1024 = vmatprep.subr.mxu0 0.0
  %1025 = vmatpush1.msra.mxu0 0.0
  %1026 = vmatprep.subr.mxu0 0.0
  %1027 = vmatpush1.msra.mxu0 0.0
  %1028 = vmatprep.subr.mxu0 0.0
  %1029 = vmatpush1.msra.mxu0 0.0
  %1030 = vmatprep.subr.mxu0 0.0
  %1031 = vmatpush1.msra.mxu0 0.0
  %1032 = vmatprep.subr.mxu0 0.0
  %1033 = vmatpush1.msra.mxu0 0.0
  %1034 = vmatprep.subr.mxu0 0.0
  %1035 = vmatpush1.msra.mxu0 0.0
  %1036 = vmatprep.subr.mxu0 0.0
  %1037 = vmatpush1.msra.mxu0 0.0
  %1038 = vmatprep.subr.mxu0 0.0
  %1039 = vmatpush1.msra.mxu0 0.0
  %1040 = vmatprep.subr.mxu0 0.0
  %1041 = vmatpush1.msra.mxu0 0.0
  %1042 = vmatprep.subr.mxu0 0.0
  %1043 = vmatpush1.msra.mxu0 0.0
  %1044 = vmatprep.subr.mxu0 0.0
  %1045 = vmatpush1.msra.mxu0 0.0
  %1046 = vmatprep.subr.mxu0 0.0
  %1047 = vmatpush1.msra.mxu0 0.0
  %1048 = vmatprep.subr.mxu0 0.0
  %1049 = vmatpush1.msra.mxu0 0.0
  %1050 = vmatprep.subr.mxu0 0.0
  %1051 = vmatpush1.msra.mxu0 0.0
  %1052 = vmatprep.mubr.f32.mxu0 0.0
  %1053 = vmatmul.mubr.f32.gmra.mrb[0].mxu0 %v968
  %v1054 = vpop.f32.mrb[0].mxu0
  %v1055 = vadd.f32 0.0, %v1054
  %v1056 = vpop.f32.mrb[0].mxu0
  %1057 = vmatprep.mubr.f32.mxu0 0.0
  %1058 = vmatmul.mubr.f32.gmra.mrb[0].mxu0 %v971
  %v1059 = vpop.f32.mrb[0].mxu0
  %v1060 = vadd.f32 0.0, %v1059
  %v1061 = vpop.f32.mrb[0].mxu0
  %1062 = vmatprep.mubr.f32.mxu0 0.0
  %1063 = vmatmul.mubr.f32.gmra.mrb[0].mxu0 %v974
  %v1064 = vpop.f32.mrb[0].mxu0
  %v1065 = vadd.f32 0.0, %v1064
  %v1066 = vpop.f32.mrb[0].mxu0
  %1067 = vmatprep.mubr.f32.mxu0 0.0
  %1068 = vmatmul.mubr.f32.gmra.mrb[0].mxu0 %v977
  %v1069 = vpop.f32.mrb[0].mxu0
  %v1070 = vadd.f32 0.0, %v1069
  %v1071 = vpop.f32.mrb[0].mxu0
  %1072 = vmatprep.mubr.f32.mxu0 0.0
  %1073 = vmatmul.mubr.f32.gmra.mrb[0].mxu0 %v980
  %v1074 = vpop.f32.mrb[0].mxu0
  %v1075 = vadd.f32 0.0, %v1074
  %v1076 = vpop.f32.mrb[0].mxu0
  %1077 = vmatprep.mubr.f32.mxu0 0.0
  %1078 = vmatmul.mubr.f32.gmra.mrb[0].mxu0 %v983
  %v1079 = vpop.f32.mrb[0].mxu0
  %v1080 = vadd.f32 0.0, %v1079
  %v1081 = vpop.f32.mrb[0].mxu0
  %1082 = vmatprep.mubr.f32.mxu0 0.0
  %1083 = vmatmul.mubr.f32.gmra.mrb[0].mxu0 %v986
  %v1084 = vpop.f32.mrb[0].mxu0
  %v1085 = vadd.f32 0.0, %v1084
  %v1086 = vpop.f32.mrb[0].mxu0
  %1087 = vdwg.mxu0
  %v1089 = vsel %vm966, %v687, 0
  %v1092 = vsel %vm966, %v692, 0
  %v1095 = vsel %vm966, %v697, 0
  %v1098 = vsel %vm966, %v702, 0
  %v1101 = vsel %vm966, %v707, 0
  %v1104 = vsel %vm966, %v712, 0
  %v1107 = vsel %vm966, %v717, 0
  %1109 = vmatprep.subr.mxu0 0.0
  %1110 = vmatpush1.msra.mxu0 %v720
  %1111 = vmatprep.subr.mxu0 0.0
  %1112 = vmatpush1.msra.mxu0 0.0
  %1113 = vmatprep.subr.mxu0 0.0
  %1114 = vmatpush1.msra.mxu0 0.0
  %1115 = vmatprep.subr.mxu0 0.0
  %1116 = vmatpush1.msra.mxu0 0.0
  %1117 = vmatprep.subr.mxu0 0.0
  %1118 = vmatpush1.msra.mxu0 0.0
  %1119 = vmatprep.subr.mxu0 0.0
  %1120 = vmatpush1.msra.mxu0 0.0
  %1121 = vmatprep.subr.mxu0 0.0
  %1122 = vmatpush1.msra.mxu0 0.0
  %1123 = vmatprep.subr.mxu0 0.0
  %1124 = vmatpush1.msra.mxu0 0.0
  %1125 = vmatprep.subr.mxu0 0.0
  %1126 = vmatpush1.msra.mxu0 0.0
  %1127 = vmatprep.subr.mxu0 0.0
  %1128 = vmatpush1.msra.mxu0 0.0
  %1129 = vmatprep.subr.mxu0 0.0
  %1130 = vmatpush1.msra.mxu0 0.0
  %1131 = vmatprep.subr.mxu0 0.0
  %1132 = vmatpush1.msra.mxu0 0.0
  %1133 = vmatprep.subr.mxu0 0.0
  %1134 = vmatpush1.msra.mxu0 0.0
  %1135 = vmatprep.subr.mxu0 0.0
  %1136 = vmatpush1.msra.mxu0 0.0
  %1137 = vmatprep.subr.mxu0 0.0
  %1138 = vmatpush1.msra.mxu0 0.0
  %1139 = vmatprep.subr.mxu0 0.0
  %1140 = vmatpush1.msra.mxu0 0.0
  %1141 = vmatprep.subr.mxu0 0.0
  %1142 = vmatpush1.msra.mxu0 0.0
  %1143 = vmatprep.subr.mxu0 0.0
  %1144 = vmatpush1.msra.mxu0 0.0
  %1145 = vmatprep.subr.mxu0 0.0
  %1146 = vmatpush1.msra.mxu0 0.0
  %1147 = vmatprep.subr.mxu0 0.0
  %1148 = vmatpush1.msra.mxu0 0.0
  %1149 = vmatprep.subr.mxu0 0.0
  %1150 = vmatpush1.msra.mxu0 0.0
  %1151 = vmatprep.subr.mxu0 0.0
  %1152 = vmatpush1.msra.mxu0 0.0
  %1153 = vmatprep.subr.mxu0 0.0
  %1154 = vmatpush1.msra.mxu0 0.0
  %1155 = vmatprep.subr.mxu0 0.0
  %1156 = vmatpush1.msra.mxu0 0.0
  %1157 = vmatprep.subr.mxu0 0.0
  %1158 = vmatpush1.msra.mxu0 0.0
  %1159 = vmatprep.subr.mxu0 0.0
  %1160 = vmatpush1.msra.mxu0 0.0
  %1161 = vmatprep.subr.mxu0 0.0
  %1162 = vmatpush1.msra.mxu0 0.0
  %1163 = vmatprep.subr.mxu0 0.0
  %1164 = vmatpush1.msra.mxu0 0.0
  %1165 = vmatprep.subr.mxu0 0.0
  %1166 = vmatpush1.msra.mxu0 0.0
  %1167 = vmatprep.subr.mxu0 0.0
  %1168 = vmatpush1.msra.mxu0 0.0
  %1169 = vmatprep.subr.mxu0 0.0
  %1170 = vmatpush1.msra.mxu0 0.0
  %1171 = vmatprep.subr.mxu0 0.0
  %1172 = vmatpush1.msra.mxu0 0.0
  %1173 = vmatprep.mubr.f32.mxu0 0.0
  %1174 = vmatmul.mubr.f32.gmra.mrb[0].mxu0 %v1089
  %v1175 = vpop.f32.mrb[0].mxu0
  %v1176 = vadd.f32 %v1055, %v1175
  %v1177 = vpop.f32.mrb[0].mxu0
  %1178 = vmatprep.mubr.f32.mxu0 0.0
  %1179 = vmatmul.mubr.f32.gmra.mrb[0].mxu0 %v1092
  %v1180 = vpop.f32.mrb[0].mxu0
  %v1181 = vadd.f32 %v1060, %v1180
  %v1182 = vpop.f32.mrb[0].mxu0
  %1183 = vmatprep.mubr.f32.mxu0 0.0
  %1184 = vmatmul.mubr.f32.gmra.mrb[0].mxu0 %v1095
  %v1185 = vpop.f32.mrb[0].mxu0
  %v1186 = vadd.f32 %v1065, %v1185
  %v1187 = vpop.f32.mrb[0].mxu0
  %1188 = vmatprep.mubr.f32.mxu0 0.0
  %1189 = vmatmul.mubr.f32.gmra.mrb[0].mxu0 %v1098
  %v1190 = vpop.f32.mrb[0].mxu0
  %v1191 = vadd.f32 %v1070, %v1190
  %v1192 = vpop.f32.mrb[0].mxu0
  %1193 = vmatprep.mubr.f32.mxu0 0.0
  %1194 = vmatmul.mubr.f32.gmra.mrb[0].mxu0 %v1101
  %v1195 = vpop.f32.mrb[0].mxu0
  %v1196 = vadd.f32 %v1075, %v1195
  %v1197 = vpop.f32.mrb[0].mxu0
  %1198 = vmatprep.mubr.f32.mxu0 0.0
  %1199 = vmatmul.mubr.f32.gmra.mrb[0].mxu0 %v1104
  %v1200 = vpop.f32.mrb[0].mxu0
  %v1201 = vadd.f32 %v1080, %v1200
  %v1202 = vpop.f32.mrb[0].mxu0
  %1203 = vmatprep.mubr.f32.mxu0 0.0
  %1204 = vmatmul.mubr.f32.gmra.mrb[0].mxu0 %v1107
  %v1205 = vpop.f32.mrb[0].mxu0
  %v1206 = vadd.f32 %v1085, %v1205
  %v1207 = vpop.f32.mrb[0].mxu0
  %1208 = vdwg.mxu0
  %s1209 = scalar_lea.vmem %s3, 336
  %v1210 = vld [vmem:[%s1209] sm:$0xff]
  %v1211 = vld [vmem:[%s1209 + $0x8] sm:$0xff]
  %v1212 = vld [vmem:[%s1209 + $0x10] sm:$0xff]
  %v1213 = vld [vmem:[%s1209 + $0x18] sm:$0xff]
  %v1214 = vld [vmem:[%s1209 + $0x20] sm:$0xff]
  %v1215 = vld [vmem:[%s1209 + $0x28] sm:$0xff]
  %v1216 = vld [vmem:[%s1209 + $0x30] sm:$0xff]
  %v1217 = vld [vmem:[%s1209 + $0x38] sm:$0xff]
  %v1218 = vld [vmem:[%s1209 + $0x40] sm:$0xff]
  %v1219 = vld [vmem:[%s1209 + $0x48] sm:$0xff]
  %v1220 = vld [vmem:[%s1209 + $0x50] sm:$0xff]
  %v1221 = vld [vmem:[%s1209 + $0x58] sm:$0xff]
  %v1222 = vld [vmem:[%s1209 + $0x60] sm:$0xff]
  %v1223 = vld [vmem:[%s1209 + $0x68] sm:$0xff]
  %v1224 = vld [vmem:[%s1209 + $0x70] sm:$0xff]
  %v1225 = vld [vmem:[%s1209 + $0x78] sm:$0xff]
  %v1226 = vld [vmem:[%s1209 + $0x80] sm:$0xff]
  %v1227 = vld [vmem:[%s1209 + $0x88] sm:$0xff]
  %v1228 = vld [vmem:[%s1209 + $0x90] sm:$0xff]
  %v1229 = vld [vmem:[%s1209 + $0x98] sm:$0xff]
  %v1230 = vld [vmem:[%s1209 + $0xa0] sm:$0xff]
  %v1232 = vsel %vm88, %v1212, 0
  %v1235 = vsel %vm88, %v1215, 0
  %v1238 = vsel %vm88, %v1218, 0
  %v1241 = vsel %vm88, %v1221, 0
  %v1244 = vsel %vm88, %v1224, 0
  %v1247 = vsel %vm88, %v1227, 0
  %v1250 = vsel %vm88, %v1230, 0
  %1252 = vmatprep.subr.mxu0 0.0
  %1253 = vmatpush1.msra.mxu0 %v442
  %1254 = vmatprep.subr.mxu0 0.0
  %1255 = vmatpush1.msra.mxu0 %v443
  %1256 = vmatprep.subr.mxu0 0.0
  %1257 = vmatpush1.msra.mxu0 %v444
  %1258 = vmatprep.subr.mxu0 0.0
  %1259 = vmatpush1.msra.mxu0 %v445
  %1260 = vmatprep.subr.mxu0 0.0
  %1261 = vmatpush1.msra.mxu0 %v446
  %1262 = vmatprep.subr.mxu0 0.0
  %1263 = vmatpush1.msra.mxu0 %v447
  %1264 = vmatprep.subr.mxu0 0.0
  %1265 = vmatpush1.msra.mxu0 %v448
  %1266 = vmatprep.subr.mxu0 0.0
  %1267 = vmatpush1.msra.mxu0 %v449
  %1268 = vmatprep.subr.mxu0 0.0
  %1269 = vmatpush1.msra.mxu0 %v450
  %1270 = vmatprep.subr.mxu0 0.0
  %1271 = vmatpush1.msra.mxu0 %v451
  %1272 = vmatprep.subr.mxu0 0.0
  %1273 = vmatpush1.msra.mxu0 %v452
  %1274 = vmatprep.subr.mxu0 0.0
  %1275 = vmatpush1.msra.mxu0 %v453
  %1276 = vmatprep.subr.mxu0 0.0
  %1277 = vmatpush1.msra.mxu0 %v454
  %1278 = vmatprep.subr.mxu0 0.0
  %1279 = vmatpush1.msra.mxu0 %v455
  %1280 = vmatprep.subr.mxu0 0.0
  %1281 = vmatpush1.msra.mxu0 %v456
  %1282 = vmatprep.subr.mxu0 0.0
  %1283 = vmatpush1.msra.mxu0 %v457
  %1284 = vmatprep.subr.mxu0 0.0
  %1285 = vmatpush1.msra.mxu0 %v458
  %1286 = vmatprep.subr.mxu0 0.0
  %1287 = vmatpush1.msra.mxu0 %v459
  %1288 = vmatprep.subr.mxu0 0.0
  %1289 = vmatpush1.msra.mxu0 %v460
  %1290 = vmatprep.subr.mxu0 0.0
  %1291 = vmatpush1.msra.mxu0 %v461
  %1292 = vmatprep.subr.mxu0 0.0
  %1293 = vmatpush1.msra.mxu0 %v462
  %1294 = vmatprep.subr.mxu0 0.0
  %1295 = vmatpush1.msra.mxu0 %v463
  %1296 = vmatprep.subr.mxu0 0.0
  %1297 = vmatpush1.msra.mxu0 %v464
  %1298 = vmatprep.subr.mxu0 0.0
  %1299 = vmatpush1.msra.mxu0 %v465
  %1300 = vmatprep.subr.mxu0 0.0
  %1301 = vmatpush1.msra.mxu0 %v466
  %1302 = vmatprep.subr.mxu0 0.0
  %1303 = vmatpush1.msra.mxu0 %v467
  %1304 = vmatprep.subr.mxu0 0.0
  %1305 = vmatpush1.msra.mxu0 %v468
  %1306 = vmatprep.subr.mxu0 0.0
  %1307 = vmatpush1.msra.mxu0 %v469
  %1308 = vmatprep.subr.mxu0 0.0
  %1309 = vmatpush1.msra.mxu0 %v470
  %1310 = vmatprep.subr.mxu0 0.0
  %1311 = vmatpush1.msra.mxu0 %v471
  %1312 = vmatprep.subr.mxu0 0.0
  %1313 = vmatpush1.msra.mxu0 %v472
  %1314 = vmatprep.subr.mxu0 0.0
  %1315 = vmatpush1.msra.mxu0 %v473
  %1316 = vmatprep.mubr.f32.mxu0 %v1211
  %1317 = vmatmul.mubr.f32.gmra.mrb[0].mxu0 %v1210
  %v1318 = vpop.f32.mrb[0].mxu0
  %v1319 = vadd.f32 0.0, %v1318
  %v1320 = vpop.f32.mrb[0].mxu0
  %1321 = vmatprep.mubr.f32.mxu0 %v1214
  %1322 = vmatmul.mubr.f32.gmra.mrb[0].mxu0 %v1213
  %v1323 = vpop.f32.mrb[0].mxu0
  %v1324 = vadd.f32 0.0, %v1323
  %v1325 = vpop.f32.mrb[0].mxu0
  %1326 = vmatprep.mubr.f32.mxu0 %v1217
  %1327 = vmatmul.mubr.f32.gmra.mrb[0].mxu0 %v1216
  %v1328 = vpop.f32.mrb[0].mxu0
  %v1329 = vadd.f32 0.0, %v1328
  %v1330 = vpop.f32.mrb[0].mxu0
  %1331 = vmatprep.mubr.f32.mxu0 %v1220
  %1332 = vmatmul.mubr.f32.gmra.mrb[0].mxu0 %v1219
  %v1333 = vpop.f32.mrb[0].mxu0
  %v1334 = vadd.f32 0.0, %v1333
  %v1335 = vpop.f32.mrb[0].mxu0
  %1336 = vmatprep.mubr.f32.mxu0 %v1223
  %1337 = vmatmul.mubr.f32.gmra.mrb[0].mxu0 %v1222
  %v1338 = vpop.f32.mrb[0].mxu0
  %v1339 = vadd.f32 0.0, %v1338
  %v1340 = vpop.f32.mrb[0].mxu0
  %1341 = vmatprep.mubr.f32.mxu0 %v1226
  %1342 = vmatmul.mubr.f32.gmra.mrb[0].mxu0 %v1225
  %v1343 = vpop.f32.mrb[0].mxu0
  %v1344 = vadd.f32 0.0, %v1343
  %v1345 = vpop.f32.mrb[0].mxu0
  %1346 = vmatprep.mubr.f32.mxu0 %v1229
  %1347 = vmatmul.mubr.f32.gmra.mrb[0].mxu0 %v1228
  %v1348 = vpop.f32.mrb[0].mxu0
  %v1349 = vadd.f32 0.0, %v1348
  %v1350 = vpop.f32.mrb[0].mxu0
  %1351 = vdwg.mxu0
  %1352 = vmatprep.subr.mxu0 0.0
  %1353 = vmatpush1.msra.mxu0 %v474
  %1354 = vmatprep.subr.mxu0 0.0
  %1355 = vmatpush1.msra.mxu0 %v475
  %1356 = vmatprep.subr.mxu0 0.0
  %1357 = vmatpush1.msra.mxu0 %v476
  %1358 = vmatprep.subr.mxu0 0.0
  %1359 = vmatpush1.msra.mxu0 %v477
  %1360 = vmatprep.subr.mxu0 0.0
  %1361 = vmatpush1.msra.mxu0 0.0
  %1362 = vmatprep.subr.mxu0 0.0
  %1363 = vmatpush1.msra.mxu0 0.0
  %1364 = vmatprep.subr.mxu0 0.0
  %1365 = vmatpush1.msra.mxu0 0.0
  %1366 = vmatprep.subr.mxu0 0.0
  %1367 = vmatpush1.msra.mxu0 0.0
  %1368 = vmatprep.subr.mxu0 0.0
  %1369 = vmatpush1.msra.mxu0 0.0
  %1370 = vmatprep.subr.mxu0 0.0
  %1371 = vmatpush1.msra.mxu0 0.0
  %1372 = vmatprep.subr.mxu0 0.0
  %1373 = vmatpush1.msra.mxu0 0.0
  %1374 = vmatprep.subr.mxu0 0.0
  %1375 = vmatpush1.msra.mxu0 0.0
  %1376 = vmatprep.subr.mxu0 0.0
  %1377 = vmatpush1.msra.mxu0 0.0
  %1378 = vmatprep.subr.mxu0 0.0
  %1379 = vmatpush1.msra.mxu0 0.0
  %1380 = vmatprep.subr.mxu0 0.0
  %1381 = vmatpush1.msra.mxu0 0.0
  %1382 = vmatprep.subr.mxu0 0.0
  %1383 = vmatpush1.msra.mxu0 0.0
  %1384 = vmatprep.subr.mxu0 0.0
  %1385 = vmatpush1.msra.mxu0 0.0
  %1386 = vmatprep.subr.mxu0 0.0
  %1387 = vmatpush1.msra.mxu0 0.0
  %1388 = vmatprep.subr.mxu0 0.0
  %1389 = vmatpush1.msra.mxu0 0.0
  %1390 = vmatprep.subr.mxu0 0.0
  %1391 = vmatpush1.msra.mxu0 0.0
  %1392 = vmatprep.subr.mxu0 0.0
  %1393 = vmatpush1.msra.mxu0 0.0
  %1394 = vmatprep.subr.mxu0 0.0
  %1395 = vmatpush1.msra.mxu0 0.0
  %1396 = vmatprep.subr.mxu0 0.0
  %1397 = vmatpush1.msra.mxu0 0.0
  %1398 = vmatprep.subr.mxu0 0.0
  %1399 = vmatpush1.msra.mxu0 0.0
  %1400 = vmatprep.subr.mxu0 0.0
  %1401 = vmatpush1.msra.mxu0 0.0
  %1402 = vmatprep.subr.mxu0 0.0
  %1403 = vmatpush1.msra.mxu0 0.0
  %1404 = vmatprep.subr.mxu0 0.0
  %1405 = vmatpush1.msra.mxu0 0.0
  %1406 = vmatprep.subr.mxu0 0.0
  %1407 = vmatpush1.msra.mxu0 0.0
  %1408 = vmatprep.subr.mxu0 0.0
  %1409 = vmatpush1.msra.mxu0 0.0
  %1410 = vmatprep.subr.mxu0 0.0
  %1411 = vmatpush1.msra.mxu0 0.0
  %1412 = vmatprep.subr.mxu0 0.0
  %1413 = vmatpush1.msra.mxu0 0.0
  %1414 = vmatprep.subr.mxu0 0.0
  %1415 = vmatpush1.msra.mxu0 0.0
  %1416 = vmatprep.mubr.f32.mxu0 0.0
  %1417 = vmatmul.mubr.f32.gmra.mrb[0].mxu0 %v1232
  %v1418 = vpop.f32.mrb[0].mxu0
  %v1419 = vadd.f32 %v1319, %v1418
  %v1420 = vpop.f32.mrb[0].mxu0
  %1421 = vmatprep.mubr.f32.mxu0 0.0
  %1422 = vmatmul.mubr.f32.gmra.mrb[0].mxu0 %v1235
  %v1423 = vpop.f32.mrb[0].mxu0
  %v1424 = vadd.f32 %v1324, %v1423
  %v1425 = vpop.f32.mrb[0].mxu0
  %1426 = vmatprep.mubr.f32.mxu0 0.0
  %1427 = vmatmul.mubr.f32.gmra.mrb[0].mxu0 %v1238
  %v1428 = vpop.f32.mrb[0].mxu0
  %v1429 = vadd.f32 %v1329, %v1428
  %v1430 = vpop.f32.mrb[0].mxu0
  %1431 = vmatprep.mubr.f32.mxu0 0.0
  %1432 = vmatmul.mubr.f32.gmra.mrb[0].mxu0 %v1241
  %v1433 = vpop.f32.mrb[0].mxu0
  %v1434 = vadd.f32 %v1334, %v1433
  %v1435 = vpop.f32.mrb[0].mxu0
  %1436 = vmatprep.mubr.f32.mxu0 0.0
  %1437 = vmatmul.mubr.f32.gmra.mrb[0].mxu0 %v1244
  %v1438 = vpop.f32.mrb[0].mxu0
  %v1439 = vadd.f32 %v1339, %v1438
  %v1440 = vpop.f32.mrb[0].mxu0
  %1441 = vmatprep.mubr.f32.mxu0 0.0
  %1442 = vmatmul.mubr.f32.gmra.mrb[0].mxu0 %v1247
  %v1443 = vpop.f32.mrb[0].mxu0
  %v1444 = vadd.f32 %v1344, %v1443
  %v1445 = vpop.f32.mrb[0].mxu0
  %1446 = vmatprep.mubr.f32.mxu0 0.0
  %1447 = vmatmul.mubr.f32.gmra.mrb[0].mxu0 %v1250
  %v1448 = vpop.f32.mrb[0].mxu0
  %v1449 = vadd.f32 %v1349, %v1448
  %v1450 = vpop.f32.mrb[0].mxu0
  %1451 = vdwg.mxu0
  %s1452 = scalar_lea.vmem %s4, 16
  %v1453 = vld [vmem:[%s1452] sm:$0xff]
  %v1455 = vsel %vm966, %v1419, 0
  %v1458 = vsel %vm966, %v1424, 0
  %v1461 = vsel %vm966, %v1429, 0
  %v1464 = vsel %vm966, %v1434, 0
  %v1467 = vsel %vm966, %v1439, 0
  %v1470 = vsel %vm966, %v1444, 0
  %v1473 = vsel %vm966, %v1449, 0
  %1475 = vmatprep.subr.mxu0 0.0
  %1476 = vmatpush1.msra.mxu0 %v1453
  %1477 = vmatprep.subr.mxu0 0.0
  %1478 = vmatpush1.msra.mxu0 0.0
  %1479 = vmatprep.subr.mxu0 0.0
  %1480 = vmatpush1.msra.mxu0 0.0
  %1481 = vmatprep.subr.mxu0 0.0
  %1482 = vmatpush1.msra.mxu0 0.0
  %1483 = vmatprep.subr.mxu0 0.0
  %1484 = vmatpush1.msra.mxu0 0.0
  %1485 = vmatprep.subr.mxu0 0.0
  %1486 = vmatpush1.msra.mxu0 0.0
  %1487 = vmatprep.subr.mxu0 0.0
  %1488 = vmatpush1.msra.mxu0 0.0
  %1489 = vmatprep.subr.mxu0 0.0
  %1490 = vmatpush1.msra.mxu0 0.0
  %1491 = vmatprep.subr.mxu0 0.0
  %1492 = vmatpush1.msra.mxu0 0.0
  %1493 = vmatprep.subr.mxu0 0.0
  %1494 = vmatpush1.msra.mxu0 0.0
  %1495 = vmatprep.subr.mxu0 0.0
  %1496 = vmatpush1.msra.mxu0 0.0
  %1497 = vmatprep.subr.mxu0 0.0
  %1498 = vmatpush1.msra.mxu0 0.0
  %1499 = vmatprep.subr.mxu0 0.0
  %1500 = vmatpush1.msra.mxu0 0.0
  %1501 = vmatprep.subr.mxu0 0.0
  %1502 = vmatpush1.msra.mxu0 0.0
  %1503 = vmatprep.subr.mxu0 0.0
  %1504 = vmatpush1.msra.mxu0 0.0
  %1505 = vmatprep.subr.mxu0 0.0
  %1506 = vmatpush1.msra.mxu0 0.0
  %1507 = vmatprep.subr.mxu0 0.0
  %1508 = vmatpush1.msra.mxu0 0.0
  %1509 = vmatprep.subr.mxu0 0.0
  %1510 = vmatpush1.msra.mxu0 0.0
  %1511 = vmatprep.subr.mxu0 0.0
  %1512 = vmatpush1.msra.mxu0 0.0
  %1513 = vmatprep.subr.mxu0 0.0
  %1514 = vmatpush1.msra.mxu0 0.0
  %1515 = vmatprep.subr.mxu0 0.0
  %1516 = vmatpush1.msra.mxu0 0.0
  %1517 = vmatprep.subr.mxu0 0.0
  %1518 = vmatpush1.msra.mxu0 0.0
  %1519 = vmatprep.subr.mxu0 0.0
  %1520 = vmatpush1.msra.mxu0 0.0
  %1521 = vmatprep.subr.mxu0 0.0
  %1522 = vmatpush1.msra.mxu0 0.0
  %1523 = vmatprep.subr.mxu0 0.0
  %1524 = vmatpush1.msra.mxu0 0.0
  %1525 = vmatprep.subr.mxu0 0.0
  %1526 = vmatpush1.msra.mxu0 0.0
  %1527 = vmatprep.subr.mxu0 0.0
  %1528 = vmatpush1.msra.mxu0 0.0
  %1529 = vmatprep.subr.mxu0 0.0
  %1530 = vmatpush1.msra.mxu0 0.0
  %1531 = vmatprep.subr.mxu0 0.0
  %1532 = vmatpush1.msra.mxu0 0.0
  %1533 = vmatprep.subr.mxu0 0.0
  %1534 = vmatpush1.msra.mxu0 0.0
  %1535 = vmatprep.subr.mxu0 0.0
  %1536 = vmatpush1.msra.mxu0 0.0
  %1537 = vmatprep.subr.mxu0 0.0
  %1538 = vmatpush1.msra.mxu0 0.0
  %1539 = vmatprep.mubr.f32.mxu0 0.0
  %1540 = vmatmul.mubr.f32.gmra.mrb[0].mxu0 %v1455
  %v1541 = vpop.f32.mrb[0].mxu0
  %v1542 = vadd.f32 0.0, %v1541
  %v1543 = vpop.f32.mrb[0].mxu0
  %1544 = vmatprep.mubr.f32.mxu0 0.0
  %1545 = vmatmul.mubr.f32.gmra.mrb[0].mxu0 %v1458
  %v1546 = vpop.f32.mrb[0].mxu0
  %v1547 = vadd.f32 0.0, %v1546
  %v1548 = vpop.f32.mrb[0].mxu0
  %1549 = vmatprep.mubr.f32.mxu0 0.0
  %1550 = vmatmul.mubr.f32.gmra.mrb[0].mxu0 %v1461
  %v1551 = vpop.f32.mrb[0].mxu0
  %v1552 = vadd.f32 0.0, %v1551
  %v1553 = vpop.f32.mrb[0].mxu0
  %1554 = vmatprep.mubr.f32.mxu0 0.0
  %1555 = vmatmul.mubr.f32.gmra.mrb[0].mxu0 %v1464
  %v1556 = vpop.f32.mrb[0].mxu0
  %v1557 = vadd.f32 0.0, %v1556
  %v1558 = vpop.f32.mrb[0].mxu0
  %1559 = vmatprep.mubr.f32.mxu0 0.0
  %1560 = vmatmul.mubr.f32.gmra.mrb[0].mxu0 %v1467
  %v1561 = vpop.f32.mrb[0].mxu0
  %v1562 = vadd.f32 0.0, %v1561
  %v1563 = vpop.f32.mrb[0].mxu0
  %1564 = vmatprep.mubr.f32.mxu0 0.0
  %1565 = vmatmul.mubr.f32.gmra.mrb[0].mxu0 %v1470
  %v1566 = vpop.f32.mrb[0].mxu0
  %v1567 = vadd.f32 0.0, %v1566
  %v1568 = vpop.f32.mrb[0].mxu0
  %1569 = vmatprep.mubr.f32.mxu0 0.0
  %1570 = vmatmul.mubr.f32.gmra.mrb[0].mxu0 %v1473
  %v1571 = vpop.f32.mrb[0].mxu0
  %v1572 = vadd.f32 0.0, %v1571
  %v1573 = vpop.f32.mrb[0].mxu0
  %1574 = vdwg.mxu0
  %v1575 = vadd.f32 %v1176, %v1542
  %v1576 = vadd.f32 %v1181, %v1547
  %v1577 = vadd.f32 %v1186, %v1552
  %v1578 = vadd.f32 %v1191, %v1557
  %v1579 = vadd.f32 %v1196, %v1562
  %v1580 = vadd.f32 %v1201, %v1567
  %v1581 = vadd.f32 %v1206, %v1572
  %s1582 = scalar_lea.vmem %s3, 504
  %v1583 = vld [vmem:[%s1582] sm:$0xff]
  %v1584 = vld [vmem:[%s1582 + $0x8] sm:$0xff]
  %v1585 = vld [vmem:[%s1582 + $0x10] sm:$0xff]
  %v1586 = vld [vmem:[%s1582 + $0x18] sm:$0xff]
  %v1587 = vld [vmem:[%s1582 + $0x20] sm:$0xff]
  %v1588 = vld [vmem:[%s1582 + $0x28] sm:$0xff]
  %v1589 = vld [vmem:[%s1582 + $0x30] sm:$0xff]
  %v1590 = vld [vmem:[%s1582 + $0x38] sm:$0xff]
  %v1591 = vld [vmem:[%s1582 + $0x40] sm:$0xff]
  %v1592 = vld [vmem:[%s1582 + $0x48] sm:$0xff]
  %v1593 = vld [vmem:[%s1582 + $0x50] sm:$0xff]
  %v1594 = vld [vmem:[%s1582 + $0x58] sm:$0xff]
  %v1595 = vld [vmem:[%s1582 + $0x60] sm:$0xff]
  %v1596 = vld [vmem:[%s1582 + $0x68] sm:$0xff]
  %v1597 = vld [vmem:[%s1582 + $0x70] sm:$0xff]
  %v1598 = vld [vmem:[%s1582 + $0x78] sm:$0xff]
  %v1599 = vld [vmem:[%s1582 + $0x80] sm:$0xff]
  %v1600 = vld [vmem:[%s1582 + $0x88] sm:$0xff]
  %v1601 = vld [vmem:[%s1582 + $0x90] sm:$0xff]
  %v1602 = vld [vmem:[%s1582 + $0x98] sm:$0xff]
  %v1603 = vld [vmem:[%s1582 + $0xa0] sm:$0xff]
  %v1605 = vsel %vm88, %v1585, 0
  %v1608 = vsel %vm88, %v1588, 0
  %v1611 = vsel %vm88, %v1591, 0
  %v1614 = vsel %vm88, %v1594, 0
  %v1617 = vsel %vm88, %v1597, 0
  %v1620 = vsel %vm88, %v1600, 0
  %v1623 = vsel %vm88, %v1603, 0
  %1625 = vmatprep.subr.mxu0 0.0
  %1626 = vmatpush1.msra.mxu0 %v442
  %1627 = vmatprep.subr.mxu0 0.0
  %1628 = vmatpush1.msra.mxu0 %v443
  %1629 = vmatprep.subr.mxu0 0.0
  %1630 = vmatpush1.msra.mxu0 %v444
  %1631 = vmatprep.subr.mxu0 0.0
  %1632 = vmatpush1.msra.mxu0 %v445
  %1633 = vmatprep.subr.mxu0 0.0
  %1634 = vmatpush1.msra.mxu0 %v446
  %1635 = vmatprep.subr.mxu0 0.0
  %1636 = vmatpush1.msra.mxu0 %v447
  %1637 = vmatprep.subr.mxu0 0.0
  %1638 = vmatpush1.msra.mxu0 %v448
  %1639 = vmatprep.subr.mxu0 0.0
  %1640 = vmatpush1.msra.mxu0 %v449
  %1641 = vmatprep.subr.mxu0 0.0
  %1642 = vmatpush1.msra.mxu0 %v450
  %1643 = vmatprep.subr.mxu0 0.0
  %1644 = vmatpush1.msra.mxu0 %v451
  %1645 = vmatprep.subr.mxu0 0.0
  %1646 = vmatpush1.msra.mxu0 %v452
  %1647 = vmatprep.subr.mxu0 0.0
  %1648 = vmatpush1.msra.mxu0 %v453
  %1649 = vmatprep.subr.mxu0 0.0
  %1650 = vmatpush1.msra.mxu0 %v454
  %1651 = vmatprep.subr.mxu0 0.0
  %1652 = vmatpush1.msra.mxu0 %v455
  %1653 = vmatprep.subr.mxu0 0.0
  %1654 = vmatpush1.msra.mxu0 %v456
  %1655 = vmatprep.subr.mxu0 0.0
  %1656 = vmatpush1.msra.mxu0 %v457
  %1657 = vmatprep.subr.mxu0 0.0
  %1658 = vmatpush1.msra.mxu0 %v458
  %1659 = vmatprep.subr.mxu0 0.0
  %1660 = vmatpush1.msra.mxu0 %v459
  %1661 = vmatprep.subr.mxu0 0.0
  %1662 = vmatpush1.msra.mxu0 %v460
  %1663 = vmatprep.subr.mxu0 0.0
  %1664 = vmatpush1.msra.mxu0 %v461
  %1665 = vmatprep.subr.mxu0 0.0
  %1666 = vmatpush1.msra.mxu0 %v462
  %1667 = vmatprep.subr.mxu0 0.0
  %1668 = vmatpush1.msra.mxu0 %v463
  %1669 = vmatprep.subr.mxu0 0.0
  %1670 = vmatpush1.msra.mxu0 %v464
  %1671 = vmatprep.subr.mxu0 0.0
  %1672 = vmatpush1.msra.mxu0 %v465
  %1673 = vmatprep.subr.mxu0 0.0
  %1674 = vmatpush1.msra.mxu0 %v466
  %1675 = vmatprep.subr.mxu0 0.0
  %1676 = vmatpush1.msra.mxu0 %v467
  %1677 = vmatprep.subr.mxu0 0.0
  %1678 = vmatpush1.msra.mxu0 %v468
  %1679 = vmatprep.subr.mxu0 0.0
  %1680 = vmatpush1.msra.mxu0 %v469
  %1681 = vmatprep.subr.mxu0 0.0
  %1682 = vmatpush1.msra.mxu0 %v470
  %1683 = vmatprep.subr.mxu0 0.0
  %1684 = vmatpush1.msra.mxu0 %v471
  %1685 = vmatprep.subr.mxu0 0.0
  %1686 = vmatpush1.msra.mxu0 %v472
  %1687 = vmatprep.subr.mxu0 0.0
  %1688 = vmatpush1.msra.mxu0 %v473
  %1689 = vmatprep.mubr.f32.mxu0 %v1584
  %1690 = vmatmul.mubr.f32.gmra.mrb[0].mxu0 %v1583
  %v1691 = vpop.f32.mrb[0].mxu0
  %v1692 = vadd.f32 0.0, %v1691
  %v1693 = vpop.f32.mrb[0].mxu0
  %1694 = vmatprep.mubr.f32.mxu0 %v1587
  %1695 = vmatmul.mubr.f32.gmra.mrb[0].mxu0 %v1586
  %v1696 = vpop.f32.mrb[0].mxu0
  %v1697 = vadd.f32 0.0, %v1696
  %v1698 = vpop.f32.mrb[0].mxu0
  %1699 = vmatprep.mubr.f32.mxu0 %v1590
  %1700 = vmatmul.mubr.f32.gmra.mrb[0].mxu0 %v1589
  %v1701 = vpop.f32.mrb[0].mxu0
  %v1702 = vadd.f32 0.0, %v1701
  %v1703 = vpop.f32.mrb[0].mxu0
  %1704 = vmatprep.mubr.f32.mxu0 %v1593
  %1705 = vmatmul.mubr.f32.gmra.mrb[0].mxu0 %v1592
  %v1706 = vpop.f32.mrb[0].mxu0
  %v1707 = vadd.f32 0.0, %v1706
  %v1708 = vpop.f32.mrb[0].mxu0
  %1709 = vmatprep.mubr.f32.mxu0 %v1596
  %1710 = vmatmul.mubr.f32.gmra.mrb[0].mxu0 %v1595
  %v1711 = vpop.f32.mrb[0].mxu0
  %v1712 = vadd.f32 0.0, %v1711
  %v1713 = vpop.f32.mrb[0].mxu0
  %1714 = vmatprep.mubr.f32.mxu0 %v1599
  %1715 = vmatmul.mubr.f32.gmra.mrb[0].mxu0 %v1598
  %v1716 = vpop.f32.mrb[0].mxu0
  %v1717 = vadd.f32 0.0, %v1716
  %v1718 = vpop.f32.mrb[0].mxu0
  %1719 = vmatprep.mubr.f32.mxu0 %v1602
  %1720 = vmatmul.mubr.f32.gmra.mrb[0].mxu0 %v1601
  %v1721 = vpop.f32.mrb[0].mxu0
  %v1722 = vadd.f32 0.0, %v1721
  %v1723 = vpop.f32.mrb[0].mxu0
  %1724 = vdwg.mxu0
  %1725 = vmatprep.subr.mxu0 0.0
  %1726 = vmatpush1.msra.mxu0 %v474
  %1727 = vmatprep.subr.mxu0 0.0
  %1728 = vmatpush1.msra.mxu0 %v475
  %1729 = vmatprep.subr.mxu0 0.0
  %1730 = vmatpush1.msra.mxu0 %v476
  %1731 = vmatprep.subr.mxu0 0.0
  %1732 = vmatpush1.msra.mxu0 %v477
  %1733 = vmatprep.subr.mxu0 0.0
  %1734 = vmatpush1.msra.mxu0 0.0
  %1735 = vmatprep.subr.mxu0 0.0
  %1736 = vmatpush1.msra.mxu0 0.0
  %1737 = vmatprep.subr.mxu0 0.0
  %1738 = vmatpush1.msra.mxu0 0.0
  %1739 = vmatprep.subr.mxu0 0.0
  %1740 = vmatpush1.msra.mxu0 0.0
  %1741 = vmatprep.subr.mxu0 0.0
  %1742 = vmatpush1.msra.mxu0 0.0
  %1743 = vmatprep.subr.mxu0 0.0
  %1744 = vmatpush1.msra.mxu0 0.0
  %1745 = vmatprep.subr.mxu0 0.0
  %1746 = vmatpush1.msra.mxu0 0.0
  %1747 = vmatprep.subr.mxu0 0.0
  %1748 = vmatpush1.msra.mxu0 0.0
  %1749 = vmatprep.subr.mxu0 0.0
  %1750 = vmatpush1.msra.mxu0 0.0
  %1751 = vmatprep.subr.mxu0 0.0
  %1752 = vmatpush1.msra.mxu0 0.0
  %1753 = vmatprep.subr.mxu0 0.0
  %1754 = vmatpush1.msra.mxu0 0.0
  %1755 = vmatprep.subr.mxu0 0.0
  %1756 = vmatpush1.msra.mxu0 0.0
  %1757 = vmatprep.subr.mxu0 0.0
  %1758 = vmatpush1.msra.mxu0 0.0
  %1759 = vmatprep.subr.mxu0 0.0
  %1760 = vmatpush1.msra.mxu0 0.0
  %1761 = vmatprep.subr.mxu0 0.0
  %1762 = vmatpush1.msra.mxu0 0.0
  %1763 = vmatprep.subr.mxu0 0.0
  %1764 = vmatpush1.msra.mxu0 0.0
  %1765 = vmatprep.subr.mxu0 0.0
  %1766 = vmatpush1.msra.mxu0 0.0
  %1767 = vmatprep.subr.mxu0 0.0
  %1768 = vmatpush1.msra.mxu0 0.0
  %1769 = vmatprep.subr.mxu0 0.0
  %1770 = vmatpush1.msra.mxu0 0.0
  %1771 = vmatprep.subr.mxu0 0.0
  %1772 = vmatpush1.msra.mxu0 0.0
  %1773 = vmatprep.subr.mxu0 0.0
  %1774 = vmatpush1.msra.mxu0 0.0
  %1775 = vmatprep.subr.mxu0 0.0
  %1776 = vmatpush1.msra.mxu0 0.0
  %1777 = vmatprep.subr.mxu0 0.0
  %1778 = vmatpush1.msra.mxu0 0.0
  %1779 = vmatprep.subr.mxu0 0.0
  %1780 = vmatpush1.msra.mxu0 0.0
  %1781 = vmatprep.subr.mxu0 0.0
  %1782 = vmatpush1.msra.mxu0 0.0
  %1783 = vmatprep.subr.mxu0 0.0
  %1784 = vmatpush1.msra.mxu0 0.0
  %1785 = vmatprep.subr.mxu0 0.0
  %1786 = vmatpush1.msra.mxu0 0.0
  %1787 = vmatprep.subr.mxu0 0.0
  %1788 = vmatpush1.msra.mxu0 0.0
  %1789 = vmatprep.mubr.f32.mxu0 0.0
  %1790 = vmatmul.mubr.f32.gmra.mrb[0].mxu0 %v1605
  %v1791 = vpop.f32.mrb[0].mxu0
  %v1792 = vadd.f32 %v1692, %v1791
  %v1793 = vpop.f32.mrb[0].mxu0
  %1794 = vmatprep.mubr.f32.mxu0 0.0
  %1795 = vmatmul.mubr.f32.gmra.mrb[0].mxu0 %v1608
  %v1796 = vpop.f32.mrb[0].mxu0
  %v1797 = vadd.f32 %v1697, %v1796
  %v1798 = vpop.f32.mrb[0].mxu0
  %1799 = vmatprep.mubr.f32.mxu0 0.0
  %1800 = vmatmul.mubr.f32.gmra.mrb[0].mxu0 %v1611
  %v1801 = vpop.f32.mrb[0].mxu0
  %v1802 = vadd.f32 %v1702, %v1801
  %v1803 = vpop.f32.mrb[0].mxu0
  %1804 = vmatprep.mubr.f32.mxu0 0.0
  %1805 = vmatmul.mubr.f32.gmra.mrb[0].mxu0 %v1614
  %v1806 = vpop.f32.mrb[0].mxu0
  %v1807 = vadd.f32 %v1707, %v1806
  %v1808 = vpop.f32.mrb[0].mxu0
  %1809 = vmatprep.mubr.f32.mxu0 0.0
  %1810 = vmatmul.mubr.f32.gmra.mrb[0].mxu0 %v1617
  %v1811 = vpop.f32.mrb[0].mxu0
  %v1812 = vadd.f32 %v1712, %v1811
  %v1813 = vpop.f32.mrb[0].mxu0
  %1814 = vmatprep.mubr.f32.mxu0 0.0
  %1815 = vmatmul.mubr.f32.gmra.mrb[0].mxu0 %v1620
  %v1816 = vpop.f32.mrb[0].mxu0
  %v1817 = vadd.f32 %v1717, %v1816
  %v1818 = vpop.f32.mrb[0].mxu0
  %1819 = vmatprep.mubr.f32.mxu0 0.0
  %1820 = vmatmul.mubr.f32.gmra.mrb[0].mxu0 %v1623
  %v1821 = vpop.f32.mrb[0].mxu0
  %v1822 = vadd.f32 %v1722, %v1821
  %v1823 = vpop.f32.mrb[0].mxu0
  %1824 = vdwg.mxu0
  %s1825 = scalar_lea.vmem %s4, 24
  %v1826 = vld [vmem:[%s1825] sm:$0xff]
  %v1828 = vsel %vm966, %v1792, 0
  %v1831 = vsel %vm966, %v1797, 0
  %v1834 = vsel %vm966, %v1802, 0
  %v1837 = vsel %vm966, %v1807, 0
  %v1840 = vsel %vm966, %v1812, 0
  %v1843 = vsel %vm966, %v1817, 0
  %v1846 = vsel %vm966, %v1822, 0
  %1848 = vmatprep.subr.mxu0 0.0
  %1849 = vmatpush1.msra.mxu0 %v1826
  %1850 = vmatprep.subr.mxu0 0.0
  %1851 = vmatpush1.msra.mxu0 0.0
  %1852 = vmatprep.subr.mxu0 0.0
  %1853 = vmatpush1.msra.mxu0 0.0
  %1854 = vmatprep.subr.mxu0 0.0
  %1855 = vmatpush1.msra.mxu0 0.0
  %1856 = vmatprep.subr.mxu0 0.0
  %1857 = vmatpush1.msra.mxu0 0.0
  %1858 = vmatprep.subr.mxu0 0.0
  %1859 = vmatpush1.msra.mxu0 0.0
  %1860 = vmatprep.subr.mxu0 0.0
  %1861 = vmatpush1.msra.mxu0 0.0
  %1862 = vmatprep.subr.mxu0 0.0
  %1863 = vmatpush1.msra.mxu0 0.0
  %1864 = vmatprep.subr.mxu0 0.0
  %1865 = vmatpush1.msra.mxu0 0.0
  %1866 = vmatprep.subr.mxu0 0.0
  %1867 = vmatpush1.msra.mxu0 0.0
  %1868 = vmatprep.subr.mxu0 0.0
  %1869 = vmatpush1.msra.mxu0 0.0
  %1870 = vmatprep.subr.mxu0 0.0
  %1871 = vmatpush1.msra.mxu0 0.0
  %1872 = vmatprep.subr.mxu0 0.0
  %1873 = vmatpush1.msra.mxu0 0.0
  %1874 = vmatprep.subr.mxu0 0.0
  %1875 = vmatpush1.msra.mxu0 0.0
  %1876 = vmatprep.subr.mxu0 0.0
  %1877 = vmatpush1.msra.mxu0 0.0
  %1878 = vmatprep.subr.mxu0 0.0
  %1879 = vmatpush1.msra.mxu0 0.0
  %1880 = vmatprep.subr.mxu0 0.0
  %1881 = vmatpush1.msra.mxu0 0.0
  %1882 = vmatprep.subr.mxu0 0.0
  %1883 = vmatpush1.msra.mxu0 0.0
  %1884 = vmatprep.subr.mxu0 0.0
  %1885 = vmatpush1.msra.mxu0 0.0
  %1886 = vmatprep.subr.mxu0 0.0
  %1887 = vmatpush1.msra.mxu0 0.0
  %1888 = vmatprep.subr.mxu0 0.0
  %1889 = vmatpush1.msra.mxu0 0.0
  %1890 = vmatprep.subr.mxu0 0.0
  %1891 = vmatpush1.msra.mxu0 0.0
  %1892 = vmatprep.subr.mxu0 0.0
  %1893 = vmatpush1.msra.mxu0 0.0
  %1894 = vmatprep.subr.mxu0 0.0
  %1895 = vmatpush1.msra.mxu0 0.0
  %1896 = vmatprep.subr.mxu0 0.0
  %1897 = vmatpush1.msra.mxu0 0.0
  %1898 = vmatprep.subr.mxu0 0.0
  %1899 = vmatpush1.msra.mxu0 0.0
  %1900 = vmatprep.subr.mxu0 0.0
  %1901 = vmatpush1.msra.mxu0 0.0
  %1902 = vmatprep.subr.mxu0 0.0
  %1903 = vmatpush1.msra.mxu0 0.0
  %1904 = vmatprep.subr.mxu0 0.0
  %1905 = vmatpush1.msra.mxu0 0.0
  %1906 = vmatprep.subr.mxu0 0.0
  %1907 = vmatpush1.msra.mxu0 0.0
  %1908 = vmatprep.subr.mxu0 0.0
  %1909 = vmatpush1.msra.mxu0 0.0
  %1910 = vmatprep.subr.mxu0 0.0
  %1911 = vmatpush1.msra.mxu0 0.0
  %1912 = vmatprep.mubr.f32.mxu0 0.0
  %1913 = vmatmul.mubr.f32.gmra.mrb[0].mxu0 %v1828
  %v1914 = vpop.f32.mrb[0].mxu0
  %v1915 = vadd.f32 0.0, %v1914
  %v1916 = vpop.f32.mrb[0].mxu0
  %1917 = vmatprep.mubr.f32.mxu0 0.0
  %1918 = vmatmul.mubr.f32.gmra.mrb[0].mxu0 %v1831
  %v1919 = vpop.f32.mrb[0].mxu0
  %v1920 = vadd.f32 0.0, %v1919
  %v1921 = vpop.f32.mrb[0].mxu0
  %1922 = vmatprep.mubr.f32.mxu0 0.0
  %1923 = vmatmul.mubr.f32.gmra.mrb[0].mxu0 %v1834
  %v1924 = vpop.f32.mrb[0].mxu0
  %v1925 = vadd.f32 0.0, %v1924
  %v1926 = vpop.f32.mrb[0].mxu0
  %1927 = vmatprep.mubr.f32.mxu0 0.0
  %1928 = vmatmul.mubr.f32.gmra.mrb[0].mxu0 %v1837
  %v1929 = vpop.f32.mrb[0].mxu0
  %v1930 = vadd.f32 0.0, %v1929
  %v1931 = vpop.f32.mrb[0].mxu0
  %1932 = vmatprep.mubr.f32.mxu0 0.0
  %1933 = vmatmul.mubr.f32.gmra.mrb[0].mxu0 %v1840
  %v1934 = vpop.f32.mrb[0].mxu0
  %v1935 = vadd.f32 0.0, %v1934
  %v1936 = vpop.f32.mrb[0].mxu0
  %1937 = vmatprep.mubr.f32.mxu0 0.0
  %1938 = vmatmul.mubr.f32.gmra.mrb[0].mxu0 %v1843
  %v1939 = vpop.f32.mrb[0].mxu0
  %v1940 = vadd.f32 0.0, %v1939
  %v1941 = vpop.f32.mrb[0].mxu0
  %1942 = vmatprep.mubr.f32.mxu0 0.0
  %1943 = vmatmul.mubr.f32.gmra.mrb[0].mxu0 %v1846
  %v1944 = vpop.f32.mrb[0].mxu0
  %v1945 = vadd.f32 0.0, %v1944
  %v1946 = vpop.f32.mrb[0].mxu0
  %1947 = vdwg.mxu0
  %v1948 = vadd.f32 %v1575, %v1915
  %v1949 = vadd.f32 %v1576, %v1920
  %v1950 = vadd.f32 %v1577, %v1925
  %v1951 = vadd.f32 %v1578, %v1930
  %v1952 = vadd.f32 %v1579, %v1935
  %v1953 = vadd.f32 %v1580, %v1940
  %v1954 = vadd.f32 %v1581, %v1945
  %s1955 = scalar_lea.vmem %s3, 672
  %v1956 = vld [vmem:[%s1955] sm:$0xff]
  %v1957 = vld [vmem:[%s1955 + $0x8] sm:$0xff]
  %v1958 = vld [vmem:[%s1955 + $0x10] sm:$0xff]
  %v1959 = vld [vmem:[%s1955 + $0x18] sm:$0xff]
  %v1960 = vld [vmem:[%s1955 + $0x20] sm:$0xff]
  %v1961 = vld [vmem:[%s1955 + $0x28] sm:$0xff]
  %v1962 = vld [vmem:[%s1955 + $0x30] sm:$0xff]
  %v1963 = vld [vmem:[%s1955 + $0x38] sm:$0xff]
  %v1964 = vld [vmem:[%s1955 + $0x40] sm:$0xff]
  %v1965 = vld [vmem:[%s1955 + $0x48] sm:$0xff]
  %v1966 = vld [vmem:[%s1955 + $0x50] sm:$0xff]
  %v1967 = vld [vmem:[%s1955 + $0x58] sm:$0xff]
  %v1968 = vld [vmem:[%s1955 + $0x60] sm:$0xff]
  %v1969 = vld [vmem:[%s1955 + $0x68] sm:$0xff]
  %v1970 = vld [vmem:[%s1955 + $0x70] sm:$0xff]
  %v1971 = vld [vmem:[%s1955 + $0x78] sm:$0xff]
  %v1972 = vld [vmem:[%s1955 + $0x80] sm:$0xff]
  %v1973 = vld [vmem:[%s1955 + $0x88] sm:$0xff]
  %v1974 = vld [vmem:[%s1955 + $0x90] sm:$0xff]
  %v1975 = vld [vmem:[%s1955 + $0x98] sm:$0xff]
  %v1976 = vld [vmem:[%s1955 + $0xa0] sm:$0xff]
  %v1978 = vsel %vm88, %v1958, 0
  %v1981 = vsel %vm88, %v1961, 0
  %v1984 = vsel %vm88, %v1964, 0
  %v1987 = vsel %vm88, %v1967, 0
  %v1990 = vsel %vm88, %v1970, 0
  %v1993 = vsel %vm88, %v1973, 0
  %v1996 = vsel %vm88, %v1976, 0
  %1998 = vmatprep.subr.mxu0 0.0
  %1999 = vmatpush1.msra.mxu0 %v442
  %2000 = vmatprep.subr.mxu0 0.0
  %2001 = vmatpush1.msra.mxu0 %v443
  %2002 = vmatprep.subr.mxu0 0.0
  %2003 = vmatpush1.msra.mxu0 %v444
  %2004 = vmatprep.subr.mxu0 0.0
  %2005 = vmatpush1.msra.mxu0 %v445
  %2006 = vmatprep.subr.mxu0 0.0
  %2007 = vmatpush1.msra.mxu0 %v446
  %2008 = vmatprep.subr.mxu0 0.0
  %2009 = vmatpush1.msra.mxu0 %v447
  %2010 = vmatprep.subr.mxu0 0.0
  %2011 = vmatpush1.msra.mxu0 %v448
  %2012 = vmatprep.subr.mxu0 0.0
  %2013 = vmatpush1.msra.mxu0 %v449
  %2014 = vmatprep.subr.mxu0 0.0
  %2015 = vmatpush1.msra.mxu0 %v450
  %2016 = vmatprep.subr.mxu0 0.0
  %2017 = vmatpush1.msra.mxu0 %v451
  %2018 = vmatprep.subr.mxu0 0.0
  %2019 = vmatpush1.msra.mxu0 %v452
  %2020 = vmatprep.subr.mxu0 0.0
  %2021 = vmatpush1.msra.mxu0 %v453
  %2022 = vmatprep.subr.mxu0 0.0
  %2023 = vmatpush1.msra.mxu0 %v454
  %2024 = vmatprep.subr.mxu0 0.0
  %2025 = vmatpush1.msra.mxu0 %v455
  %2026 = vmatprep.subr.mxu0 0.0
  %2027 = vmatpush1.msra.mxu0 %v456
  %2028 = vmatprep.subr.mxu0 0.0
  %2029 = vmatpush1.msra.mxu0 %v457
  %2030 = vmatprep.subr.mxu0 0.0
  %2031 = vmatpush1.msra.mxu0 %v458
  %2032 = vmatprep.subr.mxu0 0.0
  %2033 = vmatpush1.msra.mxu0 %v459
  %2034 = vmatprep.subr.mxu0 0.0
  %2035 = vmatpush1.msra.mxu0 %v460
  %2036 = vmatprep.subr.mxu0 0.0
  %2037 = vmatpush1.msra.mxu0 %v461
  %2038 = vmatprep.subr.mxu0 0.0
  %2039 = vmatpush1.msra.mxu0 %v462
  %2040 = vmatprep.subr.mxu0 0.0
  %2041 = vmatpush1.msra.mxu0 %v463
  %2042 = vmatprep.subr.mxu0 0.0
  %2043 = vmatpush1.msra.mxu0 %v464
  %2044 = vmatprep.subr.mxu0 0.0
  %2045 = vmatpush1.msra.mxu0 %v465
  %2046 = vmatprep.subr.mxu0 0.0
  %2047 = vmatpush1.msra.mxu0 %v466
  %2048 = vmatprep.subr.mxu0 0.0
  %2049 = vmatpush1.msra.mxu0 %v467
  %2050 = vmatprep.subr.mxu0 0.0
  %2051 = vmatpush1.msra.mxu0 %v468
  %2052 = vmatprep.subr.mxu0 0.0
  %2053 = vmatpush1.msra.mxu0 %v469
  %2054 = vmatprep.subr.mxu0 0.0
  %2055 = vmatpush1.msra.mxu0 %v470
  %2056 = vmatprep.subr.mxu0 0.0
  %2057 = vmatpush1.msra.mxu0 %v471
  %2058 = vmatprep.subr.mxu0 0.0
  %2059 = vmatpush1.msra.mxu0 %v472
  %2060 = vmatprep.subr.mxu0 0.0
  %2061 = vmatpush1.msra.mxu0 %v473
  %2062 = vmatprep.mubr.f32.mxu0 %v1957
  %2063 = vmatmul.mubr.f32.gmra.mrb[0].mxu0 %v1956
  %v2064 = vpop.f32.mrb[0].mxu0
  %v2065 = vadd.f32 0.0, %v2064
  %v2066 = vpop.f32.mrb[0].mxu0
  %2067 = vmatprep.mubr.f32.mxu0 %v1960
  %2068 = vmatmul.mubr.f32.gmra.mrb[0].mxu0 %v1959
  %v2069 = vpop.f32.mrb[0].mxu0
  %v2070 = vadd.f32 0.0, %v2069
  %v2071 = vpop.f32.mrb[0].mxu0
  %2072 = vmatprep.mubr.f32.mxu0 %v1963
  %2073 = vmatmul.mubr.f32.gmra.mrb[0].mxu0 %v1962
  %v2074 = vpop.f32.mrb[0].mxu0
  %v2075 = vadd.f32 0.0, %v2074
  %v2076 = vpop.f32.mrb[0].mxu0
  %2077 = vmatprep.mubr.f32.mxu0 %v1966
  %2078 = vmatmul.mubr.f32.gmra.mrb[0].mxu0 %v1965
  %v2079 = vpop.f32.mrb[0].mxu0
  %v2080 = vadd.f32 0.0, %v2079
  %v2081 = vpop.f32.mrb[0].mxu0
  %2082 = vmatprep.mubr.f32.mxu0 %v1969
  %2083 = vmatmul.mubr.f32.gmra.mrb[0].mxu0 %v1968
  %v2084 = vpop.f32.mrb[0].mxu0
  %v2085 = vadd.f32 0.0, %v2084
  %v2086 = vpop.f32.mrb[0].mxu0
  %2087 = vmatprep.mubr.f32.mxu0 %v1972
  %2088 = vmatmul.mubr.f32.gmra.mrb[0].mxu0 %v1971
  %v2089 = vpop.f32.mrb[0].mxu0
  %v2090 = vadd.f32 0.0, %v2089
  %v2091 = vpop.f32.mrb[0].mxu0
  %2092 = vmatprep.mubr.f32.mxu0 %v1975
  %2093 = vmatmul.mubr.f32.gmra.mrb[0].mxu0 %v1974
  %v2094 = vpop.f32.mrb[0].mxu0
  %v2095 = vadd.f32 0.0, %v2094
  %v2096 = vpop.f32.mrb[0].mxu0
  %2097 = vdwg.mxu0
  %2098 = vmatprep.subr.mxu0 0.0
  %2099 = vmatpush1.msra.mxu0 %v474
  %2100 = vmatprep.subr.mxu0 0.0
  %2101 = vmatpush1.msra.mxu0 %v475
  %2102 = vmatprep.subr.mxu0 0.0
  %2103 = vmatpush1.msra.mxu0 %v476
  %2104 = vmatprep.subr.mxu0 0.0
  %2105 = vmatpush1.msra.mxu0 %v477
  %2106 = vmatprep.subr.mxu0 0.0
  %2107 = vmatpush1.msra.mxu0 0.0
  %2108 = vmatprep.subr.mxu0 0.0
  %2109 = vmatpush1.msra.mxu0 0.0
  %2110 = vmatprep.subr.mxu0 0.0
  %2111 = vmatpush1.msra.mxu0 0.0
  %2112 = vmatprep.subr.mxu0 0.0
  %2113 = vmatpush1.msra.mxu0 0.0
  %2114 = vmatprep.subr.mxu0 0.0
  %2115 = vmatpush1.msra.mxu0 0.0
  %2116 = vmatprep.subr.mxu0 0.0
  %2117 = vmatpush1.msra.mxu0 0.0
  %2118 = vmatprep.subr.mxu0 0.0
  %2119 = vmatpush1.msra.mxu0 0.0
  %2120 = vmatprep.subr.mxu0 0.0
  %2121 = vmatpush1.msra.mxu0 0.0
  %2122 = vmatprep.subr.mxu0 0.0
  %2123 = vmatpush1.msra.mxu0 0.0
  %2124 = vmatprep.subr.mxu0 0.0
  %2125 = vmatpush1.msra.mxu0 0.0
  %2126 = vmatprep.subr.mxu0 0.0
  %2127 = vmatpush1.msra.mxu0 0.0
  %2128 = vmatprep.subr.mxu0 0.0
  %2129 = vmatpush1.msra.mxu0 0.0
  %2130 = vmatprep.subr.mxu0 0.0
  %2131 = vmatpush1.msra.mxu0 0.0
  %2132 = vmatprep.subr.mxu0 0.0
  %2133 = vmatpush1.msra.mxu0 0.0
  %2134 = vmatprep.subr.mxu0 0.0
  %2135 = vmatpush1.msra.mxu0 0.0
  %2136 = vmatprep.subr.mxu0 0.0
  %2137 = vmatpush1.msra.mxu0 0.0
  %2138 = vmatprep.subr.mxu0 0.0
  %2139 = vmatpush1.msra.mxu0 0.0
  %2140 = vmatprep.subr.mxu0 0.0
  %2141 = vmatpush1.msra.mxu0 0.0
  %2142 = vmatprep.subr.mxu0 0.0
  %2143 = vmatpush1.msra.mxu0 0.0
  %2144 = vmatprep.subr.mxu0 0.0
  %2145 = vmatpush1.msra.mxu0 0.0
  %2146 = vmatprep.subr.mxu0 0.0
  %2147 = vmatpush1.msra.mxu0 0.0
  %2148 = vmatprep.subr.mxu0 0.0
  %2149 = vmatpush1.msra.mxu0 0.0
  %2150 = vmatprep.subr.mxu0 0.0
  %2151 = vmatpush1.msra.mxu0 0.0
  %2152 = vmatprep.subr.mxu0 0.0
  %2153 = vmatpush1.msra.mxu0 0.0
  %2154 = vmatprep.subr.mxu0 0.0
  %2155 = vmatpush1.msra.mxu0 0.0
  %2156 = vmatprep.subr.mxu0 0.0
  %2157 = vmatpush1.msra.mxu0 0.0
  %2158 = vmatprep.subr.mxu0 0.0
  %2159 = vmatpush1.msra.mxu0 0.0
  %2160 = vmatprep.subr.mxu0 0.0
  %2161 = vmatpush1.msra.mxu0 0.0
  %2162 = vmatprep.mubr.f32.mxu0 0.0
  %2163 = vmatmul.mubr.f32.gmra.mrb[0].mxu0 %v1978
  %v2164 = vpop.f32.mrb[0].mxu0
  %v2165 = vadd.f32 %v2065, %v2164
  %v2166 = vpop.f32.mrb[0].mxu0
  %2167 = vmatprep.mubr.f32.mxu0 0.0
  %2168 = vmatmul.mubr.f32.gmra.mrb[0].mxu0 %v1981
  %v2169 = vpop.f32.mrb[0].mxu0
  %v2170 = vadd.f32 %v2070, %v2169
  %v2171 = vpop.f32.mrb[0].mxu0
  %2172 = vmatprep.mubr.f32.mxu0 0.0
  %2173 = vmatmul.mubr.f32.gmra.mrb[0].mxu0 %v1984
  %v2174 = vpop.f32.mrb[0].mxu0
  %v2175 = vadd.f32 %v2075, %v2174
  %v2176 = vpop.f32.mrb[0].mxu0
  %2177 = vmatprep.mubr.f32.mxu0 0.0
  %2178 = vmatmul.mubr.f32.gmra.mrb[0].mxu0 %v1987
  %v2179 = vpop.f32.mrb[0].mxu0
  %v2180 = vadd.f32 %v2080, %v2179
  %v2181 = vpop.f32.mrb[0].mxu0
  %2182 = vmatprep.mubr.f32.mxu0 0.0
  %2183 = vmatmul.mubr.f32.gmra.mrb[0].mxu0 %v1990
  %v2184 = vpop.f32.mrb[0].mxu0
  %v2185 = vadd.f32 %v2085, %v2184
  %v2186 = vpop.f32.mrb[0].mxu0
  %2187 = vmatprep.mubr.f32.mxu0 0.0
  %2188 = vmatmul.mubr.f32.gmra.mrb[0].mxu0 %v1993
  %v2189 = vpop.f32.mrb[0].mxu0
  %v2190 = vadd.f32 %v2090, %v2189
  %v2191 = vpop.f32.mrb[0].mxu0
  %2192 = vmatprep.mubr.f32.mxu0 0.0
  %2193 = vmatmul.mubr.f32.gmra.mrb[0].mxu0 %v1996
  %v2194 = vpop.f32.mrb[0].mxu0
  %v2195 = vadd.f32 %v2095, %v2194
  %v2196 = vpop.f32.mrb[0].mxu0
  %2197 = vdwg.mxu0
  %s2198 = scalar_lea.vmem %s4, 32
  %v2199 = vld [vmem:[%s2198] sm:$0xff]
  %v2201 = vsel %vm966, %v2165, 0
  %v2204 = vsel %vm966, %v2170, 0
  %v2207 = vsel %vm966, %v2175, 0
  %v2210 = vsel %vm966, %v2180, 0
  %v2213 = vsel %vm966, %v2185, 0
  %v2216 = vsel %vm966, %v2190, 0
  %v2219 = vsel %vm966, %v2195, 0
  %2221 = vmatprep.subr.mxu0 0.0
  %2222 = vmatpush1.msra.mxu0 %v2199
  %2223 = vmatprep.subr.mxu0 0.0
  %2224 = vmatpush1.msra.mxu0 0.0
  %2225 = vmatprep.subr.mxu0 0.0
  %2226 = vmatpush1.msra.mxu0 0.0
  %2227 = vmatprep.subr.mxu0 0.0
  %2228 = vmatpush1.msra.mxu0 0.0
  %2229 = vmatprep.subr.mxu0 0.0
  %2230 = vmatpush1.msra.mxu0 0.0
  %2231 = vmatprep.subr.mxu0 0.0
  %2232 = vmatpush1.msra.mxu0 0.0
  %2233 = vmatprep.subr.mxu0 0.0
  %2234 = vmatpush1.msra.mxu0 0.0
  %2235 = vmatprep.subr.mxu0 0.0
  %2236 = vmatpush1.msra.mxu0 0.0
  %2237 = vmatprep.subr.mxu0 0.0
  %2238 = vmatpush1.msra.mxu0 0.0
  %2239 = vmatprep.subr.mxu0 0.0
  %2240 = vmatpush1.msra.mxu0 0.0
  %2241 = vmatprep.subr.mxu0 0.0
  %2242 = vmatpush1.msra.mxu0 0.0
  %2243 = vmatprep.subr.mxu0 0.0
  %2244 = vmatpush1.msra.mxu0 0.0
  %2245 = vmatprep.subr.mxu0 0.0
  %2246 = vmatpush1.msra.mxu0 0.0
  %2247 = vmatprep.subr.mxu0 0.0
  %2248 = vmatpush1.msra.mxu0 0.0
  %2249 = vmatprep.subr.mxu0 0.0
  %2250 = vmatpush1.msra.mxu0 0.0
  %2251 = vmatprep.subr.mxu0 0.0
  %2252 = vmatpush1.msra.mxu0 0.0
  %2253 = vmatprep.subr.mxu0 0.0
  %2254 = vmatpush1.msra.mxu0 0.0
  %2255 = vmatprep.subr.mxu0 0.0
  %2256 = vmatpush1.msra.mxu0 0.0
  %2257 = vmatprep.subr.mxu0 0.0
  %2258 = vmatpush1.msra.mxu0 0.0
  %2259 = vmatprep.subr.mxu0 0.0
  %2260 = vmatpush1.msra.mxu0 0.0
  %2261 = vmatprep.subr.mxu0 0.0
  %2262 = vmatpush1.msra.mxu0 0.0
  %2263 = vmatprep.subr.mxu0 0.0
  %2264 = vmatpush1.msra.mxu0 0.0
  %2265 = vmatprep.subr.mxu0 0.0
  %2266 = vmatpush1.msra.mxu0 0.0
  %2267 = vmatprep.subr.mxu0 0.0
  %2268 = vmatpush1.msra.mxu0 0.0
  %2269 = vmatprep.subr.mxu0 0.0
  %2270 = vmatpush1.msra.mxu0 0.0
  %2271 = vmatprep.subr.mxu0 0.0
  %2272 = vmatpush1.msra.mxu0 0.0
  %2273 = vmatprep.subr.mxu0 0.0
  %2274 = vmatpush1.msra.mxu0 0.0
  %2275 = vmatprep.subr.mxu0 0.0
  %2276 = vmatpush1.msra.mxu0 0.0
  %2277 = vmatprep.subr.mxu0 0.0
  %2278 = vmatpush1.msra.mxu0 0.0
  %2279 = vmatprep.subr.mxu0 0.0
  %2280 = vmatpush1.msra.mxu0 0.0
  %2281 = vmatprep.subr.mxu0 0.0
  %2282 = vmatpush1.msra.mxu0 0.0
  %2283 = vmatprep.subr.mxu0 0.0
  %2284 = vmatpush1.msra.mxu0 0.0
  %2285 = vmatprep.mubr.f32.mxu0 0.0
  %2286 = vmatmul.mubr.f32.gmra.mrb[0].mxu0 %v2201
  %v2287 = vpop.f32.mrb[0].mxu0
  %v2288 = vadd.f32 0.0, %v2287
  %v2289 = vpop.f32.mrb[0].mxu0
  %2290 = vmatprep.mubr.f32.mxu0 0.0
  %2291 = vmatmul.mubr.f32.gmra.mrb[0].mxu0 %v2204
  %v2292 = vpop.f32.mrb[0].mxu0
  %v2293 = vadd.f32 0.0, %v2292
  %v2294 = vpop.f32.mrb[0].mxu0
  %2295 = vmatprep.mubr.f32.mxu0 0.0
  %2296 = vmatmul.mubr.f32.gmra.mrb[0].mxu0 %v2207
  %v2297 = vpop.f32.mrb[0].mxu0
  %v2298 = vadd.f32 0.0, %v2297
  %v2299 = vpop.f32.mrb[0].mxu0
  %2300 = vmatprep.mubr.f32.mxu0 0.0
  %2301 = vmatmul.mubr.f32.gmra.mrb[0].mxu0 %v2210
  %v2302 = vpop.f32.mrb[0].mxu0
  %v2303 = vadd.f32 0.0, %v2302
  %v2304 = vpop.f32.mrb[0].mxu0
  %2305 = vmatprep.mubr.f32.mxu0 0.0
  %2306 = vmatmul.mubr.f32.gmra.mrb[0].mxu0 %v2213
  %v2307 = vpop.f32.mrb[0].mxu0
  %v2308 = vadd.f32 0.0, %v2307
  %v2309 = vpop.f32.mrb[0].mxu0
  %2310 = vmatprep.mubr.f32.mxu0 0.0
  %2311 = vmatmul.mubr.f32.gmra.mrb[0].mxu0 %v2216
  %v2312 = vpop.f32.mrb[0].mxu0
  %v2313 = vadd.f32 0.0, %v2312
  %v2314 = vpop.f32.mrb[0].mxu0
  %2315 = vmatprep.mubr.f32.mxu0 0.0
  %2316 = vmatmul.mubr.f32.gmra.mrb[0].mxu0 %v2219
  %v2317 = vpop.f32.mrb[0].mxu0
  %v2318 = vadd.f32 0.0, %v2317
  %v2319 = vpop.f32.mrb[0].mxu0
  %2320 = vdwg.mxu0
  %v2321 = vadd.f32 %v1948, %v2288
  %v2322 = vadd.f32 %v1949, %v2293
  %v2323 = vadd.f32 %v1950, %v2298
  %v2324 = vadd.f32 %v1951, %v2303
  %v2325 = vadd.f32 %v1952, %v2308
  %v2326 = vadd.f32 %v1953, %v2313
  %v2327 = vadd.f32 %v1954, %v2318
  %s2328 = scalar_lea.vmem %s3, 840
  %v2329 = vld [vmem:[%s2328] sm:$0xff]
  %v2330 = vld [vmem:[%s2328 + $0x8] sm:$0xff]
  %v2331 = vld [vmem:[%s2328 + $0x10] sm:$0xff]
  %v2332 = vld [vmem:[%s2328 + $0x18] sm:$0xff]
  %v2333 = vld [vmem:[%s2328 + $0x20] sm:$0xff]
  %v2334 = vld [vmem:[%s2328 + $0x28] sm:$0xff]
  %v2335 = vld [vmem:[%s2328 + $0x30] sm:$0xff]
  %v2336 = vld [vmem:[%s2328 + $0x38] sm:$0xff]
  %v2337 = vld [vmem:[%s2328 + $0x40] sm:$0xff]
  %v2338 = vld [vmem:[%s2328 + $0x48] sm:$0xff]
  %v2339 = vld [vmem:[%s2328 + $0x50] sm:$0xff]
  %v2340 = vld [vmem:[%s2328 + $0x58] sm:$0xff]
  %v2341 = vld [vmem:[%s2328 + $0x60] sm:$0xff]
  %v2342 = vld [vmem:[%s2328 + $0x68] sm:$0xff]
  %v2343 = vld [vmem:[%s2328 + $0x70] sm:$0xff]
  %v2344 = vld [vmem:[%s2328 + $0x78] sm:$0xff]
  %v2345 = vld [vmem:[%s2328 + $0x80] sm:$0xff]
  %v2346 = vld [vmem:[%s2328 + $0x88] sm:$0xff]
  %v2347 = vld [vmem:[%s2328 + $0x90] sm:$0xff]
  %v2348 = vld [vmem:[%s2328 + $0x98] sm:$0xff]
  %v2349 = vld [vmem:[%s2328 + $0xa0] sm:$0xff]
  %v2351 = vsel %vm88, %v2331, 0
  %v2354 = vsel %vm88, %v2334, 0
  %v2357 = vsel %vm88, %v2337, 0
  %v2360 = vsel %vm88, %v2340, 0
  %v2363 = vsel %vm88, %v2343, 0
  %v2366 = vsel %vm88, %v2346, 0
  %v2369 = vsel %vm88, %v2349, 0
  %2371 = vmatprep.subr.mxu0 0.0
  %2372 = vmatpush1.msra.mxu0 %v442
  %2373 = vmatprep.subr.mxu0 0.0
  %2374 = vmatpush1.msra.mxu0 %v443
  %2375 = vmatprep.subr.mxu0 0.0
  %2376 = vmatpush1.msra.mxu0 %v444
  %2377 = vmatprep.subr.mxu0 0.0
  %2378 = vmatpush1.msra.mxu0 %v445
  %2379 = vmatprep.subr.mxu0 0.0
  %2380 = vmatpush1.msra.mxu0 %v446
  %2381 = vmatprep.subr.mxu0 0.0
  %2382 = vmatpush1.msra.mxu0 %v447
  %2383 = vmatprep.subr.mxu0 0.0
  %2384 = vmatpush1.msra.mxu0 %v448
  %2385 = vmatprep.subr.mxu0 0.0
  %2386 = vmatpush1.msra.mxu0 %v449
  %2387 = vmatprep.subr.mxu0 0.0
  %2388 = vmatpush1.msra.mxu0 %v450
  %2389 = vmatprep.subr.mxu0 0.0
  %2390 = vmatpush1.msra.mxu0 %v451
  %2391 = vmatprep.subr.mxu0 0.0
  %2392 = vmatpush1.msra.mxu0 %v452
  %2393 = vmatprep.subr.mxu0 0.0
  %2394 = vmatpush1.msra.mxu0 %v453
  %2395 = vmatprep.subr.mxu0 0.0
  %2396 = vmatpush1.msra.mxu0 %v454
  %2397 = vmatprep.subr.mxu0 0.0
  %2398 = vmatpush1.msra.mxu0 %v455
  %2399 = vmatprep.subr.mxu0 0.0
  %2400 = vmatpush1.msra.mxu0 %v456
  %2401 = vmatprep.subr.mxu0 0.0
  %2402 = vmatpush1.msra.mxu0 %v457
  %2403 = vmatprep.subr.mxu0 0.0
  %2404 = vmatpush1.msra.mxu0 %v458
  %2405 = vmatprep.subr.mxu0 0.0
  %2406 = vmatpush1.msra.mxu0 %v459
  %2407 = vmatprep.subr.mxu0 0.0
  %2408 = vmatpush1.msra.mxu0 %v460
  %2409 = vmatprep.subr.mxu0 0.0
  %2410 = vmatpush1.msra.mxu0 %v461
  %2411 = vmatprep.subr.mxu0 0.0
  %2412 = vmatpush1.msra.mxu0 %v462
  %2413 = vmatprep.subr.mxu0 0.0
  %2414 = vmatpush1.msra.mxu0 %v463
  %2415 = vmatprep.subr.mxu0 0.0
  %2416 = vmatpush1.msra.mxu0 %v464
  %2417 = vmatprep.subr.mxu0 0.0
  %2418 = vmatpush1.msra.mxu0 %v465
  %2419 = vmatprep.subr.mxu0 0.0
  %2420 = vmatpush1.msra.mxu0 %v466
  %2421 = vmatprep.subr.mxu0 0.0
  %2422 = vmatpush1.msra.mxu0 %v467
  %2423 = vmatprep.subr.mxu0 0.0
  %2424 = vmatpush1.msra.mxu0 %v468
  %2425 = vmatprep.subr.mxu0 0.0
  %2426 = vmatpush1.msra.mxu0 %v469
  %2427 = vmatprep.subr.mxu0 0.0
  %2428 = vmatpush1.msra.mxu0 %v470
  %2429 = vmatprep.subr.mxu0 0.0
  %2430 = vmatpush1.msra.mxu0 %v471
  %2431 = vmatprep.subr.mxu0 0.0
  %2432 = vmatpush1.msra.mxu0 %v472
  %2433 = vmatprep.subr.mxu0 0.0
  %2434 = vmatpush1.msra.mxu0 %v473
  %2435 = vmatprep.mubr.f32.mxu0 %v2330
  %2436 = vmatmul.mubr.f32.gmra.mrb[0].mxu0 %v2329
  %v2437 = vpop.f32.mrb[0].mxu0
  %v2438 = vadd.f32 0.0, %v2437
  %v2439 = vpop.f32.mrb[0].mxu0
  %2440 = vmatprep.mubr.f32.mxu0 %v2333
  %2441 = vmatmul.mubr.f32.gmra.mrb[0].mxu0 %v2332
  %v2442 = vpop.f32.mrb[0].mxu0
  %v2443 = vadd.f32 0.0, %v2442
  %v2444 = vpop.f32.mrb[0].mxu0
  %2445 = vmatprep.mubr.f32.mxu0 %v2336
  %2446 = vmatmul.mubr.f32.gmra.mrb[0].mxu0 %v2335
  %v2447 = vpop.f32.mrb[0].mxu0
  %v2448 = vadd.f32 0.0, %v2447
  %v2449 = vpop.f32.mrb[0].mxu0
  %2450 = vmatprep.mubr.f32.mxu0 %v2339
  %2451 = vmatmul.mubr.f32.gmra.mrb[0].mxu0 %v2338
  %v2452 = vpop.f32.mrb[0].mxu0
  %v2453 = vadd.f32 0.0, %v2452
  %v2454 = vpop.f32.mrb[0].mxu0
  %2455 = vmatprep.mubr.f32.mxu0 %v2342
  %2456 = vmatmul.mubr.f32.gmra.mrb[0].mxu0 %v2341
  %v2457 = vpop.f32.mrb[0].mxu0
  %v2458 = vadd.f32 0.0, %v2457
  %v2459 = vpop.f32.mrb[0].mxu0
  %2460 = vmatprep.mubr.f32.mxu0 %v2345
  %2461 = vmatmul.mubr.f32.gmra.mrb[0].mxu0 %v2344
  %v2462 = vpop.f32.mrb[0].mxu0
  %v2463 = vadd.f32 0.0, %v2462
  %v2464 = vpop.f32.mrb[0].mxu0
  %2465 = vmatprep.mubr.f32.mxu0 %v2348
  %2466 = vmatmul.mubr.f32.gmra.mrb[0].mxu0 %v2347
  %v2467 = vpop.f32.mrb[0].mxu0
  %v2468 = vadd.f32 0.0, %v2467
  %v2469 = vpop.f32.mrb[0].mxu0
  %2470 = vdwg.mxu0
  %2471 = vmatprep.subr.mxu0 0.0
  %2472 = vmatpush1.msra.mxu0 %v474
  %2473 = vmatprep.subr.mxu0 0.0
  %2474 = vmatpush1.msra.mxu0 %v475
  %2475 = vmatprep.subr.mxu0 0.0
  %2476 = vmatpush1.msra.mxu0 %v476
  %2477 = vmatprep.subr.mxu0 0.0
  %2478 = vmatpush1.msra.mxu0 %v477
  %2479 = vmatprep.subr.mxu0 0.0
  %2480 = vmatpush1.msra.mxu0 0.0
  %2481 = vmatprep.subr.mxu0 0.0
  %2482 = vmatpush1.msra.mxu0 0.0
  %2483 = vmatprep.subr.mxu0 0.0
  %2484 = vmatpush1.msra.mxu0 0.0
  %2485 = vmatprep.subr.mxu0 0.0
  %2486 = vmatpush1.msra.mxu0 0.0
  %2487 = vmatprep.subr.mxu0 0.0
  %2488 = vmatpush1.msra.mxu0 0.0
  %2489 = vmatprep.subr.mxu0 0.0
  %2490 = vmatpush1.msra.mxu0 0.0
  %2491 = vmatprep.subr.mxu0 0.0
  %2492 = vmatpush1.msra.mxu0 0.0
  %2493 = vmatprep.subr.mxu0 0.0
  %2494 = vmatpush1.msra.mxu0 0.0
  %2495 = vmatprep.subr.mxu0 0.0
  %2496 = vmatpush1.msra.mxu0 0.0
  %2497 = vmatprep.subr.mxu0 0.0
  %2498 = vmatpush1.msra.mxu0 0.0
  %2499 = vmatprep.subr.mxu0 0.0
  %2500 = vmatpush1.msra.mxu0 0.0
  %2501 = vmatprep.subr.mxu0 0.0
  %2502 = vmatpush1.msra.mxu0 0.0
  %2503 = vmatprep.subr.mxu0 0.0
  %2504 = vmatpush1.msra.mxu0 0.0
  %2505 = vmatprep.subr.mxu0 0.0
  %2506 = vmatpush1.msra.mxu0 0.0
  %2507 = vmatprep.subr.mxu0 0.0
  %2508 = vmatpush1.msra.mxu0 0.0
  %2509 = vmatprep.subr.mxu0 0.0
  %2510 = vmatpush1.msra.mxu0 0.0
  %2511 = vmatprep.subr.mxu0 0.0
  %2512 = vmatpush1.msra.mxu0 0.0
  %2513 = vmatprep.subr.mxu0 0.0
  %2514 = vmatpush1.msra.mxu0 0.0
  %2515 = vmatprep.subr.mxu0 0.0
  %2516 = vmatpush1.msra.mxu0 0.0
  %2517 = vmatprep.subr.mxu0 0.0
  %2518 = vmatpush1.msra.mxu0 0.0
  %2519 = vmatprep.subr.mxu0 0.0
  %2520 = vmatpush1.msra.mxu0 0.0
  %2521 = vmatprep.subr.mxu0 0.0
  %2522 = vmatpush1.msra.mxu0 0.0
  %2523 = vmatprep.subr.mxu0 0.0
  %2524 = vmatpush1.msra.mxu0 0.0
  %2525 = vmatprep.subr.mxu0 0.0
  %2526 = vmatpush1.msra.mxu0 0.0
  %2527 = vmatprep.subr.mxu0 0.0
  %2528 = vmatpush1.msra.mxu0 0.0
  %2529 = vmatprep.subr.mxu0 0.0
  %2530 = vmatpush1.msra.mxu0 0.0
  %2531 = vmatprep.subr.mxu0 0.0
  %2532 = vmatpush1.msra.mxu0 0.0
  %2533 = vmatprep.subr.mxu0 0.0
  %2534 = vmatpush1.msra.mxu0 0.0
  %2535 = vmatprep.mubr.f32.mxu0 0.0
  %2536 = vmatmul.mubr.f32.gmra.mrb[0].mxu0 %v2351
  %v2537 = vpop.f32.mrb[0].mxu0
  %v2538 = vadd.f32 %v2438, %v2537
  %v2539 = vpop.f32.mrb[0].mxu0
  %2540 = vmatprep.mubr.f32.mxu0 0.0
  %2541 = vmatmul.mubr.f32.gmra.mrb[0].mxu0 %v2354
  %v2542 = vpop.f32.mrb[0].mxu0
  %v2543 = vadd.f32 %v2443, %v2542
  %v2544 = vpop.f32.mrb[0].mxu0
  %2545 = vmatprep.mubr.f32.mxu0 0.0
  %2546 = vmatmul.mubr.f32.gmra.mrb[0].mxu0 %v2357
  %v2547 = vpop.f32.mrb[0].mxu0
  %v2548 = vadd.f32 %v2448, %v2547
  %v2549 = vpop.f32.mrb[0].mxu0
  %2550 = vmatprep.mubr.f32.mxu0 0.0
  %2551 = vmatmul.mubr.f32.gmra.mrb[0].mxu0 %v2360
  %v2552 = vpop.f32.mrb[0].mxu0
  %v2553 = vadd.f32 %v2453, %v2552
  %v2554 = vpop.f32.mrb[0].mxu0
  %2555 = vmatprep.mubr.f32.mxu0 0.0
  %2556 = vmatmul.mubr.f32.gmra.mrb[0].mxu0 %v2363
  %v2557 = vpop.f32.mrb[0].mxu0
  %v2558 = vadd.f32 %v2458, %v2557
  %v2559 = vpop.f32.mrb[0].mxu0
  %2560 = vmatprep.mubr.f32.mxu0 0.0
  %2561 = vmatmul.mubr.f32.gmra.mrb[0].mxu0 %v2366
  %v2562 = vpop.f32.mrb[0].mxu0
  %v2563 = vadd.f32 %v2463, %v2562
  %v2564 = vpop.f32.mrb[0].mxu0
  %2565 = vmatprep.mubr.f32.mxu0 0.0
  %2566 = vmatmul.mubr.f32.gmra.mrb[0].mxu0 %v2369
  %v2567 = vpop.f32.mrb[0].mxu0
  %v2568 = vadd.f32 %v2468, %v2567
  %v2569 = vpop.f32.mrb[0].mxu0
  %2570 = vdwg.mxu0
  %s2571 = scalar_lea.vmem %s4, 40
  %v2572 = vld [vmem:[%s2571] sm:$0xff]
  %v2574 = vsel %vm966, %v2538, 0
  %v2577 = vsel %vm966, %v2543, 0
  %v2580 = vsel %vm966, %v2548, 0
  %v2583 = vsel %vm966, %v2553, 0
  %v2586 = vsel %vm966, %v2558, 0
  %v2589 = vsel %vm966, %v2563, 0
  %v2592 = vsel %vm966, %v2568, 0
  %2594 = vmatprep.subr.mxu0 0.0
  %2595 = vmatpush1.msra.mxu0 %v2572
  %2596 = vmatprep.subr.mxu0 0.0
  %2597 = vmatpush1.msra.mxu0 0.0
  %2598 = vmatprep.subr.mxu0 0.0
  %2599 = vmatpush1.msra.mxu0 0.0
  %2600 = vmatprep.subr.mxu0 0.0
  %2601 = vmatpush1.msra.mxu0 0.0
  %2602 = vmatprep.subr.mxu0 0.0
  %2603 = vmatpush1.msra.mxu0 0.0
  %2604 = vmatprep.subr.mxu0 0.0
  %2605 = vmatpush1.msra.mxu0 0.0
  %2606 = vmatprep.subr.mxu0 0.0
  %2607 = vmatpush1.msra.mxu0 0.0
  %2608 = vmatprep.subr.mxu0 0.0
  %2609 = vmatpush1.msra.mxu0 0.0
  %2610 = vmatprep.subr.mxu0 0.0
  %2611 = vmatpush1.msra.mxu0 0.0
  %2612 = vmatprep.subr.mxu0 0.0
  %2613 = vmatpush1.msra.mxu0 0.0
  %2614 = vmatprep.subr.mxu0 0.0
  %2615 = vmatpush1.msra.mxu0 0.0
  %2616 = vmatprep.subr.mxu0 0.0
  %2617 = vmatpush1.msra.mxu0 0.0
  %2618 = vmatprep.subr.mxu0 0.0
  %2619 = vmatpush1.msra.mxu0 0.0
  %2620 = vmatprep.subr.mxu0 0.0
  %2621 = vmatpush1.msra.mxu0 0.0
  %2622 = vmatprep.subr.mxu0 0.0
  %2623 = vmatpush1.msra.mxu0 0.0
  %2624 = vmatprep.subr.mxu0 0.0
  %2625 = vmatpush1.msra.mxu0 0.0
  %2626 = vmatprep.subr.mxu0 0.0
  %2627 = vmatpush1.msra.mxu0 0.0
  %2628 = vmatprep.subr.mxu0 0.0
  %2629 = vmatpush1.msra.mxu0 0.0
  %2630 = vmatprep.subr.mxu0 0.0
  %2631 = vmatpush1.msra.mxu0 0.0
  %2632 = vmatprep.subr.mxu0 0.0
  %2633 = vmatpush1.msra.mxu0 0.0
  %2634 = vmatprep.subr.mxu0 0.0
  %2635 = vmatpush1.msra.mxu0 0.0
  %2636 = vmatprep.subr.mxu0 0.0
  %2637 = vmatpush1.msra.mxu0 0.0
  %2638 = vmatprep.subr.mxu0 0.0
  %2639 = vmatpush1.msra.mxu0 0.0
  %2640 = vmatprep.subr.mxu0 0.0
  %2641 = vmatpush1.msra.mxu0 0.0
  %2642 = vmatprep.subr.mxu0 0.0
  %2643 = vmatpush1.msra.mxu0 0.0
  %2644 = vmatprep.subr.mxu0 0.0
  %2645 = vmatpush1.msra.mxu0 0.0
  %2646 = vmatprep.subr.mxu0 0.0
  %2647 = vmatpush1.msra.mxu0 0.0
  %2648 = vmatprep.subr.mxu0 0.0
  %2649 = vmatpush1.msra.mxu0 0.0
  %2650 = vmatprep.subr.mxu0 0.0
  %2651 = vmatpush1.msra.mxu0 0.0
  %2652 = vmatprep.subr.mxu0 0.0
  %2653 = vmatpush1.msra.mxu0 0.0
  %2654 = vmatprep.subr.mxu0 0.0
  %2655 = vmatpush1.msra.mxu0 0.0
  %2656 = vmatprep.subr.mxu0 0.0
  %2657 = vmatpush1.msra.mxu0 0.0
  %2658 = vmatprep.mubr.f32.mxu0 0.0
  %2659 = vmatmul.mubr.f32.gmra.mrb[0].mxu0 %v2574
  %v2660 = vpop.f32.mrb[0].mxu0
  %v2661 = vadd.f32 0.0, %v2660
  %v2662 = vpop.f32.mrb[0].mxu0
  %2663 = vmatprep.mubr.f32.mxu0 0.0
  %2664 = vmatmul.mubr.f32.gmra.mrb[0].mxu0 %v2577
  %v2665 = vpop.f32.mrb[0].mxu0
  %v2666 = vadd.f32 0.0, %v2665
  %v2667 = vpop.f32.mrb[0].mxu0
  %2668 = vmatprep.mubr.f32.mxu0 0.0
  %2669 = vmatmul.mubr.f32.gmra.mrb[0].mxu0 %v2580
  %v2670 = vpop.f32.mrb[0].mxu0
  %v2671 = vadd.f32 0.0, %v2670
  %v2672 = vpop.f32.mrb[0].mxu0
  %2673 = vmatprep.mubr.f32.mxu0 0.0
  %2674 = vmatmul.mubr.f32.gmra.mrb[0].mxu0 %v2583
  %v2675 = vpop.f32.mrb[0].mxu0
  %v2676 = vadd.f32 0.0, %v2675
  %v2677 = vpop.f32.mrb[0].mxu0
  %2678 = vmatprep.mubr.f32.mxu0 0.0
  %2679 = vmatmul.mubr.f32.gmra.mrb[0].mxu0 %v2586
  %v2680 = vpop.f32.mrb[0].mxu0
  %v2681 = vadd.f32 0.0, %v2680
  %v2682 = vpop.f32.mrb[0].mxu0
  %2683 = vmatprep.mubr.f32.mxu0 0.0
  %2684 = vmatmul.mubr.f32.gmra.mrb[0].mxu0 %v2589
  %v2685 = vpop.f32.mrb[0].mxu0
  %v2686 = vadd.f32 0.0, %v2685
  %v2687 = vpop.f32.mrb[0].mxu0
  %2688 = vmatprep.mubr.f32.mxu0 0.0
  %2689 = vmatmul.mubr.f32.gmra.mrb[0].mxu0 %v2592
  %v2690 = vpop.f32.mrb[0].mxu0
  %v2691 = vadd.f32 0.0, %v2690
  %v2692 = vpop.f32.mrb[0].mxu0
  %2693 = vdwg.mxu0
  %v2694 = vadd.f32 %v2321, %v2661
  %v2695 = vadd.f32 %v2322, %v2666
  %v2696 = vadd.f32 %v2323, %v2671
  %v2697 = vadd.f32 %v2324, %v2676
  %v2698 = vadd.f32 %v2325, %v2681
  %v2699 = vadd.f32 %v2326, %v2686
  %v2700 = vadd.f32 %v2327, %v2691
  %s2701 = scalar_lea.vmem %s3, 1008
  %v2702 = vld [vmem:[%s2701] sm:$0xff]
  %v2703 = vld [vmem:[%s2701 + $0x8] sm:$0xff]
  %v2704 = vld [vmem:[%s2701 + $0x10] sm:$0xff]
  %v2705 = vld [vmem:[%s2701 + $0x18] sm:$0xff]
  %v2706 = vld [vmem:[%s2701 + $0x20] sm:$0xff]
  %v2707 = vld [vmem:[%s2701 + $0x28] sm:$0xff]
  %v2708 = vld [vmem:[%s2701 + $0x30] sm:$0xff]
  %v2709 = vld [vmem:[%s2701 + $0x38] sm:$0xff]
  %v2710 = vld [vmem:[%s2701 + $0x40] sm:$0xff]
  %v2711 = vld [vmem:[%s2701 + $0x48] sm:$0xff]
  %v2712 = vld [vmem:[%s2701 + $0x50] sm:$0xff]
  %v2713 = vld [vmem:[%s2701 + $0x58] sm:$0xff]
  %v2714 = vld [vmem:[%s2701 + $0x60] sm:$0xff]
  %v2715 = vld [vmem:[%s2701 + $0x68] sm:$0xff]
  %v2716 = vld [vmem:[%s2701 + $0x70] sm:$0xff]
  %v2717 = vld [vmem:[%s2701 + $0x78] sm:$0xff]
  %v2718 = vld [vmem:[%s2701 + $0x80] sm:$0xff]
  %v2719 = vld [vmem:[%s2701 + $0x88] sm:$0xff]
  %v2720 = vld [vmem:[%s2701 + $0x90] sm:$0xff]
  %v2721 = vld [vmem:[%s2701 + $0x98] sm:$0xff]
  %v2722 = vld [vmem:[%s2701 + $0xa0] sm:$0xff]
  %v2724 = vsel %vm88, %v2704, 0
  %v2727 = vsel %vm88, %v2707, 0
  %v2730 = vsel %vm88, %v2710, 0
  %v2733 = vsel %vm88, %v2713, 0
  %v2736 = vsel %vm88, %v2716, 0
  %v2739 = vsel %vm88, %v2719, 0
  %v2742 = vsel %vm88, %v2722, 0
  %2744 = vmatprep.subr.mxu0 0.0
  %2745 = vmatpush1.msra.mxu0 %v442
  %2746 = vmatprep.subr.mxu0 0.0
  %2747 = vmatpush1.msra.mxu0 %v443
  %2748 = vmatprep.subr.mxu0 0.0
  %2749 = vmatpush1.msra.mxu0 %v444
  %2750 = vmatprep.subr.mxu0 0.0
  %2751 = vmatpush1.msra.mxu0 %v445
  %2752 = vmatprep.subr.mxu0 0.0
  %2753 = vmatpush1.msra.mxu0 %v446
  %2754 = vmatprep.subr.mxu0 0.0
  %2755 = vmatpush1.msra.mxu0 %v447
  %2756 = vmatprep.subr.mxu0 0.0
  %2757 = vmatpush1.msra.mxu0 %v448
  %2758 = vmatprep.subr.mxu0 0.0
  %2759 = vmatpush1.msra.mxu0 %v449
  %2760 = vmatprep.subr.mxu0 0.0
  %2761 = vmatpush1.msra.mxu0 %v450
  %2762 = vmatprep.subr.mxu0 0.0
  %2763 = vmatpush1.msra.mxu0 %v451
  %2764 = vmatprep.subr.mxu0 0.0
  %2765 = vmatpush1.msra.mxu0 %v452
  %2766 = vmatprep.subr.mxu0 0.0
  %2767 = vmatpush1.msra.mxu0 %v453
  %2768 = vmatprep.subr.mxu0 0.0
  %2769 = vmatpush1.msra.mxu0 %v454
  %2770 = vmatprep.subr.mxu0 0.0
  %2771 = vmatpush1.msra.mxu0 %v455
  %2772 = vmatprep.subr.mxu0 0.0
  %2773 = vmatpush1.msra.mxu0 %v456
  %2774 = vmatprep.subr.mxu0 0.0
  %2775 = vmatpush1.msra.mxu0 %v457
  %2776 = vmatprep.subr.mxu0 0.0
  %2777 = vmatpush1.msra.mxu0 %v458
  %2778 = vmatprep.subr.mxu0 0.0
  %2779 = vmatpush1.msra.mxu0 %v459
  %2780 = vmatprep.subr.mxu0 0.0
  %2781 = vmatpush1.msra.mxu0 %v460
  %2782 = vmatprep.subr.mxu0 0.0
  %2783 = vmatpush1.msra.mxu0 %v461
  %2784 = vmatprep.subr.mxu0 0.0
  %2785 = vmatpush1.msra.mxu0 %v462
  %2786 = vmatprep.subr.mxu0 0.0
  %2787 = vmatpush1.msra.mxu0 %v463
  %2788 = vmatprep.subr.mxu0 0.0
  %2789 = vmatpush1.msra.mxu0 %v464
  %2790 = vmatprep.subr.mxu0 0.0
  %2791 = vmatpush1.msra.mxu0 %v465
  %2792 = vmatprep.subr.mxu0 0.0
  %2793 = vmatpush1.msra.mxu0 %v466
  %2794 = vmatprep.subr.mxu0 0.0
  %2795 = vmatpush1.msra.mxu0 %v467
  %2796 = vmatprep.subr.mxu0 0.0
  %2797 = vmatpush1.msra.mxu0 %v468
  %2798 = vmatprep.subr.mxu0 0.0
  %2799 = vmatpush1.msra.mxu0 %v469
  %2800 = vmatprep.subr.mxu0 0.0
  %2801 = vmatpush1.msra.mxu0 %v470
  %2802 = vmatprep.subr.mxu0 0.0
  %2803 = vmatpush1.msra.mxu0 %v471
  %2804 = vmatprep.subr.mxu0 0.0
  %2805 = vmatpush1.msra.mxu0 %v472
  %2806 = vmatprep.subr.mxu0 0.0
  %2807 = vmatpush1.msra.mxu0 %v473
  %2808 = vmatprep.mubr.f32.mxu0 %v2703
  %2809 = vmatmul.mubr.f32.gmra.mrb[0].mxu0 %v2702
  %v2810 = vpop.f32.mrb[0].mxu0
  %v2811 = vadd.f32 0.0, %v2810
  %v2812 = vpop.f32.mrb[0].mxu0
  %2813 = vmatprep.mubr.f32.mxu0 %v2706
  %2814 = vmatmul.mubr.f32.gmra.mrb[0].mxu0 %v2705
  %v2815 = vpop.f32.mrb[0].mxu0
  %v2816 = vadd.f32 0.0, %v2815
  %v2817 = vpop.f32.mrb[0].mxu0
  %2818 = vmatprep.mubr.f32.mxu0 %v2709
  %2819 = vmatmul.mubr.f32.gmra.mrb[0].mxu0 %v2708
  %v2820 = vpop.f32.mrb[0].mxu0
  %v2821 = vadd.f32 0.0, %v2820
  %v2822 = vpop.f32.mrb[0].mxu0
  %2823 = vmatprep.mubr.f32.mxu0 %v2712
  %2824 = vmatmul.mubr.f32.gmra.mrb[0].mxu0 %v2711
  %v2825 = vpop.f32.mrb[0].mxu0
  %v2826 = vadd.f32 0.0, %v2825
  %v2827 = vpop.f32.mrb[0].mxu0
  %2828 = vmatprep.mubr.f32.mxu0 %v2715
  %2829 = vmatmul.mubr.f32.gmra.mrb[0].mxu0 %v2714
  %v2830 = vpop.f32.mrb[0].mxu0
  %v2831 = vadd.f32 0.0, %v2830
  %v2832 = vpop.f32.mrb[0].mxu0
  %2833 = vmatprep.mubr.f32.mxu0 %v2718
  %2834 = vmatmul.mubr.f32.gmra.mrb[0].mxu0 %v2717
  %v2835 = vpop.f32.mrb[0].mxu0
  %v2836 = vadd.f32 0.0, %v2835
  %v2837 = vpop.f32.mrb[0].mxu0
  %2838 = vmatprep.mubr.f32.mxu0 %v2721
  %2839 = vmatmul.mubr.f32.gmra.mrb[0].mxu0 %v2720
  %v2840 = vpop.f32.mrb[0].mxu0
  %v2841 = vadd.f32 0.0, %v2840
  %v2842 = vpop.f32.mrb[0].mxu0
  %2843 = vdwg.mxu0
  %2844 = vmatprep.subr.mxu0 0.0
  %2845 = vmatpush1.msra.mxu0 %v474
  %2846 = vmatprep.subr.mxu0 0.0
  %2847 = vmatpush1.msra.mxu0 %v475
  %2848 = vmatprep.subr.mxu0 0.0
  %2849 = vmatpush1.msra.mxu0 %v476
  %2850 = vmatprep.subr.mxu0 0.0
  %2851 = vmatpush1.msra.mxu0 %v477
  %2852 = vmatprep.subr.mxu0 0.0
  %2853 = vmatpush1.msra.mxu0 0.0
  %2854 = vmatprep.subr.mxu0 0.0
  %2855 = vmatpush1.msra.mxu0 0.0
  %2856 = vmatprep.subr.mxu0 0.0
  %2857 = vmatpush1.msra.mxu0 0.0
  %2858 = vmatprep.subr.mxu0 0.0
  %2859 = vmatpush1.msra.mxu0 0.0
  %2860 = vmatprep.subr.mxu0 0.0
  %2861 = vmatpush1.msra.mxu0 0.0
  %2862 = vmatprep.subr.mxu0 0.0
  %2863 = vmatpush1.msra.mxu0 0.0
  %2864 = vmatprep.subr.mxu0 0.0
  %2865 = vmatpush1.msra.mxu0 0.0
  %2866 = vmatprep.subr.mxu0 0.0
  %2867 = vmatpush1.msra.mxu0 0.0
  %2868 = vmatprep.subr.mxu0 0.0
  %2869 = vmatpush1.msra.mxu0 0.0
  %2870 = vmatprep.subr.mxu0 0.0
  %2871 = vmatpush1.msra.mxu0 0.0
  %2872 = vmatprep.subr.mxu0 0.0
  %2873 = vmatpush1.msra.mxu0 0.0
  %2874 = vmatprep.subr.mxu0 0.0
  %2875 = vmatpush1.msra.mxu0 0.0
  %2876 = vmatprep.subr.mxu0 0.0
  %2877 = vmatpush1.msra.mxu0 0.0
  %2878 = vmatprep.subr.mxu0 0.0
  %2879 = vmatpush1.msra.mxu0 0.0
  %2880 = vmatprep.subr.mxu0 0.0
  %2881 = vmatpush1.msra.mxu0 0.0
  %2882 = vmatprep.subr.mxu0 0.0
  %2883 = vmatpush1.msra.mxu0 0.0
  %2884 = vmatprep.subr.mxu0 0.0
  %2885 = vmatpush1.msra.mxu0 0.0
  %2886 = vmatprep.subr.mxu0 0.0
  %2887 = vmatpush1.msra.mxu0 0.0
  %2888 = vmatprep.subr.mxu0 0.0
  %2889 = vmatpush1.msra.mxu0 0.0
  %2890 = vmatprep.subr.mxu0 0.0
  %2891 = vmatpush1.msra.mxu0 0.0
  %2892 = vmatprep.subr.mxu0 0.0
  %2893 = vmatpush1.msra.mxu0 0.0
  %2894 = vmatprep.subr.mxu0 0.0
  %2895 = vmatpush1.msra.mxu0 0.0
  %2896 = vmatprep.subr.mxu0 0.0
  %2897 = vmatpush1.msra.mxu0 0.0
  %2898 = vmatprep.subr.mxu0 0.0
  %2899 = vmatpush1.msra.mxu0 0.0
  %2900 = vmatprep.subr.mxu0 0.0
  %2901 = vmatpush1.msra.mxu0 0.0
  %2902 = vmatprep.subr.mxu0 0.0
  %2903 = vmatpush1.msra.mxu0 0.0
  %2904 = vmatprep.subr.mxu0 0.0
  %2905 = vmatpush1.msra.mxu0 0.0
  %2906 = vmatprep.subr.mxu0 0.0
  %2907 = vmatpush1.msra.mxu0 0.0
  %2908 = vmatprep.mubr.f32.mxu0 0.0
  %2909 = vmatmul.mubr.f32.gmra.mrb[0].mxu0 %v2724
  %v2910 = vpop.f32.mrb[0].mxu0
  %v2911 = vadd.f32 %v2811, %v2910
  %v2912 = vpop.f32.mrb[0].mxu0
  %2913 = vmatprep.mubr.f32.mxu0 0.0
  %2914 = vmatmul.mubr.f32.gmra.mrb[0].mxu0 %v2727
  %v2915 = vpop.f32.mrb[0].mxu0
  %v2916 = vadd.f32 %v2816, %v2915
  %v2917 = vpop.f32.mrb[0].mxu0
  %2918 = vmatprep.mubr.f32.mxu0 0.0
  %2919 = vmatmul.mubr.f32.gmra.mrb[0].mxu0 %v2730
  %v2920 = vpop.f32.mrb[0].mxu0
  %v2921 = vadd.f32 %v2821, %v2920
  %v2922 = vpop.f32.mrb[0].mxu0
  %2923 = vmatprep.mubr.f32.mxu0 0.0
  %2924 = vmatmul.mubr.f32.gmra.mrb[0].mxu0 %v2733
  %v2925 = vpop.f32.mrb[0].mxu0
  %v2926 = vadd.f32 %v2826, %v2925
  %v2927 = vpop.f32.mrb[0].mxu0
  %2928 = vmatprep.mubr.f32.mxu0 0.0
  %2929 = vmatmul.mubr.f32.gmra.mrb[0].mxu0 %v2736
  %v2930 = vpop.f32.mrb[0].mxu0
  %v2931 = vadd.f32 %v2831, %v2930
  %v2932 = vpop.f32.mrb[0].mxu0
  %2933 = vmatprep.mubr.f32.mxu0 0.0
  %2934 = vmatmul.mubr.f32.gmra.mrb[0].mxu0 %v2739
  %v2935 = vpop.f32.mrb[0].mxu0
  %v2936 = vadd.f32 %v2836, %v2935
  %v2937 = vpop.f32.mrb[0].mxu0
  %2938 = vmatprep.mubr.f32.mxu0 0.0
  %2939 = vmatmul.mubr.f32.gmra.mrb[0].mxu0 %v2742
  %v2940 = vpop.f32.mrb[0].mxu0
  %v2941 = vadd.f32 %v2841, %v2940
  %v2942 = vpop.f32.mrb[0].mxu0
  %2943 = vdwg.mxu0
  %s2944 = scalar_lea.vmem %s4, 48
  %v2945 = vld [vmem:[%s2944] sm:$0xff]
  %v2947 = vsel %vm966, %v2911, 0
  %v2950 = vsel %vm966, %v2916, 0
  %v2953 = vsel %vm966, %v2921, 0
  %v2956 = vsel %vm966, %v2926, 0
  %v2959 = vsel %vm966, %v2931, 0
  %v2962 = vsel %vm966, %v2936, 0
  %v2965 = vsel %vm966, %v2941, 0
  %2967 = vmatprep.subr.mxu0 0.0
  %2968 = vmatpush1.msra.mxu0 %v2945
  %2969 = vmatprep.subr.mxu0 0.0
  %2970 = vmatpush1.msra.mxu0 0.0
  %2971 = vmatprep.subr.mxu0 0.0
  %2972 = vmatpush1.msra.mxu0 0.0
  %2973 = vmatprep.subr.mxu0 0.0
  %2974 = vmatpush1.msra.mxu0 0.0
  %2975 = vmatprep.subr.mxu0 0.0
  %2976 = vmatpush1.msra.mxu0 0.0
  %2977 = vmatprep.subr.mxu0 0.0
  %2978 = vmatpush1.msra.mxu0 0.0
  %2979 = vmatprep.subr.mxu0 0.0
  %2980 = vmatpush1.msra.mxu0 0.0
  %2981 = vmatprep.subr.mxu0 0.0
  %2982 = vmatpush1.msra.mxu0 0.0
  %2983 = vmatprep.subr.mxu0 0.0
  %2984 = vmatpush1.msra.mxu0 0.0
  %2985 = vmatprep.subr.mxu0 0.0
  %2986 = vmatpush1.msra.mxu0 0.0
  %2987 = vmatprep.subr.mxu0 0.0
  %2988 = vmatpush1.msra.mxu0 0.0
  %2989 = vmatprep.subr.mxu0 0.0
  %2990 = vmatpush1.msra.mxu0 0.0
  %2991 = vmatprep.subr.mxu0 0.0
  %2992 = vmatpush1.msra.mxu0 0.0
  %2993 = vmatprep.subr.mxu0 0.0
  %2994 = vmatpush1.msra.mxu0 0.0
  %2995 = vmatprep.subr.mxu0 0.0
  %2996 = vmatpush1.msra.mxu0 0.0
  %2997 = vmatprep.subr.mxu0 0.0
  %2998 = vmatpush1.msra.mxu0 0.0
  %2999 = vmatprep.subr.mxu0 0.0
  %3000 = vmatpush1.msra.mxu0 0.0
  %3001 = vmatprep.subr.mxu0 0.0
  %3002 = vmatpush1.msra.mxu0 0.0
  %3003 = vmatprep.subr.mxu0 0.0
  %3004 = vmatpush1.msra.mxu0 0.0
  %3005 = vmatprep.subr.mxu0 0.0
  %3006 = vmatpush1.msra.mxu0 0.0
  %3007 = vmatprep.subr.mxu0 0.0
  %3008 = vmatpush1.msra.mxu0 0.0
  %3009 = vmatprep.subr.mxu0 0.0
  %3010 = vmatpush1.msra.mxu0 0.0
  %3011 = vmatprep.subr.mxu0 0.0
  %3012 = vmatpush1.msra.mxu0 0.0
  %3013 = vmatprep.subr.mxu0 0.0
  %3014 = vmatpush1.msra.mxu0 0.0
  %3015 = vmatprep.subr.mxu0 0.0
  %3016 = vmatpush1.msra.mxu0 0.0
  %3017 = vmatprep.subr.mxu0 0.0
  %3018 = vmatpush1.msra.mxu0 0.0
  %3019 = vmatprep.subr.mxu0 0.0
  %3020 = vmatpush1.msra.mxu0 0.0
  %3021 = vmatprep.subr.mxu0 0.0
  %3022 = vmatpush1.msra.mxu0 0.0
  %3023 = vmatprep.subr.mxu0 0.0
  %3024 = vmatpush1.msra.mxu0 0.0
  %3025 = vmatprep.subr.mxu0 0.0
  %3026 = vmatpush1.msra.mxu0 0.0
  %3027 = vmatprep.subr.mxu0 0.0
  %3028 = vmatpush1.msra.mxu0 0.0
  %3029 = vmatprep.subr.mxu0 0.0
  %3030 = vmatpush1.msra.mxu0 0.0
  %3031 = vmatprep.mubr.f32.mxu0 0.0
  %3032 = vmatmul.mubr.f32.gmra.mrb[0].mxu0 %v2947
  %v3033 = vpop.f32.mrb[0].mxu0
  %v3034 = vadd.f32 0.0, %v3033
  %v3035 = vpop.f32.mrb[0].mxu0
  %3036 = vmatprep.mubr.f32.mxu0 0.0
  %3037 = vmatmul.mubr.f32.gmra.mrb[0].mxu0 %v2950
  %v3038 = vpop.f32.mrb[0].mxu0
  %v3039 = vadd.f32 0.0, %v3038
  %v3040 = vpop.f32.mrb[0].mxu0
  %3041 = vmatprep.mubr.f32.mxu0 0.0
  %3042 = vmatmul.mubr.f32.gmra.mrb[0].mxu0 %v2953
  %v3043 = vpop.f32.mrb[0].mxu0
  %v3044 = vadd.f32 0.0, %v3043
  %v3045 = vpop.f32.mrb[0].mxu0
  %3046 = vmatprep.mubr.f32.mxu0 0.0
  %3047 = vmatmul.mubr.f32.gmra.mrb[0].mxu0 %v2956
  %v3048 = vpop.f32.mrb[0].mxu0
  %v3049 = vadd.f32 0.0, %v3048
  %v3050 = vpop.f32.mrb[0].mxu0
  %3051 = vmatprep.mubr.f32.mxu0 0.0
  %3052 = vmatmul.mubr.f32.gmra.mrb[0].mxu0 %v2959
  %v3053 = vpop.f32.mrb[0].mxu0
  %v3054 = vadd.f32 0.0, %v3053
  %v3055 = vpop.f32.mrb[0].mxu0
  %3056 = vmatprep.mubr.f32.mxu0 0.0
  %3057 = vmatmul.mubr.f32.gmra.mrb[0].mxu0 %v2962
  %v3058 = vpop.f32.mrb[0].mxu0
  %v3059 = vadd.f32 0.0, %v3058
  %v3060 = vpop.f32.mrb[0].mxu0
  %3061 = vmatprep.mubr.f32.mxu0 0.0
  %3062 = vmatmul.mubr.f32.gmra.mrb[0].mxu0 %v2965
  %v3063 = vpop.f32.mrb[0].mxu0
  %v3064 = vadd.f32 0.0, %v3063
  %v3065 = vpop.f32.mrb[0].mxu0
  %3066 = vdwg.mxu0
  %v3067 = vadd.f32 %v2694, %v3034
  %v3068 = vadd.f32 %v2695, %v3039
  %v3069 = vadd.f32 %v2696, %v3044
  %v3070 = vadd.f32 %v2697, %v3049
  %v3071 = vadd.f32 %v2698, %v3054
  %v3072 = vadd.f32 %v2699, %v3059
  %v3073 = vadd.f32 %v2700, %v3064
  %s3074 = scalar_lea.vmem %s3, 1176
  %v3075 = vld [vmem:[%s3074] sm:$0xff]
  %v3076 = vld [vmem:[%s3074 + $0x8] sm:$0xff]
  %v3077 = vld [vmem:[%s3074 + $0x10] sm:$0xff]
  %v3078 = vld [vmem:[%s3074 + $0x18] sm:$0xff]
  %v3079 = vld [vmem:[%s3074 + $0x20] sm:$0xff]
  %v3080 = vld [vmem:[%s3074 + $0x28] sm:$0xff]
  %v3081 = vld [vmem:[%s3074 + $0x30] sm:$0xff]
  %v3082 = vld [vmem:[%s3074 + $0x38] sm:$0xff]
  %v3083 = vld [vmem:[%s3074 + $0x40] sm:$0xff]
  %v3084 = vld [vmem:[%s3074 + $0x48] sm:$0xff]
  %v3085 = vld [vmem:[%s3074 + $0x50] sm:$0xff]
  %v3086 = vld [vmem:[%s3074 + $0x58] sm:$0xff]
  %v3087 = vld [vmem:[%s3074 + $0x60] sm:$0xff]
  %v3088 = vld [vmem:[%s3074 + $0x68] sm:$0xff]
  %v3089 = vld [vmem:[%s3074 + $0x70] sm:$0xff]
  %v3090 = vld [vmem:[%s3074 + $0x78] sm:$0xff]
  %v3091 = vld [vmem:[%s3074 + $0x80] sm:$0xff]
  %v3092 = vld [vmem:[%s3074 + $0x88] sm:$0xff]
  %v3093 = vld [vmem:[%s3074 + $0x90] sm:$0xff]
  %v3094 = vld [vmem:[%s3074 + $0x98] sm:$0xff]
  %v3095 = vld [vmem:[%s3074 + $0xa0] sm:$0xff]
  %v3097 = vsel %vm88, %v3077, 0
  %v3100 = vsel %vm88, %v3080, 0
  %v3103 = vsel %vm88, %v3083, 0
  %v3106 = vsel %vm88, %v3086, 0
  %v3109 = vsel %vm88, %v3089, 0
  %v3112 = vsel %vm88, %v3092, 0
  %v3115 = vsel %vm88, %v3095, 0
  %3117 = vmatprep.subr.mxu0 0.0
  %3118 = vmatpush1.msra.mxu0 %v442
  %3119 = vmatprep.subr.mxu0 0.0
  %3120 = vmatpush1.msra.mxu0 %v443
  %3121 = vmatprep.subr.mxu0 0.0
  %3122 = vmatpush1.msra.mxu0 %v444
  %3123 = vmatprep.subr.mxu0 0.0
  %3124 = vmatpush1.msra.mxu0 %v445
  %3125 = vmatprep.subr.mxu0 0.0
  %3126 = vmatpush1.msra.mxu0 %v446
  %3127 = vmatprep.subr.mxu0 0.0
  %3128 = vmatpush1.msra.mxu0 %v447
  %3129 = vmatprep.subr.mxu0 0.0
  %3130 = vmatpush1.msra.mxu0 %v448
  %3131 = vmatprep.subr.mxu0 0.0
  %3132 = vmatpush1.msra.mxu0 %v449
  %3133 = vmatprep.subr.mxu0 0.0
  %3134 = vmatpush1.msra.mxu0 %v450
  %3135 = vmatprep.subr.mxu0 0.0
  %3136 = vmatpush1.msra.mxu0 %v451
  %3137 = vmatprep.subr.mxu0 0.0
  %3138 = vmatpush1.msra.mxu0 %v452
  %3139 = vmatprep.subr.mxu0 0.0
  %3140 = vmatpush1.msra.mxu0 %v453
  %3141 = vmatprep.subr.mxu0 0.0
  %3142 = vmatpush1.msra.mxu0 %v454
  %3143 = vmatprep.subr.mxu0 0.0
  %3144 = vmatpush1.msra.mxu0 %v455
  %3145 = vmatprep.subr.mxu0 0.0
  %3146 = vmatpush1.msra.mxu0 %v456
  %3147 = vmatprep.subr.mxu0 0.0
  %3148 = vmatpush1.msra.mxu0 %v457
  %3149 = vmatprep.subr.mxu0 0.0
  %3150 = vmatpush1.msra.mxu0 %v458
  %3151 = vmatprep.subr.mxu0 0.0
  %3152 = vmatpush1.msra.mxu0 %v459
  %3153 = vmatprep.subr.mxu0 0.0
  %3154 = vmatpush1.msra.mxu0 %v460
  %3155 = vmatprep.subr.mxu0 0.0
  %3156 = vmatpush1.msra.mxu0 %v461
  %3157 = vmatprep.subr.mxu0 0.0
  %3158 = vmatpush1.msra.mxu0 %v462
  %3159 = vmatprep.subr.mxu0 0.0
  %3160 = vmatpush1.msra.mxu0 %v463
  %3161 = vmatprep.subr.mxu0 0.0
  %3162 = vmatpush1.msra.mxu0 %v464
  %3163 = vmatprep.subr.mxu0 0.0
  %3164 = vmatpush1.msra.mxu0 %v465
  %3165 = vmatprep.subr.mxu0 0.0
  %3166 = vmatpush1.msra.mxu0 %v466
  %3167 = vmatprep.subr.mxu0 0.0
  %3168 = vmatpush1.msra.mxu0 %v467
  %3169 = vmatprep.subr.mxu0 0.0
  %3170 = vmatpush1.msra.mxu0 %v468
  %3171 = vmatprep.subr.mxu0 0.0
  %3172 = vmatpush1.msra.mxu0 %v469
  %3173 = vmatprep.subr.mxu0 0.0
  %3174 = vmatpush1.msra.mxu0 %v470
  %3175 = vmatprep.subr.mxu0 0.0
  %3176 = vmatpush1.msra.mxu0 %v471
  %3177 = vmatprep.subr.mxu0 0.0
  %3178 = vmatpush1.msra.mxu0 %v472
  %3179 = vmatprep.subr.mxu0 0.0
  %3180 = vmatpush1.msra.mxu0 %v473
  %3181 = vmatprep.mubr.f32.mxu0 %v3076
  %3182 = vmatmul.mubr.f32.gmra.mrb[0].mxu0 %v3075
  %v3183 = vpop.f32.mrb[0].mxu0
  %v3184 = vadd.f32 0.0, %v3183
  %v3185 = vpop.f32.mrb[0].mxu0
  %3186 = vmatprep.mubr.f32.mxu0 %v3079
  %3187 = vmatmul.mubr.f32.gmra.mrb[0].mxu0 %v3078
  %v3188 = vpop.f32.mrb[0].mxu0
  %v3189 = vadd.f32 0.0, %v3188
  %v3190 = vpop.f32.mrb[0].mxu0
  %3191 = vmatprep.mubr.f32.mxu0 %v3082
  %3192 = vmatmul.mubr.f32.gmra.mrb[0].mxu0 %v3081
  %v3193 = vpop.f32.mrb[0].mxu0
  %v3194 = vadd.f32 0.0, %v3193
  %v3195 = vpop.f32.mrb[0].mxu0
  %3196 = vmatprep.mubr.f32.mxu0 %v3085
  %3197 = vmatmul.mubr.f32.gmra.mrb[0].mxu0 %v3084
  %v3198 = vpop.f32.mrb[0].mxu0
  %v3199 = vadd.f32 0.0, %v3198
  %v3200 = vpop.f32.mrb[0].mxu0
  %3201 = vmatprep.mubr.f32.mxu0 %v3088
  %3202 = vmatmul.mubr.f32.gmra.mrb[0].mxu0 %v3087
  %v3203 = vpop.f32.mrb[0].mxu0
  %v3204 = vadd.f32 0.0, %v3203
  %v3205 = vpop.f32.mrb[0].mxu0
  %3206 = vmatprep.mubr.f32.mxu0 %v3091
  %3207 = vmatmul.mubr.f32.gmra.mrb[0].mxu0 %v3090
  %v3208 = vpop.f32.mrb[0].mxu0
  %v3209 = vadd.f32 0.0, %v3208
  %v3210 = vpop.f32.mrb[0].mxu0
  %3211 = vmatprep.mubr.f32.mxu0 %v3094
  %3212 = vmatmul.mubr.f32.gmra.mrb[0].mxu0 %v3093
  %v3213 = vpop.f32.mrb[0].mxu0
  %v3214 = vadd.f32 0.0, %v3213
  %v3215 = vpop.f32.mrb[0].mxu0
  %3216 = vdwg.mxu0
  %3217 = vmatprep.subr.mxu0 0.0
  %3218 = vmatpush1.msra.mxu0 %v474
  %3219 = vmatprep.subr.mxu0 0.0
  %3220 = vmatpush1.msra.mxu0 %v475
  %3221 = vmatprep.subr.mxu0 0.0
  %3222 = vmatpush1.msra.mxu0 %v476
  %3223 = vmatprep.subr.mxu0 0.0
  %3224 = vmatpush1.msra.mxu0 %v477
  %3225 = vmatprep.subr.mxu0 0.0
  %3226 = vmatpush1.msra.mxu0 0.0
  %3227 = vmatprep.subr.mxu0 0.0
  %3228 = vmatpush1.msra.mxu0 0.0
  %3229 = vmatprep.subr.mxu0 0.0
  %3230 = vmatpush1.msra.mxu0 0.0
  %3231 = vmatprep.subr.mxu0 0.0
  %3232 = vmatpush1.msra.mxu0 0.0
  %3233 = vmatprep.subr.mxu0 0.0
  %3234 = vmatpush1.msra.mxu0 0.0
  %3235 = vmatprep.subr.mxu0 0.0
  %3236 = vmatpush1.msra.mxu0 0.0
  %3237 = vmatprep.subr.mxu0 0.0
  %3238 = vmatpush1.msra.mxu0 0.0
  %3239 = vmatprep.subr.mxu0 0.0
  %3240 = vmatpush1.msra.mxu0 0.0
  %3241 = vmatprep.subr.mxu0 0.0
  %3242 = vmatpush1.msra.mxu0 0.0
  %3243 = vmatprep.subr.mxu0 0.0
  %3244 = vmatpush1.msra.mxu0 0.0
  %3245 = vmatprep.subr.mxu0 0.0
  %3246 = vmatpush1.msra.mxu0 0.0
  %3247 = vmatprep.subr.mxu0 0.0
  %3248 = vmatpush1.msra.mxu0 0.0
  %3249 = vmatprep.subr.mxu0 0.0
  %3250 = vmatpush1.msra.mxu0 0.0
  %3251 = vmatprep.subr.mxu0 0.0
  %3252 = vmatpush1.msra.mxu0 0.0
  %3253 = vmatprep.subr.mxu0 0.0
  %3254 = vmatpush1.msra.mxu0 0.0
  %3255 = vmatprep.subr.mxu0 0.0
  %3256 = vmatpush1.msra.mxu0 0.0
  %3257 = vmatprep.subr.mxu0 0.0
  %3258 = vmatpush1.msra.mxu0 0.0
  %3259 = vmatprep.subr.mxu0 0.0
  %3260 = vmatpush1.msra.mxu0 0.0
  %3261 = vmatprep.subr.mxu0 0.0
  %3262 = vmatpush1.msra.mxu0 0.0
  %3263 = vmatprep.subr.mxu0 0.0
  %3264 = vmatpush1.msra.mxu0 0.0
  %3265 = vmatprep.subr.mxu0 0.0
  %3266 = vmatpush1.msra.mxu0 0.0
  %3267 = vmatprep.subr.mxu0 0.0
  %3268 = vmatpush1.msra.mxu0 0.0
  %3269 = vmatprep.subr.mxu0 0.0
  %3270 = vmatpush1.msra.mxu0 0.0
  %3271 = vmatprep.subr.mxu0 0.0
  %3272 = vmatpush1.msra.mxu0 0.0
  %3273 = vmatprep.subr.mxu0 0.0
  %3274 = vmatpush1.msra.mxu0 0.0
  %3275 = vmatprep.subr.mxu0 0.0
  %3276 = vmatpush1.msra.mxu0 0.0
  %3277 = vmatprep.subr.mxu0 0.0
  %3278 = vmatpush1.msra.mxu0 0.0
  %3279 = vmatprep.subr.mxu0 0.0
  %3280 = vmatpush1.msra.mxu0 0.0
  %3281 = vmatprep.mubr.f32.mxu0 0.0
  %3282 = vmatmul.mubr.f32.gmra.mrb[0].mxu0 %v3097
  %v3283 = vpop.f32.mrb[0].mxu0
  %v3284 = vadd.f32 %v3184, %v3283
  %v3285 = vpop.f32.mrb[0].mxu0
  %3286 = vmatprep.mubr.f32.mxu0 0.0
  %3287 = vmatmul.mubr.f32.gmra.mrb[0].mxu0 %v3100
  %v3288 = vpop.f32.mrb[0].mxu0
  %v3289 = vadd.f32 %v3189, %v3288
  %v3290 = vpop.f32.mrb[0].mxu0
  %3291 = vmatprep.mubr.f32.mxu0 0.0
  %3292 = vmatmul.mubr.f32.gmra.mrb[0].mxu0 %v3103
  %v3293 = vpop.f32.mrb[0].mxu0
  %v3294 = vadd.f32 %v3194, %v3293
  %v3295 = vpop.f32.mrb[0].mxu0
  %3296 = vmatprep.mubr.f32.mxu0 0.0
  %3297 = vmatmul.mubr.f32.gmra.mrb[0].mxu0 %v3106
  %v3298 = vpop.f32.mrb[0].mxu0
  %v3299 = vadd.f32 %v3199, %v3298
  %v3300 = vpop.f32.mrb[0].mxu0
  %3301 = vmatprep.mubr.f32.mxu0 0.0
  %3302 = vmatmul.mubr.f32.gmra.mrb[0].mxu0 %v3109
  %v3303 = vpop.f32.mrb[0].mxu0
  %v3304 = vadd.f32 %v3204, %v3303
  %v3305 = vpop.f32.mrb[0].mxu0
  %3306 = vmatprep.mubr.f32.mxu0 0.0
  %3307 = vmatmul.mubr.f32.gmra.mrb[0].mxu0 %v3112
  %v3308 = vpop.f32.mrb[0].mxu0
  %v3309 = vadd.f32 %v3209, %v3308
  %v3310 = vpop.f32.mrb[0].mxu0
  %3311 = vmatprep.mubr.f32.mxu0 0.0
  %3312 = vmatmul.mubr.f32.gmra.mrb[0].mxu0 %v3115
  %v3313 = vpop.f32.mrb[0].mxu0
  %v3314 = vadd.f32 %v3214, %v3313
  %v3315 = vpop.f32.mrb[0].mxu0
  %3316 = vdwg.mxu0
  %s3317 = scalar_lea.vmem %s4, 56
  %v3318 = vld [vmem:[%s3317] sm:$0xff]
  %v3320 = vsel %vm966, %v3284, 0
  %v3323 = vsel %vm966, %v3289, 0
  %v3326 = vsel %vm966, %v3294, 0
  %v3329 = vsel %vm966, %v3299, 0
  %v3332 = vsel %vm966, %v3304, 0
  %v3335 = vsel %vm966, %v3309, 0
  %v3338 = vsel %vm966, %v3314, 0
  %3340 = vmatprep.subr.mxu0 0.0
  %3341 = vmatpush1.msra.mxu0 %v3318
  %3342 = vmatprep.subr.mxu0 0.0
  %3343 = vmatpush1.msra.mxu0 0.0
  %3344 = vmatprep.subr.mxu0 0.0
  %3345 = vmatpush1.msra.mxu0 0.0
  %3346 = vmatprep.subr.mxu0 0.0
  %3347 = vmatpush1.msra.mxu0 0.0
  %3348 = vmatprep.subr.mxu0 0.0
  %3349 = vmatpush1.msra.mxu0 0.0
  %3350 = vmatprep.subr.mxu0 0.0
  %3351 = vmatpush1.msra.mxu0 0.0
  %3352 = vmatprep.subr.mxu0 0.0
  %3353 = vmatpush1.msra.mxu0 0.0
  %3354 = vmatprep.subr.mxu0 0.0
  %3355 = vmatpush1.msra.mxu0 0.0
  %3356 = vmatprep.subr.mxu0 0.0
  %3357 = vmatpush1.msra.mxu0 0.0
  %3358 = vmatprep.subr.mxu0 0.0
  %3359 = vmatpush1.msra.mxu0 0.0
  %3360 = vmatprep.subr.mxu0 0.0
  %3361 = vmatpush1.msra.mxu0 0.0
  %3362 = vmatprep.subr.mxu0 0.0
  %3363 = vmatpush1.msra.mxu0 0.0
  %3364 = vmatprep.subr.mxu0 0.0
  %3365 = vmatpush1.msra.mxu0 0.0
  %3366 = vmatprep.subr.mxu0 0.0
  %3367 = vmatpush1.msra.mxu0 0.0
  %3368 = vmatprep.subr.mxu0 0.0
  %3369 = vmatpush1.msra.mxu0 0.0
  %3370 = vmatprep.subr.mxu0 0.0
  %3371 = vmatpush1.msra.mxu0 0.0
  %3372 = vmatprep.subr.mxu0 0.0
  %3373 = vmatpush1.msra.mxu0 0.0
  %3374 = vmatprep.subr.mxu0 0.0
  %3375 = vmatpush1.msra.mxu0 0.0
  %3376 = vmatprep.subr.mxu0 0.0
  %3377 = vmatpush1.msra.mxu0 0.0
  %3378 = vmatprep.subr.mxu0 0.0
  %3379 = vmatpush1.msra.mxu0 0.0
  %3380 = vmatprep.subr.mxu0 0.0
  %3381 = vmatpush1.msra.mxu0 0.0
  %3382 = vmatprep.subr.mxu0 0.0
  %3383 = vmatpush1.msra.mxu0 0.0
  %3384 = vmatprep.subr.mxu0 0.0
  %3385 = vmatpush1.msra.mxu0 0.0
  %3386 = vmatprep.subr.mxu0 0.0
  %3387 = vmatpush1.msra.mxu0 0.0
  %3388 = vmatprep.subr.mxu0 0.0
  %3389 = vmatpush1.msra.mxu0 0.0
  %3390 = vmatprep.subr.mxu0 0.0
  %3391 = vmatpush1.msra.mxu0 0.0
  %3392 = vmatprep.subr.mxu0 0.0
  %3393 = vmatpush1.msra.mxu0 0.0
  %3394 = vmatprep.subr.mxu0 0.0
  %3395 = vmatpush1.msra.mxu0 0.0
  %3396 = vmatprep.subr.mxu0 0.0
  %3397 = vmatpush1.msra.mxu0 0.0
  %3398 = vmatprep.subr.mxu0 0.0
  %3399 = vmatpush1.msra.mxu0 0.0
  %3400 = vmatprep.subr.mxu0 0.0
  %3401 = vmatpush1.msra.mxu0 0.0
  %3402 = vmatprep.subr.mxu0 0.0
  %3403 = vmatpush1.msra.mxu0 0.0
  %3404 = vmatprep.mubr.f32.mxu0 0.0
  %3405 = vmatmul.mubr.f32.gmra.mrb[0].mxu0 %v3320
  %v3406 = vpop.f32.mrb[0].mxu0
  %v3407 = vadd.f32 0.0, %v3406
  %v3408 = vpop.f32.mrb[0].mxu0
  %3409 = vmatprep.mubr.f32.mxu0 0.0
  %3410 = vmatmul.mubr.f32.gmra.mrb[0].mxu0 %v3323
  %v3411 = vpop.f32.mrb[0].mxu0
  %v3412 = vadd.f32 0.0, %v3411
  %v3413 = vpop.f32.mrb[0].mxu0
  %3414 = vmatprep.mubr.f32.mxu0 0.0
  %3415 = vmatmul.mubr.f32.gmra.mrb[0].mxu0 %v3326
  %v3416 = vpop.f32.mrb[0].mxu0
  %v3417 = vadd.f32 0.0, %v3416
  %v3418 = vpop.f32.mrb[0].mxu0
  %3419 = vmatprep.mubr.f32.mxu0 0.0
  %3420 = vmatmul.mubr.f32.gmra.mrb[0].mxu0 %v3329
  %v3421 = vpop.f32.mrb[0].mxu0
  %v3422 = vadd.f32 0.0, %v3421
  %v3423 = vpop.f32.mrb[0].mxu0
  %3424 = vmatprep.mubr.f32.mxu0 0.0
  %3425 = vmatmul.mubr.f32.gmra.mrb[0].mxu0 %v3332
  %v3426 = vpop.f32.mrb[0].mxu0
  %v3427 = vadd.f32 0.0, %v3426
  %v3428 = vpop.f32.mrb[0].mxu0
  %3429 = vmatprep.mubr.f32.mxu0 0.0
  %3430 = vmatmul.mubr.f32.gmra.mrb[0].mxu0 %v3335
  %v3431 = vpop.f32.mrb[0].mxu0
  %v3432 = vadd.f32 0.0, %v3431
  %v3433 = vpop.f32.mrb[0].mxu0
  %3434 = vmatprep.mubr.f32.mxu0 0.0
  %3435 = vmatmul.mubr.f32.gmra.mrb[0].mxu0 %v3338
  %v3436 = vpop.f32.mrb[0].mxu0
  %v3437 = vadd.f32 0.0, %v3436
  %v3438 = vpop.f32.mrb[0].mxu0
  %3439 = vdwg.mxu0
  %v3440 = vadd.f32 %v3067, %v3407
  %v3441 = vadd.f32 %v3068, %v3412
  %v3442 = vadd.f32 %v3069, %v3417
  %v3443 = vadd.f32 %v3070, %v3422
  %v3444 = vadd.f32 %v3071, %v3427
  %v3445 = vadd.f32 %v3072, %v3432
  %v3446 = vadd.f32 %v3073, %v3437
  %s3447 = scalar_lea.vmem %s3, 1344
  %v3448 = vld [vmem:[%s3447] sm:$0xff]
  %v3449 = vld [vmem:[%s3447 + $0x8] sm:$0xff]
  %v3450 = vld [vmem:[%s3447 + $0x10] sm:$0xff]
  %v3451 = vld [vmem:[%s3447 + $0x18] sm:$0xff]
  %v3452 = vld [vmem:[%s3447 + $0x20] sm:$0xff]
  %v3453 = vld [vmem:[%s3447 + $0x28] sm:$0xff]
  %v3454 = vld [vmem:[%s3447 + $0x30] sm:$0xff]
  %v3455 = vld [vmem:[%s3447 + $0x38] sm:$0xff]
  %v3456 = vld [vmem:[%s3447 + $0x40] sm:$0xff]
  %v3457 = vld [vmem:[%s3447 + $0x48] sm:$0xff]
  %v3458 = vld [vmem:[%s3447 + $0x50] sm:$0xff]
  %v3459 = vld [vmem:[%s3447 + $0x58] sm:$0xff]
  %v3460 = vld [vmem:[%s3447 + $0x60] sm:$0xff]
  %v3461 = vld [vmem:[%s3447 + $0x68] sm:$0xff]
  %v3462 = vld [vmem:[%s3447 + $0x70] sm:$0xff]
  %v3463 = vld [vmem:[%s3447 + $0x78] sm:$0xff]
  %v3464 = vld [vmem:[%s3447 + $0x80] sm:$0xff]
  %v3465 = vld [vmem:[%s3447 + $0x88] sm:$0xff]
  %v3466 = vld [vmem:[%s3447 + $0x90] sm:$0xff]
  %v3467 = vld [vmem:[%s3447 + $0x98] sm:$0xff]
  %v3468 = vld [vmem:[%s3447 + $0xa0] sm:$0xff]
  %v3470 = vsel %vm88, %v3450, 0
  %v3473 = vsel %vm88, %v3453, 0
  %v3476 = vsel %vm88, %v3456, 0
  %v3479 = vsel %vm88, %v3459, 0
  %v3482 = vsel %vm88, %v3462, 0
  %v3485 = vsel %vm88, %v3465, 0
  %v3488 = vsel %vm88, %v3468, 0
  %3490 = vmatprep.subr.mxu0 0.0
  %3491 = vmatpush1.msra.mxu0 %v442
  %3492 = vmatprep.subr.mxu0 0.0
  %3493 = vmatpush1.msra.mxu0 %v443
  %3494 = vmatprep.subr.mxu0 0.0
  %3495 = vmatpush1.msra.mxu0 %v444
  %3496 = vmatprep.subr.mxu0 0.0
  %3497 = vmatpush1.msra.mxu0 %v445
  %3498 = vmatprep.subr.mxu0 0.0
  %3499 = vmatpush1.msra.mxu0 %v446
  %3500 = vmatprep.subr.mxu0 0.0
  %3501 = vmatpush1.msra.mxu0 %v447
  %3502 = vmatprep.subr.mxu0 0.0
  %3503 = vmatpush1.msra.mxu0 %v448
  %3504 = vmatprep.subr.mxu0 0.0
  %3505 = vmatpush1.msra.mxu0 %v449
  %3506 = vmatprep.subr.mxu0 0.0
  %3507 = vmatpush1.msra.mxu0 %v450
  %3508 = vmatprep.subr.mxu0 0.0
  %3509 = vmatpush1.msra.mxu0 %v451
  %3510 = vmatprep.subr.mxu0 0.0
  %3511 = vmatpush1.msra.mxu0 %v452
  %3512 = vmatprep.subr.mxu0 0.0
  %3513 = vmatpush1.msra.mxu0 %v453
  %3514 = vmatprep.subr.mxu0 0.0
  %3515 = vmatpush1.msra.mxu0 %v454
  %3516 = vmatprep.subr.mxu0 0.0
  %3517 = vmatpush1.msra.mxu0 %v455
  %3518 = vmatprep.subr.mxu0 0.0
  %3519 = vmatpush1.msra.mxu0 %v456
  %3520 = vmatprep.subr.mxu0 0.0
  %3521 = vmatpush1.msra.mxu0 %v457
  %3522 = vmatprep.subr.mxu0 0.0
  %3523 = vmatpush1.msra.mxu0 %v458
  %3524 = vmatprep.subr.mxu0 0.0
  %3525 = vmatpush1.msra.mxu0 %v459
  %3526 = vmatprep.subr.mxu0 0.0
  %3527 = vmatpush1.msra.mxu0 %v460
  %3528 = vmatprep.subr.mxu0 0.0
  %3529 = vmatpush1.msra.mxu0 %v461
  %3530 = vmatprep.subr.mxu0 0.0
  %3531 = vmatpush1.msra.mxu0 %v462
  %3532 = vmatprep.subr.mxu0 0.0
  %3533 = vmatpush1.msra.mxu0 %v463
  %3534 = vmatprep.subr.mxu0 0.0
  %3535 = vmatpush1.msra.mxu0 %v464
  %3536 = vmatprep.subr.mxu0 0.0
  %3537 = vmatpush1.msra.mxu0 %v465
  %3538 = vmatprep.subr.mxu0 0.0
  %3539 = vmatpush1.msra.mxu0 %v466
  %3540 = vmatprep.subr.mxu0 0.0
  %3541 = vmatpush1.msra.mxu0 %v467
  %3542 = vmatprep.subr.mxu0 0.0
  %3543 = vmatpush1.msra.mxu0 %v468
  %3544 = vmatprep.subr.mxu0 0.0
  %3545 = vmatpush1.msra.mxu0 %v469
  %3546 = vmatprep.subr.mxu0 0.0
  %3547 = vmatpush1.msra.mxu0 %v470
  %3548 = vmatprep.subr.mxu0 0.0
  %3549 = vmatpush1.msra.mxu0 %v471
  %3550 = vmatprep.subr.mxu0 0.0
  %3551 = vmatpush1.msra.mxu0 %v472
  %3552 = vmatprep.subr.mxu0 0.0
  %3553 = vmatpush1.msra.mxu0 %v473
  %3554 = vmatprep.mubr.f32.mxu0 %v3449
  %3555 = vmatmul.mubr.f32.gmra.mrb[0].mxu0 %v3448
  %v3556 = vpop.f32.mrb[0].mxu0
  %v3557 = vadd.f32 0.0, %v3556
  %v3558 = vpop.f32.mrb[0].mxu0
  %3559 = vmatprep.mubr.f32.mxu0 %v3452
  %3560 = vmatmul.mubr.f32.gmra.mrb[0].mxu0 %v3451
  %v3561 = vpop.f32.mrb[0].mxu0
  %v3562 = vadd.f32 0.0, %v3561
  %v3563 = vpop.f32.mrb[0].mxu0
  %3564 = vmatprep.mubr.f32.mxu0 %v3455
  %3565 = vmatmul.mubr.f32.gmra.mrb[0].mxu0 %v3454
  %v3566 = vpop.f32.mrb[0].mxu0
  %v3567 = vadd.f32 0.0, %v3566
  %v3568 = vpop.f32.mrb[0].mxu0
  %3569 = vmatprep.mubr.f32.mxu0 %v3458
  %3570 = vmatmul.mubr.f32.gmra.mrb[0].mxu0 %v3457
  %v3571 = vpop.f32.mrb[0].mxu0
  %v3572 = vadd.f32 0.0, %v3571
  %v3573 = vpop.f32.mrb[0].mxu0
  %3574 = vmatprep.mubr.f32.mxu0 %v3461
  %3575 = vmatmul.mubr.f32.gmra.mrb[0].mxu0 %v3460
  %v3576 = vpop.f32.mrb[0].mxu0
  %v3577 = vadd.f32 0.0, %v3576
  %v3578 = vpop.f32.mrb[0].mxu0
  %3579 = vmatprep.mubr.f32.mxu0 %v3464
  %3580 = vmatmul.mubr.f32.gmra.mrb[0].mxu0 %v3463
  %v3581 = vpop.f32.mrb[0].mxu0
  %v3582 = vadd.f32 0.0, %v3581
  %v3583 = vpop.f32.mrb[0].mxu0
  %3584 = vmatprep.mubr.f32.mxu0 %v3467
  %3585 = vmatmul.mubr.f32.gmra.mrb[0].mxu0 %v3466
  %v3586 = vpop.f32.mrb[0].mxu0
  %v3587 = vadd.f32 0.0, %v3586
  %v3588 = vpop.f32.mrb[0].mxu0
  %3589 = vdwg.mxu0
  %3590 = vmatprep.subr.mxu0 0.0
  %3591 = vmatpush1.msra.mxu0 %v474
  %3592 = vmatprep.subr.mxu0 0.0
  %3593 = vmatpush1.msra.mxu0 %v475
  %3594 = vmatprep.subr.mxu0 0.0
  %3595 = vmatpush1.msra.mxu0 %v476
  %3596 = vmatprep.subr.mxu0 0.0
  %3597 = vmatpush1.msra.mxu0 %v477
  %3598 = vmatprep.subr.mxu0 0.0
  %3599 = vmatpush1.msra.mxu0 0.0
  %3600 = vmatprep.subr.mxu0 0.0
  %3601 = vmatpush1.msra.mxu0 0.0
  %3602 = vmatprep.subr.mxu0 0.0
  %3603 = vmatpush1.msra.mxu0 0.0
  %3604 = vmatprep.subr.mxu0 0.0
  %3605 = vmatpush1.msra.mxu0 0.0
  %3606 = vmatprep.subr.mxu0 0.0
  %3607 = vmatpush1.msra.mxu0 0.0
  %3608 = vmatprep.subr.mxu0 0.0
  %3609 = vmatpush1.msra.mxu0 0.0
  %3610 = vmatprep.subr.mxu0 0.0
  %3611 = vmatpush1.msra.mxu0 0.0
  %3612 = vmatprep.subr.mxu0 0.0
  %3613 = vmatpush1.msra.mxu0 0.0
  %3614 = vmatprep.subr.mxu0 0.0
  %3615 = vmatpush1.msra.mxu0 0.0
  %3616 = vmatprep.subr.mxu0 0.0
  %3617 = vmatpush1.msra.mxu0 0.0
  %3618 = vmatprep.subr.mxu0 0.0
  %3619 = vmatpush1.msra.mxu0 0.0
  %3620 = vmatprep.subr.mxu0 0.0
  %3621 = vmatpush1.msra.mxu0 0.0
  %3622 = vmatprep.subr.mxu0 0.0
  %3623 = vmatpush1.msra.mxu0 0.0
  %3624 = vmatprep.subr.mxu0 0.0
  %3625 = vmatpush1.msra.mxu0 0.0
  %3626 = vmatprep.subr.mxu0 0.0
  %3627 = vmatpush1.msra.mxu0 0.0
  %3628 = vmatprep.subr.mxu0 0.0
  %3629 = vmatpush1.msra.mxu0 0.0
  %3630 = vmatprep.subr.mxu0 0.0
  %3631 = vmatpush1.msra.mxu0 0.0
  %3632 = vmatprep.subr.mxu0 0.0
  %3633 = vmatpush1.msra.mxu0 0.0
  %3634 = vmatprep.subr.mxu0 0.0
  %3635 = vmatpush1.msra.mxu0 0.0
  %3636 = vmatprep.subr.mxu0 0.0
  %3637 = vmatpush1.msra.mxu0 0.0
  %3638 = vmatprep.subr.mxu0 0.0
  %3639 = vmatpush1.msra.mxu0 0.0
  %3640 = vmatprep.subr.mxu0 0.0
  %3641 = vmatpush1.msra.mxu0 0.0
  %3642 = vmatprep.subr.mxu0 0.0
  %3643 = vmatpush1.msra.mxu0 0.0
  %3644 = vmatprep.subr.mxu0 0.0
  %3645 = vmatpush1.msra.mxu0 0.0
  %3646 = vmatprep.subr.mxu0 0.0
  %3647 = vmatpush1.msra.mxu0 0.0
  %3648 = vmatprep.subr.mxu0 0.0
  %3649 = vmatpush1.msra.mxu0 0.0
  %3650 = vmatprep.subr.mxu0 0.0
  %3651 = vmatpush1.msra.mxu0 0.0
  %3652 = vmatprep.subr.mxu0 0.0
  %3653 = vmatpush1.msra.mxu0 0.0
  %3654 = vmatprep.mubr.f32.mxu0 0.0
  %3655 = vmatmul.mubr.f32.gmra.mrb[0].mxu0 %v3470
  %v3656 = vpop.f32.mrb[0].mxu0
  %v3657 = vadd.f32 %v3557, %v3656
  %v3658 = vpop.f32.mrb[0].mxu0
  %3659 = vmatprep.mubr.f32.mxu0 0.0
  %3660 = vmatmul.mubr.f32.gmra.mrb[0].mxu0 %v3473
  %v3661 = vpop.f32.mrb[0].mxu0
  %v3662 = vadd.f32 %v3562, %v3661
  %v3663 = vpop.f32.mrb[0].mxu0
  %3664 = vmatprep.mubr.f32.mxu0 0.0
  %3665 = vmatmul.mubr.f32.gmra.mrb[0].mxu0 %v3476
  %v3666 = vpop.f32.mrb[0].mxu0
  %v3667 = vadd.f32 %v3567, %v3666
  %v3668 = vpop.f32.mrb[0].mxu0
  %3669 = vmatprep.mubr.f32.mxu0 0.0
  %3670 = vmatmul.mubr.f32.gmra.mrb[0].mxu0 %v3479
  %v3671 = vpop.f32.mrb[0].mxu0
  %v3672 = vadd.f32 %v3572, %v3671
  %v3673 = vpop.f32.mrb[0].mxu0
  %3674 = vmatprep.mubr.f32.mxu0 0.0
  %3675 = vmatmul.mubr.f32.gmra.mrb[0].mxu0 %v3482
  %v3676 = vpop.f32.mrb[0].mxu0
  %v3677 = vadd.f32 %v3577, %v3676
  %v3678 = vpop.f32.mrb[0].mxu0
  %3679 = vmatprep.mubr.f32.mxu0 0.0
  %3680 = vmatmul.mubr.f32.gmra.mrb[0].mxu0 %v3485
  %v3681 = vpop.f32.mrb[0].mxu0
  %v3682 = vadd.f32 %v3582, %v3681
  %v3683 = vpop.f32.mrb[0].mxu0
  %3684 = vmatprep.mubr.f32.mxu0 0.0
  %3685 = vmatmul.mubr.f32.gmra.mrb[0].mxu0 %v3488
  %v3686 = vpop.f32.mrb[0].mxu0
  %v3687 = vadd.f32 %v3587, %v3686
  %v3688 = vpop.f32.mrb[0].mxu0
  %3689 = vdwg.mxu0
  %s3690 = scalar_lea.vmem %s4, 64
  %v3691 = vld [vmem:[%s3690] sm:$0xff]
  %v3693 = vsel %vm966, %v3657, 0
  %v3696 = vsel %vm966, %v3662, 0
  %v3699 = vsel %vm966, %v3667, 0
  %v3702 = vsel %vm966, %v3672, 0
  %v3705 = vsel %vm966, %v3677, 0
  %v3708 = vsel %vm966, %v3682, 0
  %v3711 = vsel %vm966, %v3687, 0
  %3713 = vmatprep.subr.mxu0 0.0
  %3714 = vmatpush1.msra.mxu0 %v3691
  %3715 = vmatprep.subr.mxu0 0.0
  %3716 = vmatpush1.msra.mxu0 0.0
  %3717 = vmatprep.subr.mxu0 0.0
  %3718 = vmatpush1.msra.mxu0 0.0
  %3719 = vmatprep.subr.mxu0 0.0
  %3720 = vmatpush1.msra.mxu0 0.0
  %3721 = vmatprep.subr.mxu0 0.0
  %3722 = vmatpush1.msra.mxu0 0.0
  %3723 = vmatprep.subr.mxu0 0.0
  %3724 = vmatpush1.msra.mxu0 0.0
  %3725 = vmatprep.subr.mxu0 0.0
  %3726 = vmatpush1.msra.mxu0 0.0
  %3727 = vmatprep.subr.mxu0 0.0
  %3728 = vmatpush1.msra.mxu0 0.0
  %3729 = vmatprep.subr.mxu0 0.0
  %3730 = vmatpush1.msra.mxu0 0.0
  %3731 = vmatprep.subr.mxu0 0.0
  %3732 = vmatpush1.msra.mxu0 0.0
  %3733 = vmatprep.subr.mxu0 0.0
  %3734 = vmatpush1.msra.mxu0 0.0
  %3735 = vmatprep.subr.mxu0 0.0
  %3736 = vmatpush1.msra.mxu0 0.0
  %3737 = vmatprep.subr.mxu0 0.0
  %3738 = vmatpush1.msra.mxu0 0.0
  %3739 = vmatprep.subr.mxu0 0.0
  %3740 = vmatpush1.msra.mxu0 0.0
  %3741 = vmatprep.subr.mxu0 0.0
  %3742 = vmatpush1.msra.mxu0 0.0
  %3743 = vmatprep.subr.mxu0 0.0
  %3744 = vmatpush1.msra.mxu0 0.0
  %3745 = vmatprep.subr.mxu0 0.0
  %3746 = vmatpush1.msra.mxu0 0.0
  %3747 = vmatprep.subr.mxu0 0.0
  %3748 = vmatpush1.msra.mxu0 0.0
  %3749 = vmatprep.subr.mxu0 0.0
  %3750 = vmatpush1.msra.mxu0 0.0
  %3751 = vmatprep.subr.mxu0 0.0
  %3752 = vmatpush1.msra.mxu0 0.0
  %3753 = vmatprep.subr.mxu0 0.0
  %3754 = vmatpush1.msra.mxu0 0.0
  %3755 = vmatprep.subr.mxu0 0.0
  %3756 = vmatpush1.msra.mxu0 0.0
  %3757 = vmatprep.subr.mxu0 0.0
  %3758 = vmatpush1.msra.mxu0 0.0
  %3759 = vmatprep.subr.mxu0 0.0
  %3760 = vmatpush1.msra.mxu0 0.0
  %3761 = vmatprep.subr.mxu0 0.0
  %3762 = vmatpush1.msra.mxu0 0.0
  %3763 = vmatprep.subr.mxu0 0.0
  %3764 = vmatpush1.msra.mxu0 0.0
  %3765 = vmatprep.subr.mxu0 0.0
  %3766 = vmatpush1.msra.mxu0 0.0
  %3767 = vmatprep.subr.mxu0 0.0
  %3768 = vmatpush1.msra.mxu0 0.0
  %3769 = vmatprep.subr.mxu0 0.0
  %3770 = vmatpush1.msra.mxu0 0.0
  %3771 = vmatprep.subr.mxu0 0.0
  %3772 = vmatpush1.msra.mxu0 0.0
  %3773 = vmatprep.subr.mxu0 0.0
  %3774 = vmatpush1.msra.mxu0 0.0
  %3775 = vmatprep.subr.mxu0 0.0
  %3776 = vmatpush1.msra.mxu0 0.0
  %3777 = vmatprep.mubr.f32.mxu0 0.0
  %3778 = vmatmul.mubr.f32.gmra.mrb[0].mxu0 %v3693
  %v3779 = vpop.f32.mrb[0].mxu0
  %v3780 = vadd.f32 0.0, %v3779
  %v3781 = vpop.f32.mrb[0].mxu0
  %3782 = vmatprep.mubr.f32.mxu0 0.0
  %3783 = vmatmul.mubr.f32.gmra.mrb[0].mxu0 %v3696
  %v3784 = vpop.f32.mrb[0].mxu0
  %v3785 = vadd.f32 0.0, %v3784
  %v3786 = vpop.f32.mrb[0].mxu0
  %3787 = vmatprep.mubr.f32.mxu0 0.0
  %3788 = vmatmul.mubr.f32.gmra.mrb[0].mxu0 %v3699
  %v3789 = vpop.f32.mrb[0].mxu0
  %v3790 = vadd.f32 0.0, %v3789
  %v3791 = vpop.f32.mrb[0].mxu0
  %3792 = vmatprep.mubr.f32.mxu0 0.0
  %3793 = vmatmul.mubr.f32.gmra.mrb[0].mxu0 %v3702
  %v3794 = vpop.f32.mrb[0].mxu0
  %v3795 = vadd.f32 0.0, %v3794
  %v3796 = vpop.f32.mrb[0].mxu0
  %3797 = vmatprep.mubr.f32.mxu0 0.0
  %3798 = vmatmul.mubr.f32.gmra.mrb[0].mxu0 %v3705
  %v3799 = vpop.f32.mrb[0].mxu0
  %v3800 = vadd.f32 0.0, %v3799
  %v3801 = vpop.f32.mrb[0].mxu0
  %3802 = vmatprep.mubr.f32.mxu0 0.0
  %3803 = vmatmul.mubr.f32.gmra.mrb[0].mxu0 %v3708
  %v3804 = vpop.f32.mrb[0].mxu0
  %v3805 = vadd.f32 0.0, %v3804
  %v3806 = vpop.f32.mrb[0].mxu0
  %3807 = vmatprep.mubr.f32.mxu0 0.0
  %3808 = vmatmul.mubr.f32.gmra.mrb[0].mxu0 %v3711
  %v3809 = vpop.f32.mrb[0].mxu0
  %v3810 = vadd.f32 0.0, %v3809
  %v3811 = vpop.f32.mrb[0].mxu0
  %3812 = vdwg.mxu0
  %v3813 = vadd.f32 %v3440, %v3780
  %v3814 = vadd.f32 %v3441, %v3785
  %v3815 = vadd.f32 %v3442, %v3790
  %v3816 = vadd.f32 %v3443, %v3795
  %v3817 = vadd.f32 %v3444, %v3800
  %v3818 = vadd.f32 %v3445, %v3805
  %v3819 = vadd.f32 %v3446, %v3810
  %v3820 = vld [vmem:[%s5] sm:$0x1]
  %v3822 = vlaneseq
  %v3823 = vshrl.u32 %v3822, 7
  %v3824 = vsub.s32 0, %v3823
  %v3825 = vrot.slane %v3820, %v3824
  %v3827 = vadd.f32 %v3813, %v3825
  %v3828 = vadd.f32 %v3814, %v3825
  %v3829 = vadd.f32 %v3815, %v3825
  %v3830 = vadd.f32 %v3816, %v3825
  %v3831 = vadd.f32 %v3817, %v3825
  %v3832 = vadd.f32 %v3818, %v3825
  %v3833 = vadd.f32 %v3819, %v3825
  %v3834 = vmax.f32 %v3827, 0.0
  %v3835 = vmax.f32 %v3828, 0.0
  %v3836 = vmax.f32 %v3829, 0.0
  %v3837 = vmax.f32 %v3830, 0.0
  %v3838 = vmax.f32 %v3831, 0.0
  %v3839 = vmax.f32 %v3832, 0.0
  %v3840 = vmax.f32 %v3833, 0.0
  %v3841 = vld [vmem:[%s6] sm:$0xff]
  %vm3842 = vcmask 457728
  %v3844 = vsel %vm3842, %v3841, 0
  %3846 = vmatprep.subr.mxu0 0.0
  %3847 = vmatpush1.msra.mxu0 %v3834
  %3848 = vmatprep.subr.mxu0 0.0
  %3849 = vmatpush1.msra.mxu0 %v3835
  %3850 = vmatprep.subr.mxu0 0.0
  %3851 = vmatpush1.msra.mxu0 %v3836
  %3852 = vmatprep.subr.mxu0 0.0
  %3853 = vmatpush1.msra.mxu0 %v3837
  %3854 = vmatprep.subr.mxu0 0.0
  %3855 = vmatpush1.msra.mxu0 %v3838
  %3856 = vmatprep.subr.mxu0 0.0
  %3857 = vmatpush1.msra.mxu0 %v3839
  %3858 = vmatprep.subr.mxu0 0.0
  %3859 = vmatpush1.msra.mxu0 %v3840
  %3860 = vmatprep.subr.mxu0 0.0
  %3861 = vmatpush1.msra.mxu0 0.0
  %3862 = vmatprep.subr.mxu0 0.0
  %3863 = vmatpush1.msra.mxu0 0.0
  %3864 = vmatprep.subr.mxu0 0.0
  %3865 = vmatpush1.msra.mxu0 0.0
  %3866 = vmatprep.subr.mxu0 0.0
  %3867 = vmatpush1.msra.mxu0 0.0
  %3868 = vmatprep.subr.mxu0 0.0
  %3869 = vmatpush1.msra.mxu0 0.0
  %3870 = vmatprep.subr.mxu0 0.0
  %3871 = vmatpush1.msra.mxu0 0.0
  %3872 = vmatprep.subr.mxu0 0.0
  %3873 = vmatpush1.msra.mxu0 0.0
  %3874 = vmatprep.subr.mxu0 0.0
  %3875 = vmatpush1.msra.mxu0 0.0
  %3876 = vmatprep.subr.mxu0 0.0
  %3877 = vmatpush1.msra.mxu0 0.0
  %3878 = vmatprep.subr.mxu0 0.0
  %3879 = vmatpush1.msra.mxu0 0.0
  %3880 = vmatprep.subr.mxu0 0.0
  %3881 = vmatpush1.msra.mxu0 0.0
  %3882 = vmatprep.subr.mxu0 0.0
  %3883 = vmatpush1.msra.mxu0 0.0
  %3884 = vmatprep.subr.mxu0 0.0
  %3885 = vmatpush1.msra.mxu0 0.0
  %3886 = vmatprep.subr.mxu0 0.0
  %3887 = vmatpush1.msra.mxu0 0.0
  %3888 = vmatprep.subr.mxu0 0.0
  %3889 = vmatpush1.msra.mxu0 0.0
  %3890 = vmatprep.subr.mxu0 0.0
  %3891 = vmatpush1.msra.mxu0 0.0
  %3892 = vmatprep.subr.mxu0 0.0
  %3893 = vmatpush1.msra.mxu0 0.0
  %3894 = vmatprep.subr.mxu0 0.0
  %3895 = vmatpush1.msra.mxu0 0.0
  %3896 = vmatprep.subr.mxu0 0.0
  %3897 = vmatpush1.msra.mxu0 0.0
  %3898 = vmatprep.subr.mxu0 0.0
  %3899 = vmatpush1.msra.mxu0 0.0
  %3900 = vmatprep.subr.mxu0 0.0
  %3901 = vmatpush1.msra.mxu0 0.0
  %3902 = vmatprep.subr.mxu0 0.0
  %3903 = vmatpush1.msra.mxu0 0.0
  %3904 = vmatprep.subr.mxu0 0.0
  %3905 = vmatpush1.msra.mxu0 0.0
  %3906 = vmatprep.subr.mxu0 0.0
  %3907 = vmatpush1.msra.mxu0 0.0
  %3908 = vmatprep.subr.mxu0 0.0
  %3909 = vmatpush1.msra.mxu0 0.0
  %3910 = vmatprep.mubr.f32.mxu0 0.0
  %3911 = vmatmul.mubr.f32.gmra.mrb[0].mxu0 %v3844
  %v3912 = vpop.f32.mrb[0].mxu0
  %v3913 = vadd.f32 0.0, %v3912
  %v3914 = vpop.f32.mrb[0].mxu0
  %3915 = vdwg.mxu0
  %v3916 = vld [vmem:[%s7] sm:$0xff]
  %v3917 = vld [vmem:[%s7 + $0x8] sm:$0xff]
  %s3918 = scalar_lea.vmem %s6, 8
  %v3919 = vld [vmem:[%s3918] sm:$0xff]
  %v3921 = vsel %vm3842, %v3919, 0
  %3923 = vmatprep.subr.mxu0 0.0
  %3924 = vmatpush1.msra.mxu0 %v3834
  %3925 = vmatprep.subr.mxu0 0.0
  %3926 = vmatpush1.msra.mxu0 %v3835
  %3927 = vmatprep.subr.mxu0 0.0
  %3928 = vmatpush1.msra.mxu0 %v3836
  %3929 = vmatprep.subr.mxu0 0.0
  %3930 = vmatpush1.msra.mxu0 %v3837
  %3931 = vmatprep.subr.mxu0 0.0
  %3932 = vmatpush1.msra.mxu0 %v3838
  %3933 = vmatprep.subr.mxu0 0.0
  %3934 = vmatpush1.msra.mxu0 %v3839
  %3935 = vmatprep.subr.mxu0 0.0
  %3936 = vmatpush1.msra.mxu0 %v3840
  %3937 = vmatprep.subr.mxu0 0.0
  %3938 = vmatpush1.msra.mxu0 0.0
  %3939 = vmatprep.subr.mxu0 0.0
  %3940 = vmatpush1.msra.mxu0 0.0
  %3941 = vmatprep.subr.mxu0 0.0
  %3942 = vmatpush1.msra.mxu0 0.0
  %3943 = vmatprep.subr.mxu0 0.0
  %3944 = vmatpush1.msra.mxu0 0.0
  %3945 = vmatprep.subr.mxu0 0.0
  %3946 = vmatpush1.msra.mxu0 0.0
  %3947 = vmatprep.subr.mxu0 0.0
  %3948 = vmatpush1.msra.mxu0 0.0
  %3949 = vmatprep.subr.mxu0 0.0
  %3950 = vmatpush1.msra.mxu0 0.0
  %3951 = vmatprep.subr.mxu0 0.0
  %3952 = vmatpush1.msra.mxu0 0.0
  %3953 = vmatprep.subr.mxu0 0.0
  %3954 = vmatpush1.msra.mxu0 0.0
  %3955 = vmatprep.subr.mxu0 0.0
  %3956 = vmatpush1.msra.mxu0 0.0
  %3957 = vmatprep.subr.mxu0 0.0
  %3958 = vmatpush1.msra.mxu0 0.0
  %3959 = vmatprep.subr.mxu0 0.0
  %3960 = vmatpush1.msra.mxu0 0.0
  %3961 = vmatprep.subr.mxu0 0.0
  %3962 = vmatpush1.msra.mxu0 0.0
  %3963 = vmatprep.subr.mxu0 0.0
  %3964 = vmatpush1.msra.mxu0 0.0
  %3965 = vmatprep.subr.mxu0 0.0
  %3966 = vmatpush1.msra.mxu0 0.0
  %3967 = vmatprep.subr.mxu0 0.0
  %3968 = vmatpush1.msra.mxu0 0.0
  %3969 = vmatprep.subr.mxu0 0.0
  %3970 = vmatpush1.msra.mxu0 0.0
  %3971 = vmatprep.subr.mxu0 0.0
  %3972 = vmatpush1.msra.mxu0 0.0
  %3973 = vmatprep.subr.mxu0 0.0
  %3974 = vmatpush1.msra.mxu0 0.0
  %3975 = vmatprep.subr.mxu0 0.0
  %3976 = vmatpush1.msra.mxu0 0.0
  %3977 = vmatprep.subr.mxu0 0.0
  %3978 = vmatpush1.msra.mxu0 0.0
  %3979 = vmatprep.subr.mxu0 0.0
  %3980 = vmatpush1.msra.mxu0 0.0
  %3981 = vmatprep.subr.mxu0 0.0
  %3982 = vmatpush1.msra.mxu0 0.0
  %3983 = vmatprep.subr.mxu0 0.0
  %3984 = vmatpush1.msra.mxu0 0.0
  %3985 = vmatprep.subr.mxu0 0.0
  %3986 = vmatpush1.msra.mxu0 0.0
  %3987 = vmatprep.mubr.f32.mxu0 0.0
  %3988 = vmatmul.mubr.f32.gmra.mrb[0].mxu0 %v3921
  %v3989 = vpop.f32.mrb[0].mxu0
  %v3990 = vadd.f32 0.0, %v3989
  %v3991 = vpop.f32.mrb[0].mxu0
  %3992 = vdwg.mxu0
  %s3993 = scalar_lea.vmem %s7, 16
  %v3994 = vld [vmem:[%s3993] sm:$0xff]
  %v3995 = vld [vmem:[%s3993 + $0x8] sm:$0xff]
  %vm3996 = vcmask 130048
  %v3998 = vsel %vm3996, %v3990, 0
  %4000 = vmatprep.subr.mxu0 0.0
  %4001 = vmatpush1.msra.mxu0 %v3994
  %4002 = vmatprep.subr.mxu0 0.0
  %4003 = vmatpush1.msra.mxu0 %v3995
  %4004 = vmatprep.subr.mxu0 0.0
  %4005 = vmatpush1.msra.mxu0 0.0
  %4006 = vmatprep.subr.mxu0 0.0
  %4007 = vmatpush1.msra.mxu0 0.0
  %4008 = vmatprep.subr.mxu0 0.0
  %4009 = vmatpush1.msra.mxu0 0.0
  %4010 = vmatprep.subr.mxu0 0.0
  %4011 = vmatpush1.msra.mxu0 0.0
  %4012 = vmatprep.subr.mxu0 0.0
  %4013 = vmatpush1.msra.mxu0 0.0
  %4014 = vmatprep.subr.mxu0 0.0
  %4015 = vmatpush1.msra.mxu0 0.0
  %4016 = vmatprep.subr.mxu0 0.0
  %4017 = vmatpush1.msra.mxu0 0.0
  %4018 = vmatprep.subr.mxu0 0.0
  %4019 = vmatpush1.msra.mxu0 0.0
  %4020 = vmatprep.subr.mxu0 0.0
  %4021 = vmatpush1.msra.mxu0 0.0
  %4022 = vmatprep.subr.mxu0 0.0
  %4023 = vmatpush1.msra.mxu0 0.0
  %4024 = vmatprep.subr.mxu0 0.0
  %4025 = vmatpush1.msra.mxu0 0.0
  %4026 = vmatprep.subr.mxu0 0.0
  %4027 = vmatpush1.msra.mxu0 0.0
  %4028 = vmatprep.subr.mxu0 0.0
  %4029 = vmatpush1.msra.mxu0 0.0
  %4030 = vmatprep.subr.mxu0 0.0
  %4031 = vmatpush1.msra.mxu0 0.0
  %4032 = vmatprep.subr.mxu0 0.0
  %4033 = vmatpush1.msra.mxu0 0.0
  %4034 = vmatprep.subr.mxu0 0.0
  %4035 = vmatpush1.msra.mxu0 0.0
  %4036 = vmatprep.subr.mxu0 0.0
  %4037 = vmatpush1.msra.mxu0 0.0
  %4038 = vmatprep.subr.mxu0 0.0
  %4039 = vmatpush1.msra.mxu0 0.0
  %4040 = vmatprep.subr.mxu0 0.0
  %4041 = vmatpush1.msra.mxu0 0.0
  %4042 = vmatprep.subr.mxu0 0.0
  %4043 = vmatpush1.msra.mxu0 0.0
  %4044 = vmatprep.subr.mxu0 0.0
  %4045 = vmatpush1.msra.mxu0 0.0
  %4046 = vmatprep.subr.mxu0 0.0
  %4047 = vmatpush1.msra.mxu0 0.0
  %4048 = vmatprep.subr.mxu0 0.0
  %4049 = vmatpush1.msra.mxu0 0.0
  %4050 = vmatprep.subr.mxu0 0.0
  %4051 = vmatpush1.msra.mxu0 0.0
  %4052 = vmatprep.subr.mxu0 0.0
  %4053 = vmatpush1.msra.mxu0 0.0
  %4054 = vmatprep.subr.mxu0 0.0
  %4055 = vmatpush1.msra.mxu0 0.0
  %4056 = vmatprep.subr.mxu0 0.0
  %4057 = vmatpush1.msra.mxu0 0.0
  %4058 = vmatprep.subr.mxu0 0.0
  %4059 = vmatpush1.msra.mxu0 0.0
  %4060 = vmatprep.subr.mxu0 0.0
  %4061 = vmatpush1.msra.mxu0 0.0
  %4062 = vmatprep.subr.mxu0 0.0
  %4063 = vmatpush1.msra.mxu0 0.0
  %4064 = vmatprep.mubr.f32.mxu0 0.0
  %4065 = vmatmul.mubr.f32.gmra.mrb[0].mxu0 %v3998
  %v4066 = vpop.f32.mrb[0].mxu0
  %v4067 = vadd.f32 0.0, %v4066
  %v4068 = vpop.f32.mrb[0].mxu0
  %4069 = vdwg.mxu0
  %v4071 = vsel %vm3996, %v3913, 0
  %4073 = vmatprep.subr.mxu0 0.0
  %4074 = vmatpush1.msra.mxu0 %v3916
  %4075 = vmatprep.subr.mxu0 0.0
  %4076 = vmatpush1.msra.mxu0 %v3917
  %4077 = vmatprep.subr.mxu0 0.0
  %4078 = vmatpush1.msra.mxu0 0.0
  %4079 = vmatprep.subr.mxu0 0.0
  %4080 = vmatpush1.msra.mxu0 0.0
  %4081 = vmatprep.subr.mxu0 0.0
  %4082 = vmatpush1.msra.mxu0 0.0
  %4083 = vmatprep.subr.mxu0 0.0
  %4084 = vmatpush1.msra.mxu0 0.0
  %4085 = vmatprep.subr.mxu0 0.0
  %4086 = vmatpush1.msra.mxu0 0.0
  %4087 = vmatprep.subr.mxu0 0.0
  %4088 = vmatpush1.msra.mxu0 0.0
  %4089 = vmatprep.subr.mxu0 0.0
  %4090 = vmatpush1.msra.mxu0 0.0
  %4091 = vmatprep.subr.mxu0 0.0
  %4092 = vmatpush1.msra.mxu0 0.0
  %4093 = vmatprep.subr.mxu0 0.0
  %4094 = vmatpush1.msra.mxu0 0.0
  %4095 = vmatprep.subr.mxu0 0.0
  %4096 = vmatpush1.msra.mxu0 0.0
  %4097 = vmatprep.subr.mxu0 0.0
  %4098 = vmatpush1.msra.mxu0 0.0
  %4099 = vmatprep.subr.mxu0 0.0
  %4100 = vmatpush1.msra.mxu0 0.0
  %4101 = vmatprep.subr.mxu0 0.0
  %4102 = vmatpush1.msra.mxu0 0.0
  %4103 = vmatprep.subr.mxu0 0.0
  %4104 = vmatpush1.msra.mxu0 0.0
  %4105 = vmatprep.subr.mxu0 0.0
  %4106 = vmatpush1.msra.mxu0 0.0
  %4107 = vmatprep.subr.mxu0 0.0
  %4108 = vmatpush1.msra.mxu0 0.0
  %4109 = vmatprep.subr.mxu0 0.0
  %4110 = vmatpush1.msra.mxu0 0.0
  %4111 = vmatprep.subr.mxu0 0.0
  %4112 = vmatpush1.msra.mxu0 0.0
  %4113 = vmatprep.subr.mxu0 0.0
  %4114 = vmatpush1.msra.mxu0 0.0
  %4115 = vmatprep.subr.mxu0 0.0
  %4116 = vmatpush1.msra.mxu0 0.0
  %4117 = vmatprep.subr.mxu0 0.0
  %4118 = vmatpush1.msra.mxu0 0.0
  %4119 = vmatprep.subr.mxu0 0.0
  %4120 = vmatpush1.msra.mxu0 0.0
  %4121 = vmatprep.subr.mxu0 0.0
  %4122 = vmatpush1.msra.mxu0 0.0
  %4123 = vmatprep.subr.mxu0 0.0
  %4124 = vmatpush1.msra.mxu0 0.0
  %4125 = vmatprep.subr.mxu0 0.0
  %4126 = vmatpush1.msra.mxu0 0.0
  %4127 = vmatprep.subr.mxu0 0.0
  %4128 = vmatpush1.msra.mxu0 0.0
  %4129 = vmatprep.subr.mxu0 0.0
  %4130 = vmatpush1.msra.mxu0 0.0
  %4131 = vmatprep.subr.mxu0 0.0
  %4132 = vmatpush1.msra.mxu0 0.0
  %4133 = vmatprep.subr.mxu0 0.0
  %4134 = vmatpush1.msra.mxu0 0.0
  %4135 = vmatprep.subr.mxu0 0.0
  %4136 = vmatpush1.msra.mxu0 0.0
  %4137 = vmatprep.mubr.f32.mxu0 0.0
  %4138 = vmatmul.mubr.f32.gmra.mrb[0].mxu0 %v4071
  %v4139 = vpop.f32.mrb[0].mxu0
  %v4140 = vadd.f32 %v4067, %v4139
  %v4141 = vpop.f32.mrb[0].mxu0
  %4142 = vdwg.mxu0
  %s4143 = scalar_lea.vmem %s6, 16
  %v4144 = vld [vmem:[%s4143] sm:$0xff]
  %v4146 = vsel %vm3842, %v4144, 0
  %4148 = vmatprep.subr.mxu0 0.0
  %4149 = vmatpush1.msra.mxu0 %v3834
  %4150 = vmatprep.subr.mxu0 0.0
  %4151 = vmatpush1.msra.mxu0 %v3835
  %4152 = vmatprep.subr.mxu0 0.0
  %4153 = vmatpush1.msra.mxu0 %v3836
  %4154 = vmatprep.subr.mxu0 0.0
  %4155 = vmatpush1.msra.mxu0 %v3837
  %4156 = vmatprep.subr.mxu0 0.0
  %4157 = vmatpush1.msra.mxu0 %v3838
  %4158 = vmatprep.subr.mxu0 0.0
  %4159 = vmatpush1.msra.mxu0 %v3839
  %4160 = vmatprep.subr.mxu0 0.0
  %4161 = vmatpush1.msra.mxu0 %v3840
  %4162 = vmatprep.subr.mxu0 0.0
  %4163 = vmatpush1.msra.mxu0 0.0
  %4164 = vmatprep.subr.mxu0 0.0
  %4165 = vmatpush1.msra.mxu0 0.0
  %4166 = vmatprep.subr.mxu0 0.0
  %4167 = vmatpush1.msra.mxu0 0.0
  %4168 = vmatprep.subr.mxu0 0.0
  %4169 = vmatpush1.msra.mxu0 0.0
  %4170 = vmatprep.subr.mxu0 0.0
  %4171 = vmatpush1.msra.mxu0 0.0
  %4172 = vmatprep.subr.mxu0 0.0
  %4173 = vmatpush1.msra.mxu0 0.0
  %4174 = vmatprep.subr.mxu0 0.0
  %4175 = vmatpush1.msra.mxu0 0.0
  %4176 = vmatprep.subr.mxu0 0.0
  %4177 = vmatpush1.msra.mxu0 0.0
  %4178 = vmatprep.subr.mxu0 0.0
  %4179 = vmatpush1.msra.mxu0 0.0
  %4180 = vmatprep.subr.mxu0 0.0
  %4181 = vmatpush1.msra.mxu0 0.0
  %4182 = vmatprep.subr.mxu0 0.0
  %4183 = vmatpush1.msra.mxu0 0.0
  %4184 = vmatprep.subr.mxu0 0.0
  %4185 = vmatpush1.msra.mxu0 0.0
  %4186 = vmatprep.subr.mxu0 0.0
  %4187 = vmatpush1.msra.mxu0 0.0
  %4188 = vmatprep.subr.mxu0 0.0
  %4189 = vmatpush1.msra.mxu0 0.0
  %4190 = vmatprep.subr.mxu0 0.0
  %4191 = vmatpush1.msra.mxu0 0.0
  %4192 = vmatprep.subr.mxu0 0.0
  %4193 = vmatpush1.msra.mxu0 0.0
  %4194 = vmatprep.subr.mxu0 0.0
  %4195 = vmatpush1.msra.mxu0 0.0
  %4196 = vmatprep.subr.mxu0 0.0
  %4197 = vmatpush1.msra.mxu0 0.0
  %4198 = vmatprep.subr.mxu0 0.0
  %4199 = vmatpush1.msra.mxu0 0.0
  %4200 = vmatprep.subr.mxu0 0.0
  %4201 = vmatpush1.msra.mxu0 0.0
  %4202 = vmatprep.subr.mxu0 0.0
  %4203 = vmatpush1.msra.mxu0 0.0
  %4204 = vmatprep.subr.mxu0 0.0
  %4205 = vmatpush1.msra.mxu0 0.0
  %4206 = vmatprep.subr.mxu0 0.0
  %4207 = vmatpush1.msra.mxu0 0.0
  %4208 = vmatprep.subr.mxu0 0.0
  %4209 = vmatpush1.msra.mxu0 0.0
  %4210 = vmatprep.subr.mxu0 0.0
  %4211 = vmatpush1.msra.mxu0 0.0
  %4212 = vmatprep.mubr.f32.mxu0 0.0
  %4213 = vmatmul.mubr.f32.gmra.mrb[0].mxu0 %v4146
  %v4214 = vpop.f32.mrb[0].mxu0
  %v4215 = vadd.f32 0.0, %v4214
  %v4216 = vpop.f32.mrb[0].mxu0
  %4217 = vdwg.mxu0
  %s4218 = scalar_lea.vmem %s7, 32
  %v4219 = vld [vmem:[%s4218] sm:$0xff]
  %v4220 = vld [vmem:[%s4218 + $0x8] sm:$0xff]
  %v4222 = vsel %vm3996, %v4215, 0
  %4224 = vmatprep.subr.mxu0 0.0
  %4225 = vmatpush1.msra.mxu0 %v4219
  %4226 = vmatprep.subr.mxu0 0.0
  %4227 = vmatpush1.msra.mxu0 %v4220
  %4228 = vmatprep.subr.mxu0 0.0
  %4229 = vmatpush1.msra.mxu0 0.0
  %4230 = vmatprep.subr.mxu0 0.0
  %4231 = vmatpush1.msra.mxu0 0.0
  %4232 = vmatprep.subr.mxu0 0.0
  %4233 = vmatpush1.msra.mxu0 0.0
  %4234 = vmatprep.subr.mxu0 0.0
  %4235 = vmatpush1.msra.mxu0 0.0
  %4236 = vmatprep.subr.mxu0 0.0
  %4237 = vmatpush1.msra.mxu0 0.0
  %4238 = vmatprep.subr.mxu0 0.0
  %4239 = vmatpush1.msra.mxu0 0.0
  %4240 = vmatprep.subr.mxu0 0.0
  %4241 = vmatpush1.msra.mxu0 0.0
  %4242 = vmatprep.subr.mxu0 0.0
  %4243 = vmatpush1.msra.mxu0 0.0
  %4244 = vmatprep.subr.mxu0 0.0
  %4245 = vmatpush1.msra.mxu0 0.0
  %4246 = vmatprep.subr.mxu0 0.0
  %4247 = vmatpush1.msra.mxu0 0.0
  %4248 = vmatprep.subr.mxu0 0.0
  %4249 = vmatpush1.msra.mxu0 0.0
  %4250 = vmatprep.subr.mxu0 0.0
  %4251 = vmatpush1.msra.mxu0 0.0
  %4252 = vmatprep.subr.mxu0 0.0
  %4253 = vmatpush1.msra.mxu0 0.0
  %4254 = vmatprep.subr.mxu0 0.0
  %4255 = vmatpush1.msra.mxu0 0.0
  %4256 = vmatprep.subr.mxu0 0.0
  %4257 = vmatpush1.msra.mxu0 0.0
  %4258 = vmatprep.subr.mxu0 0.0
  %4259 = vmatpush1.msra.mxu0 0.0
  %4260 = vmatprep.subr.mxu0 0.0
  %4261 = vmatpush1.msra.mxu0 0.0
  %4262 = vmatprep.subr.mxu0 0.0
  %4263 = vmatpush1.msra.mxu0 0.0
  %4264 = vmatprep.subr.mxu0 0.0
  %4265 = vmatpush1.msra.mxu0 0.0
  %4266 = vmatprep.subr.mxu0 0.0
  %4267 = vmatpush1.msra.mxu0 0.0
  %4268 = vmatprep.subr.mxu0 0.0
  %4269 = vmatpush1.msra.mxu0 0.0
  %4270 = vmatprep.subr.mxu0 0.0
  %4271 = vmatpush1.msra.mxu0 0.0
  %4272 = vmatprep.subr.mxu0 0.0
  %4273 = vmatpush1.msra.mxu0 0.0
  %4274 = vmatprep.subr.mxu0 0.0
  %4275 = vmatpush1.msra.mxu0 0.0
  %4276 = vmatprep.subr.mxu0 0.0
  %4277 = vmatpush1.msra.mxu0 0.0
  %4278 = vmatprep.subr.mxu0 0.0
  %4279 = vmatpush1.msra.mxu0 0.0
  %4280 = vmatprep.subr.mxu0 0.0
  %4281 = vmatpush1.msra.mxu0 0.0
  %4282 = vmatprep.subr.mxu0 0.0
  %4283 = vmatpush1.msra.mxu0 0.0
  %4284 = vmatprep.subr.mxu0 0.0
  %4285 = vmatpush1.msra.mxu0 0.0
  %4286 = vmatprep.subr.mxu0 0.0
  %4287 = vmatpush1.msra.mxu0 0.0
  %4288 = vmatprep.mubr.f32.mxu0 0.0
  %4289 = vmatmul.mubr.f32.gmra.mrb[0].mxu0 %v4222
  %v4290 = vpop.f32.mrb[0].mxu0
  %v4291 = vadd.f32 0.0, %v4290
  %v4292 = vpop.f32.mrb[0].mxu0
  %4293 = vdwg.mxu0
  %v4294 = vadd.f32 %v4140, %v4291
  %s4295 = scalar_lea.vmem %s6, 24
  %v4296 = vld [vmem:[%s4295] sm:$0xff]
  %v4298 = vsel %vm3842, %v4296, 0
  %4300 = vmatprep.subr.mxu0 0.0
  %4301 = vmatpush1.msra.mxu0 %v3834
  %4302 = vmatprep.subr.mxu0 0.0
  %4303 = vmatpush1.msra.mxu0 %v3835
  %4304 = vmatprep.subr.mxu0 0.0
  %4305 = vmatpush1.msra.mxu0 %v3836
  %4306 = vmatprep.subr.mxu0 0.0
  %4307 = vmatpush1.msra.mxu0 %v3837
  %4308 = vmatprep.subr.mxu0 0.0
  %4309 = vmatpush1.msra.mxu0 %v3838
  %4310 = vmatprep.subr.mxu0 0.0
  %4311 = vmatpush1.msra.mxu0 %v3839
  %4312 = vmatprep.subr.mxu0 0.0
  %4313 = vmatpush1.msra.mxu0 %v3840
  %4314 = vmatprep.subr.mxu0 0.0
  %4315 = vmatpush1.msra.mxu0 0.0
  %4316 = vmatprep.subr.mxu0 0.0
  %4317 = vmatpush1.msra.mxu0 0.0
  %4318 = vmatprep.subr.mxu0 0.0
  %4319 = vmatpush1.msra.mxu0 0.0
  %4320 = vmatprep.subr.mxu0 0.0
  %4321 = vmatpush1.msra.mxu0 0.0
  %4322 = vmatprep.subr.mxu0 0.0
  %4323 = vmatpush1.msra.mxu0 0.0
  %4324 = vmatprep.subr.mxu0 0.0
  %4325 = vmatpush1.msra.mxu0 0.0
  %4326 = vmatprep.subr.mxu0 0.0
  %4327 = vmatpush1.msra.mxu0 0.0
  %4328 = vmatprep.subr.mxu0 0.0
  %4329 = vmatpush1.msra.mxu0 0.0
  %4330 = vmatprep.subr.mxu0 0.0
  %4331 = vmatpush1.msra.mxu0 0.0
  %4332 = vmatprep.subr.mxu0 0.0
  %4333 = vmatpush1.msra.mxu0 0.0
  %4334 = vmatprep.subr.mxu0 0.0
  %4335 = vmatpush1.msra.mxu0 0.0
  %4336 = vmatprep.subr.mxu0 0.0
  %4337 = vmatpush1.msra.mxu0 0.0
  %4338 = vmatprep.subr.mxu0 0.0
  %4339 = vmatpush1.msra.mxu0 0.0
  %4340 = vmatprep.subr.mxu0 0.0
  %4341 = vmatpush1.msra.mxu0 0.0
  %4342 = vmatprep.subr.mxu0 0.0
  %4343 = vmatpush1.msra.mxu0 0.0
  %4344 = vmatprep.subr.mxu0 0.0
  %4345 = vmatpush1.msra.mxu0 0.0
  %4346 = vmatprep.subr.mxu0 0.0
  %4347 = vmatpush1.msra.mxu0 0.0
  %4348 = vmatprep.subr.mxu0 0.0
  %4349 = vmatpush1.msra.mxu0 0.0
  %4350 = vmatprep.subr.mxu0 0.0
  %4351 = vmatpush1.msra.mxu0 0.0
  %4352 = vmatprep.subr.mxu0 0.0
  %4353 = vmatpush1.msra.mxu0 0.0
  %4354 = vmatprep.subr.mxu0 0.0
  %4355 = vmatpush1.msra.mxu0 0.0
  %4356 = vmatprep.subr.mxu0 0.0
  %4357 = vmatpush1.msra.mxu0 0.0
  %4358 = vmatprep.subr.mxu0 0.0
  %4359 = vmatpush1.msra.mxu0 0.0
  %4360 = vmatprep.subr.mxu0 0.0
  %4361 = vmatpush1.msra.mxu0 0.0
  %4362 = vmatprep.subr.mxu0 0.0
  %4363 = vmatpush1.msra.mxu0 0.0
  %4364 = vmatprep.mubr.f32.mxu0 0.0
  %4365 = vmatmul.mubr.f32.gmra.mrb[0].mxu0 %v4298
  %v4366 = vpop.f32.mrb[0].mxu0
  %v4367 = vadd.f32 0.0, %v4366
  %v4368 = vpop.f32.mrb[0].mxu0
  %4369 = vdwg.mxu0
  %s4370 = scalar_lea.vmem %s7, 48
  %v4371 = vld [vmem:[%s4370] sm:$0xff]
  %v4372 = vld [vmem:[%s4370 + $0x8] sm:$0xff]
  %v4374 = vsel %vm3996, %v4367, 0
  %4376 = vmatprep.subr.mxu0 0.0
  %4377 = vmatpush1.msra.mxu0 %v4371
  %4378 = vmatprep.subr.mxu0 0.0
  %4379 = vmatpush1.msra.mxu0 %v4372
  %4380 = vmatprep.subr.mxu0 0.0
  %4381 = vmatpush1.msra.mxu0 0.0
  %4382 = vmatprep.subr.mxu0 0.0
  %4383 = vmatpush1.msra.mxu0 0.0
  %4384 = vmatprep.subr.mxu0 0.0
  %4385 = vmatpush1.msra.mxu0 0.0
  %4386 = vmatprep.subr.mxu0 0.0
  %4387 = vmatpush1.msra.mxu0 0.0
  %4388 = vmatprep.subr.mxu0 0.0
  %4389 = vmatpush1.msra.mxu0 0.0
  %4390 = vmatprep.subr.mxu0 0.0
  %4391 = vmatpush1.msra.mxu0 0.0
  %4392 = vmatprep.subr.mxu0 0.0
  %4393 = vmatpush1.msra.mxu0 0.0
  %4394 = vmatprep.subr.mxu0 0.0
  %4395 = vmatpush1.msra.mxu0 0.0
  %4396 = vmatprep.subr.mxu0 0.0
  %4397 = vmatpush1.msra.mxu0 0.0
  %4398 = vmatprep.subr.mxu0 0.0
  %4399 = vmatpush1.msra.mxu0 0.0
  %4400 = vmatprep.subr.mxu0 0.0
  %4401 = vmatpush1.msra.mxu0 0.0
  %4402 = vmatprep.subr.mxu0 0.0
  %4403 = vmatpush1.msra.mxu0 0.0
  %4404 = vmatprep.subr.mxu0 0.0
  %4405 = vmatpush1.msra.mxu0 0.0
  %4406 = vmatprep.subr.mxu0 0.0
  %4407 = vmatpush1.msra.mxu0 0.0
  %4408 = vmatprep.subr.mxu0 0.0
  %4409 = vmatpush1.msra.mxu0 0.0
  %4410 = vmatprep.subr.mxu0 0.0
  %4411 = vmatpush1.msra.mxu0 0.0
  %4412 = vmatprep.subr.mxu0 0.0
  %4413 = vmatpush1.msra.mxu0 0.0
  %4414 = vmatprep.subr.mxu0 0.0
  %4415 = vmatpush1.msra.mxu0 0.0
  %4416 = vmatprep.subr.mxu0 0.0
  %4417 = vmatpush1.msra.mxu0 0.0
  %4418 = vmatprep.subr.mxu0 0.0
  %4419 = vmatpush1.msra.mxu0 0.0
  %4420 = vmatprep.subr.mxu0 0.0
  %4421 = vmatpush1.msra.mxu0 0.0
  %4422 = vmatprep.subr.mxu0 0.0
  %4423 = vmatpush1.msra.mxu0 0.0
  %4424 = vmatprep.subr.mxu0 0.0
  %4425 = vmatpush1.msra.mxu0 0.0
  %4426 = vmatprep.subr.mxu0 0.0
  %4427 = vmatpush1.msra.mxu0 0.0
  %4428 = vmatprep.subr.mxu0 0.0
  %4429 = vmatpush1.msra.mxu0 0.0
  %4430 = vmatprep.subr.mxu0 0.0
  %4431 = vmatpush1.msra.mxu0 0.0
  %4432 = vmatprep.subr.mxu0 0.0
  %4433 = vmatpush1.msra.mxu0 0.0
  %4434 = vmatprep.subr.mxu0 0.0
  %4435 = vmatpush1.msra.mxu0 0.0
  %4436 = vmatprep.subr.mxu0 0.0
  %4437 = vmatpush1.msra.mxu0 0.0
  %4438 = vmatprep.subr.mxu0 0.0
  %4439 = vmatpush1.msra.mxu0 0.0
  %4440 = vmatprep.mubr.f32.mxu0 0.0
  %4441 = vmatmul.mubr.f32.gmra.mrb[0].mxu0 %v4374
  %v4442 = vpop.f32.mrb[0].mxu0
  %v4443 = vadd.f32 0.0, %v4442
  %v4444 = vpop.f32.mrb[0].mxu0
  %4445 = vdwg.mxu0
  %v4446 = vadd.f32 %v4294, %v4443
  %s4447 = scalar_lea.vmem %s6, 32
  %v4448 = vld [vmem:[%s4447] sm:$0xff]
  %v4450 = vsel %vm3842, %v4448, 0
  %4452 = vmatprep.subr.mxu0 0.0
  %4453 = vmatpush1.msra.mxu0 %v3834
  %4454 = vmatprep.subr.mxu0 0.0
  %4455 = vmatpush1.msra.mxu0 %v3835
  %4456 = vmatprep.subr.mxu0 0.0
  %4457 = vmatpush1.msra.mxu0 %v3836
  %4458 = vmatprep.subr.mxu0 0.0
  %4459 = vmatpush1.msra.mxu0 %v3837
  %4460 = vmatprep.subr.mxu0 0.0
  %4461 = vmatpush1.msra.mxu0 %v3838
  %4462 = vmatprep.subr.mxu0 0.0
  %4463 = vmatpush1.msra.mxu0 %v3839
  %4464 = vmatprep.subr.mxu0 0.0
  %4465 = vmatpush1.msra.mxu0 %v3840
  %4466 = vmatprep.subr.mxu0 0.0
  %4467 = vmatpush1.msra.mxu0 0.0
  %4468 = vmatprep.subr.mxu0 0.0
  %4469 = vmatpush1.msra.mxu0 0.0
  %4470 = vmatprep.subr.mxu0 0.0
  %4471 = vmatpush1.msra.mxu0 0.0
  %4472 = vmatprep.subr.mxu0 0.0
  %4473 = vmatpush1.msra.mxu0 0.0
  %4474 = vmatprep.subr.mxu0 0.0
  %4475 = vmatpush1.msra.mxu0 0.0
  %4476 = vmatprep.subr.mxu0 0.0
  %4477 = vmatpush1.msra.mxu0 0.0
  %4478 = vmatprep.subr.mxu0 0.0
  %4479 = vmatpush1.msra.mxu0 0.0
  %4480 = vmatprep.subr.mxu0 0.0
  %4481 = vmatpush1.msra.mxu0 0.0
  %4482 = vmatprep.subr.mxu0 0.0
  %4483 = vmatpush1.msra.mxu0 0.0
  %4484 = vmatprep.subr.mxu0 0.0
  %4485 = vmatpush1.msra.mxu0 0.0
  %4486 = vmatprep.subr.mxu0 0.0
  %4487 = vmatpush1.msra.mxu0 0.0
  %4488 = vmatprep.subr.mxu0 0.0
  %4489 = vmatpush1.msra.mxu0 0.0
  %4490 = vmatprep.subr.mxu0 0.0
  %4491 = vmatpush1.msra.mxu0 0.0
  %4492 = vmatprep.subr.mxu0 0.0
  %4493 = vmatpush1.msra.mxu0 0.0
  %4494 = vmatprep.subr.mxu0 0.0
  %4495 = vmatpush1.msra.mxu0 0.0
  %4496 = vmatprep.subr.mxu0 0.0
  %4497 = vmatpush1.msra.mxu0 0.0
  %4498 = vmatprep.subr.mxu0 0.0
  %4499 = vmatpush1.msra.mxu0 0.0
  %4500 = vmatprep.subr.mxu0 0.0
  %4501 = vmatpush1.msra.mxu0 0.0
  %4502 = vmatprep.subr.mxu0 0.0
  %4503 = vmatpush1.msra.mxu0 0.0
  %4504 = vmatprep.subr.mxu0 0.0
  %4505 = vmatpush1.msra.mxu0 0.0
  %4506 = vmatprep.subr.mxu0 0.0
  %4507 = vmatpush1.msra.mxu0 0.0
  %4508 = vmatprep.subr.mxu0 0.0
  %4509 = vmatpush1.msra.mxu0 0.0
  %4510 = vmatprep.subr.mxu0 0.0
  %4511 = vmatpush1.msra.mxu0 0.0
  %4512 = vmatprep.subr.mxu0 0.0
  %4513 = vmatpush1.msra.mxu0 0.0
  %4514 = vmatprep.subr.mxu0 0.0
  %4515 = vmatpush1.msra.mxu0 0.0
  %4516 = vmatprep.mubr.f32.mxu0 0.0
  %4517 = vmatmul.mubr.f32.gmra.mrb[0].mxu0 %v4450
  %v4518 = vpop.f32.mrb[0].mxu0
  %v4519 = vadd.f32 0.0, %v4518
  %v4520 = vpop.f32.mrb[0].mxu0
  %4521 = vdwg.mxu0
  %s4522 = scalar_lea.vmem %s7, 64
  %v4523 = vld [vmem:[%s4522] sm:$0xff]
  %v4524 = vld [vmem:[%s4522 + $0x8] sm:$0xff]
  %v4526 = vsel %vm3996, %v4519, 0
  %4528 = vmatprep.subr.mxu0 0.0
  %4529 = vmatpush1.msra.mxu0 %v4523
  %4530 = vmatprep.subr.mxu0 0.0
  %4531 = vmatpush1.msra.mxu0 %v4524
  %4532 = vmatprep.subr.mxu0 0.0
  %4533 = vmatpush1.msra.mxu0 0.0
  %4534 = vmatprep.subr.mxu0 0.0
  %4535 = vmatpush1.msra.mxu0 0.0
  %4536 = vmatprep.subr.mxu0 0.0
  %4537 = vmatpush1.msra.mxu0 0.0
  %4538 = vmatprep.subr.mxu0 0.0
  %4539 = vmatpush1.msra.mxu0 0.0
  %4540 = vmatprep.subr.mxu0 0.0
  %4541 = vmatpush1.msra.mxu0 0.0
  %4542 = vmatprep.subr.mxu0 0.0
  %4543 = vmatpush1.msra.mxu0 0.0
  %4544 = vmatprep.subr.mxu0 0.0
  %4545 = vmatpush1.msra.mxu0 0.0
  %4546 = vmatprep.subr.mxu0 0.0
  %4547 = vmatpush1.msra.mxu0 0.0
  %4548 = vmatprep.subr.mxu0 0.0
  %4549 = vmatpush1.msra.mxu0 0.0
  %4550 = vmatprep.subr.mxu0 0.0
  %4551 = vmatpush1.msra.mxu0 0.0
  %4552 = vmatprep.subr.mxu0 0.0
  %4553 = vmatpush1.msra.mxu0 0.0
  %4554 = vmatprep.subr.mxu0 0.0
  %4555 = vmatpush1.msra.mxu0 0.0
  %4556 = vmatprep.subr.mxu0 0.0
  %4557 = vmatpush1.msra.mxu0 0.0
  %4558 = vmatprep.subr.mxu0 0.0
  %4559 = vmatpush1.msra.mxu0 0.0
  %4560 = vmatprep.subr.mxu0 0.0
  %4561 = vmatpush1.msra.mxu0 0.0
  %4562 = vmatprep.subr.mxu0 0.0
  %4563 = vmatpush1.msra.mxu0 0.0
  %4564 = vmatprep.subr.mxu0 0.0
  %4565 = vmatpush1.msra.mxu0 0.0
  %4566 = vmatprep.subr.mxu0 0.0
  %4567 = vmatpush1.msra.mxu0 0.0
  %4568 = vmatprep.subr.mxu0 0.0
  %4569 = vmatpush1.msra.mxu0 0.0
  %4570 = vmatprep.subr.mxu0 0.0
  %4571 = vmatpush1.msra.mxu0 0.0
  %4572 = vmatprep.subr.mxu0 0.0
  %4573 = vmatpush1.msra.mxu0 0.0
  %4574 = vmatprep.subr.mxu0 0.0
  %4575 = vmatpush1.msra.mxu0 0.0
  %4576 = vmatprep.subr.mxu0 0.0
  %4577 = vmatpush1.msra.mxu0 0.0
  %4578 = vmatprep.subr.mxu0 0.0
  %4579 = vmatpush1.msra.mxu0 0.0
  %4580 = vmatprep.subr.mxu0 0.0
  %4581 = vmatpush1.msra.mxu0 0.0
  %4582 = vmatprep.subr.mxu0 0.0
  %4583 = vmatpush1.msra.mxu0 0.0
  %4584 = vmatprep.subr.mxu0 0.0
  %4585 = vmatpush1.msra.mxu0 0.0
  %4586 = vmatprep.subr.mxu0 0.0
  %4587 = vmatpush1.msra.mxu0 0.0
  %4588 = vmatprep.subr.mxu0 0.0
  %4589 = vmatpush1.msra.mxu0 0.0
  %4590 = vmatprep.subr.mxu0 0.0
  %4591 = vmatpush1.msra.mxu0 0.0
  %4592 = vmatprep.mubr.f32.mxu0 0.0
  %4593 = vmatmul.mubr.f32.gmra.mrb[0].mxu0 %v4526
  %v4594 = vpop.f32.mrb[0].mxu0
  %v4595 = vadd.f32 0.0, %v4594
  %v4596 = vpop.f32.mrb[0].mxu0
  %4597 = vdwg.mxu0
  %v4598 = vadd.f32 %v4446, %v4595
  %s4599 = scalar_lea.vmem %s6, 40
  %v4600 = vld [vmem:[%s4599] sm:$0xff]
  %v4602 = vsel %vm3842, %v4600, 0
  %4604 = vmatprep.subr.mxu0 0.0
  %4605 = vmatpush1.msra.mxu0 %v3834
  %4606 = vmatprep.subr.mxu0 0.0
  %4607 = vmatpush1.msra.mxu0 %v3835
  %4608 = vmatprep.subr.mxu0 0.0
  %4609 = vmatpush1.msra.mxu0 %v3836
  %4610 = vmatprep.subr.mxu0 0.0
  %4611 = vmatpush1.msra.mxu0 %v3837
  %4612 = vmatprep.subr.mxu0 0.0
  %4613 = vmatpush1.msra.mxu0 %v3838
  %4614 = vmatprep.subr.mxu0 0.0
  %4615 = vmatpush1.msra.mxu0 %v3839
  %4616 = vmatprep.subr.mxu0 0.0
  %4617 = vmatpush1.msra.mxu0 %v3840
  %4618 = vmatprep.subr.mxu0 0.0
  %4619 = vmatpush1.msra.mxu0 0.0
  %4620 = vmatprep.subr.mxu0 0.0
  %4621 = vmatpush1.msra.mxu0 0.0
  %4622 = vmatprep.subr.mxu0 0.0
  %4623 = vmatpush1.msra.mxu0 0.0
  %4624 = vmatprep.subr.mxu0 0.0
  %4625 = vmatpush1.msra.mxu0 0.0
  %4626 = vmatprep.subr.mxu0 0.0
  %4627 = vmatpush1.msra.mxu0 0.0
  %4628 = vmatprep.subr.mxu0 0.0
  %4629 = vmatpush1.msra.mxu0 0.0
  %4630 = vmatprep.subr.mxu0 0.0
  %4631 = vmatpush1.msra.mxu0 0.0
  %4632 = vmatprep.subr.mxu0 0.0
  %4633 = vmatpush1.msra.mxu0 0.0
  %4634 = vmatprep.subr.mxu0 0.0
  %4635 = vmatpush1.msra.mxu0 0.0
  %4636 = vmatprep.subr.mxu0 0.0
  %4637 = vmatpush1.msra.mxu0 0.0
  %4638 = vmatprep.subr.mxu0 0.0
  %4639 = vmatpush1.msra.mxu0 0.0
  %4640 = vmatprep.subr.mxu0 0.0
  %4641 = vmatpush1.msra.mxu0 0.0
  %4642 = vmatprep.subr.mxu0 0.0
  %4643 = vmatpush1.msra.mxu0 0.0
  %4644 = vmatprep.subr.mxu0 0.0
  %4645 = vmatpush1.msra.mxu0 0.0
  %4646 = vmatprep.subr.mxu0 0.0
  %4647 = vmatpush1.msra.mxu0 0.0
  %4648 = vmatprep.subr.mxu0 0.0
  %4649 = vmatpush1.msra.mxu0 0.0
  %4650 = vmatprep.subr.mxu0 0.0
  %4651 = vmatpush1.msra.mxu0 0.0
  %4652 = vmatprep.subr.mxu0 0.0
  %4653 = vmatpush1.msra.mxu0 0.0
  %4654 = vmatprep.subr.mxu0 0.0
  %4655 = vmatpush1.msra.mxu0 0.0
  %4656 = vmatprep.subr.mxu0 0.0
  %4657 = vmatpush1.msra.mxu0 0.0
  %4658 = vmatprep.subr.mxu0 0.0
  %4659 = vmatpush1.msra.mxu0 0.0
  %4660 = vmatprep.subr.mxu0 0.0
  %4661 = vmatpush1.msra.mxu0 0.0
  %4662 = vmatprep.subr.mxu0 0.0
  %4663 = vmatpush1.msra.mxu0 0.0
  %4664 = vmatprep.subr.mxu0 0.0
  %4665 = vmatpush1.msra.mxu0 0.0
  %4666 = vmatprep.subr.mxu0 0.0
  %4667 = vmatpush1.msra.mxu0 0.0
  %4668 = vmatprep.mubr.f32.mxu0 0.0
  %4669 = vmatmul.mubr.f32.gmra.mrb[0].mxu0 %v4602
  %v4670 = vpop.f32.mrb[0].mxu0
  %v4671 = vadd.f32 0.0, %v4670
  %v4672 = vpop.f32.mrb[0].mxu0
  %4673 = vdwg.mxu0
  %s4674 = scalar_lea.vmem %s7, 80
  %v4675 = vld [vmem:[%s4674] sm:$0xff]
  %v4676 = vld [vmem:[%s4674 + $0x8] sm:$0xff]
  %v4678 = vsel %vm3996, %v4671, 0
  %4680 = vmatprep.subr.mxu0 0.0
  %4681 = vmatpush1.msra.mxu0 %v4675
  %4682 = vmatprep.subr.mxu0 0.0
  %4683 = vmatpush1.msra.mxu0 %v4676
  %4684 = vmatprep.subr.mxu0 0.0
  %4685 = vmatpush1.msra.mxu0 0.0
  %4686 = vmatprep.subr.mxu0 0.0
  %4687 = vmatpush1.msra.mxu0 0.0
  %4688 = vmatprep.subr.mxu0 0.0
  %4689 = vmatpush1.msra.mxu0 0.0
  %4690 = vmatprep.subr.mxu0 0.0
  %4691 = vmatpush1.msra.mxu0 0.0
  %4692 = vmatprep.subr.mxu0 0.0
  %4693 = vmatpush1.msra.mxu0 0.0
  %4694 = vmatprep.subr.mxu0 0.0
  %4695 = vmatpush1.msra.mxu0 0.0
  %4696 = vmatprep.subr.mxu0 0.0
  %4697 = vmatpush1.msra.mxu0 0.0
  %4698 = vmatprep.subr.mxu0 0.0
  %4699 = vmatpush1.msra.mxu0 0.0
  %4700 = vmatprep.subr.mxu0 0.0
  %4701 = vmatpush1.msra.mxu0 0.0
  %4702 = vmatprep.subr.mxu0 0.0
  %4703 = vmatpush1.msra.mxu0 0.0
  %4704 = vmatprep.subr.mxu0 0.0
  %4705 = vmatpush1.msra.mxu0 0.0
  %4706 = vmatprep.subr.mxu0 0.0
  %4707 = vmatpush1.msra.mxu0 0.0
  %4708 = vmatprep.subr.mxu0 0.0
  %4709 = vmatpush1.msra.mxu0 0.0
  %4710 = vmatprep.subr.mxu0 0.0
  %4711 = vmatpush1.msra.mxu0 0.0
  %4712 = vmatprep.subr.mxu0 0.0
  %4713 = vmatpush1.msra.mxu0 0.0
  %4714 = vmatprep.subr.mxu0 0.0
  %4715 = vmatpush1.msra.mxu0 0.0
  %4716 = vmatprep.subr.mxu0 0.0
  %4717 = vmatpush1.msra.mxu0 0.0
  %4718 = vmatprep.subr.mxu0 0.0
  %4719 = vmatpush1.msra.mxu0 0.0
  %4720 = vmatprep.subr.mxu0 0.0
  %4721 = vmatpush1.msra.mxu0 0.0
  %4722 = vmatprep.subr.mxu0 0.0
  %4723 = vmatpush1.msra.mxu0 0.0
  %4724 = vmatprep.subr.mxu0 0.0
  %4725 = vmatpush1.msra.mxu0 0.0
  %4726 = vmatprep.subr.mxu0 0.0
  %4727 = vmatpush1.msra.mxu0 0.0
  %4728 = vmatprep.subr.mxu0 0.0
  %4729 = vmatpush1.msra.mxu0 0.0
  %4730 = vmatprep.subr.mxu0 0.0
  %4731 = vmatpush1.msra.mxu0 0.0
  %4732 = vmatprep.subr.mxu0 0.0
  %4733 = vmatpush1.msra.mxu0 0.0
  %4734 = vmatprep.subr.mxu0 0.0
  %4735 = vmatpush1.msra.mxu0 0.0
  %4736 = vmatprep.subr.mxu0 0.0
  %4737 = vmatpush1.msra.mxu0 0.0
  %4738 = vmatprep.subr.mxu0 0.0
  %4739 = vmatpush1.msra.mxu0 0.0
  %4740 = vmatprep.subr.mxu0 0.0
  %4741 = vmatpush1.msra.mxu0 0.0
  %4742 = vmatprep.subr.mxu0 0.0
  %4743 = vmatpush1.msra.mxu0 0.0
  %4744 = vmatprep.mubr.f32.mxu0 0.0
  %4745 = vmatmul.mubr.f32.gmra.mrb[0].mxu0 %v4678
  %v4746 = vpop.f32.mrb[0].mxu0
  %v4747 = vadd.f32 0.0, %v4746
  %v4748 = vpop.f32.mrb[0].mxu0
  %4749 = vdwg.mxu0
  %v4750 = vadd.f32 %v4598, %v4747
  %s4751 = scalar_lea.vmem %s6, 48
  %v4752 = vld [vmem:[%s4751] sm:$0xff]
  %v4754 = vsel %vm3842, %v4752, 0
  %4756 = vmatprep.subr.mxu0 0.0
  %4757 = vmatpush1.msra.mxu0 %v3834
  %4758 = vmatprep.subr.mxu0 0.0
  %4759 = vmatpush1.msra.mxu0 %v3835
  %4760 = vmatprep.subr.mxu0 0.0
  %4761 = vmatpush1.msra.mxu0 %v3836
  %4762 = vmatprep.subr.mxu0 0.0
  %4763 = vmatpush1.msra.mxu0 %v3837
  %4764 = vmatprep.subr.mxu0 0.0
  %4765 = vmatpush1.msra.mxu0 %v3838
  %4766 = vmatprep.subr.mxu0 0.0
  %4767 = vmatpush1.msra.mxu0 %v3839
  %4768 = vmatprep.subr.mxu0 0.0
  %4769 = vmatpush1.msra.mxu0 %v3840
  %4770 = vmatprep.subr.mxu0 0.0
  %4771 = vmatpush1.msra.mxu0 0.0
  %4772 = vmatprep.subr.mxu0 0.0
  %4773 = vmatpush1.msra.mxu0 0.0
  %4774 = vmatprep.subr.mxu0 0.0
  %4775 = vmatpush1.msra.mxu0 0.0
  %4776 = vmatprep.subr.mxu0 0.0
  %4777 = vmatpush1.msra.mxu0 0.0
  %4778 = vmatprep.subr.mxu0 0.0
  %4779 = vmatpush1.msra.mxu0 0.0
  %4780 = vmatprep.subr.mxu0 0.0
  %4781 = vmatpush1.msra.mxu0 0.0
  %4782 = vmatprep.subr.mxu0 0.0
  %4783 = vmatpush1.msra.mxu0 0.0
  %4784 = vmatprep.subr.mxu0 0.0
  %4785 = vmatpush1.msra.mxu0 0.0
  %4786 = vmatprep.subr.mxu0 0.0
  %4787 = vmatpush1.msra.mxu0 0.0
  %4788 = vmatprep.subr.mxu0 0.0
  %4789 = vmatpush1.msra.mxu0 0.0
  %4790 = vmatprep.subr.mxu0 0.0
  %4791 = vmatpush1.msra.mxu0 0.0
  %4792 = vmatprep.subr.mxu0 0.0
  %4793 = vmatpush1.msra.mxu0 0.0
  %4794 = vmatprep.subr.mxu0 0.0
  %4795 = vmatpush1.msra.mxu0 0.0
  %4796 = vmatprep.subr.mxu0 0.0
  %4797 = vmatpush1.msra.mxu0 0.0
  %4798 = vmatprep.subr.mxu0 0.0
  %4799 = vmatpush1.msra.mxu0 0.0
  %4800 = vmatprep.subr.mxu0 0.0
  %4801 = vmatpush1.msra.mxu0 0.0
  %4802 = vmatprep.subr.mxu0 0.0
  %4803 = vmatpush1.msra.mxu0 0.0
  %4804 = vmatprep.subr.mxu0 0.0
  %4805 = vmatpush1.msra.mxu0 0.0
  %4806 = vmatprep.subr.mxu0 0.0
  %4807 = vmatpush1.msra.mxu0 0.0
  %4808 = vmatprep.subr.mxu0 0.0
  %4809 = vmatpush1.msra.mxu0 0.0
  %4810 = vmatprep.subr.mxu0 0.0
  %4811 = vmatpush1.msra.mxu0 0.0
  %4812 = vmatprep.subr.mxu0 0.0
  %4813 = vmatpush1.msra.mxu0 0.0
  %4814 = vmatprep.subr.mxu0 0.0
  %4815 = vmatpush1.msra.mxu0 0.0
  %4816 = vmatprep.subr.mxu0 0.0
  %4817 = vmatpush1.msra.mxu0 0.0
  %4818 = vmatprep.subr.mxu0 0.0
  %4819 = vmatpush1.msra.mxu0 0.0
  %4820 = vmatprep.mubr.f32.mxu0 0.0
  %4821 = vmatmul.mubr.f32.gmra.mrb[0].mxu0 %v4754
  %v4822 = vpop.f32.mrb[0].mxu0
  %v4823 = vadd.f32 0.0, %v4822
  %v4824 = vpop.f32.mrb[0].mxu0
  %4825 = vdwg.mxu0
  %s4826 = scalar_lea.vmem %s7, 96
  %v4827 = vld [vmem:[%s4826] sm:$0xff]
  %v4828 = vld [vmem:[%s4826 + $0x8] sm:$0xff]
  %v4830 = vsel %vm3996, %v4823, 0
  %4832 = vmatprep.subr.mxu0 0.0
  %4833 = vmatpush1.msra.mxu0 %v4827
  %4834 = vmatprep.subr.mxu0 0.0
  %4835 = vmatpush1.msra.mxu0 %v4828
  %4836 = vmatprep.subr.mxu0 0.0
  %4837 = vmatpush1.msra.mxu0 0.0
  %4838 = vmatprep.subr.mxu0 0.0
  %4839 = vmatpush1.msra.mxu0 0.0
  %4840 = vmatprep.subr.mxu0 0.0
  %4841 = vmatpush1.msra.mxu0 0.0
  %4842 = vmatprep.subr.mxu0 0.0
  %4843 = vmatpush1.msra.mxu0 0.0
  %4844 = vmatprep.subr.mxu0 0.0
  %4845 = vmatpush1.msra.mxu0 0.0
  %4846 = vmatprep.subr.mxu0 0.0
  %4847 = vmatpush1.msra.mxu0 0.0
  %4848 = vmatprep.subr.mxu0 0.0
  %4849 = vmatpush1.msra.mxu0 0.0
  %4850 = vmatprep.subr.mxu0 0.0
  %4851 = vmatpush1.msra.mxu0 0.0
  %4852 = vmatprep.subr.mxu0 0.0
  %4853 = vmatpush1.msra.mxu0 0.0
  %4854 = vmatprep.subr.mxu0 0.0
  %4855 = vmatpush1.msra.mxu0 0.0
  %4856 = vmatprep.subr.mxu0 0.0
  %4857 = vmatpush1.msra.mxu0 0.0
  %4858 = vmatprep.subr.mxu0 0.0
  %4859 = vmatpush1.msra.mxu0 0.0
  %4860 = vmatprep.subr.mxu0 0.0
  %4861 = vmatpush1.msra.mxu0 0.0
  %4862 = vmatprep.subr.mxu0 0.0
  %4863 = vmatpush1.msra.mxu0 0.0
  %4864 = vmatprep.subr.mxu0 0.0
  %4865 = vmatpush1.msra.mxu0 0.0
  %4866 = vmatprep.subr.mxu0 0.0
  %4867 = vmatpush1.msra.mxu0 0.0
  %4868 = vmatprep.subr.mxu0 0.0
  %4869 = vmatpush1.msra.mxu0 0.0
  %4870 = vmatprep.subr.mxu0 0.0
  %4871 = vmatpush1.msra.mxu0 0.0
  %4872 = vmatprep.subr.mxu0 0.0
  %4873 = vmatpush1.msra.mxu0 0.0
  %4874 = vmatprep.subr.mxu0 0.0
  %4875 = vmatpush1.msra.mxu0 0.0
  %4876 = vmatprep.subr.mxu0 0.0
  %4877 = vmatpush1.msra.mxu0 0.0
  %4878 = vmatprep.subr.mxu0 0.0
  %4879 = vmatpush1.msra.mxu0 0.0
  %4880 = vmatprep.subr.mxu0 0.0
  %4881 = vmatpush1.msra.mxu0 0.0
  %4882 = vmatprep.subr.mxu0 0.0
  %4883 = vmatpush1.msra.mxu0 0.0
  %4884 = vmatprep.subr.mxu0 0.0
  %4885 = vmatpush1.msra.mxu0 0.0
  %4886 = vmatprep.subr.mxu0 0.0
  %4887 = vmatpush1.msra.mxu0 0.0
  %4888 = vmatprep.subr.mxu0 0.0
  %4889 = vmatpush1.msra.mxu0 0.0
  %4890 = vmatprep.subr.mxu0 0.0
  %4891 = vmatpush1.msra.mxu0 0.0
  %4892 = vmatprep.subr.mxu0 0.0
  %4893 = vmatpush1.msra.mxu0 0.0
  %4894 = vmatprep.subr.mxu0 0.0
  %4895 = vmatpush1.msra.mxu0 0.0
  %4896 = vmatprep.mubr.f32.mxu0 0.0
  %4897 = vmatmul.mubr.f32.gmra.mrb[0].mxu0 %v4830
  %v4898 = vpop.f32.mrb[0].mxu0
  %v4899 = vadd.f32 0.0, %v4898
  %v4900 = vpop.f32.mrb[0].mxu0
  %4901 = vdwg.mxu0
  %v4902 = vadd.f32 %v4750, %v4899
  %s4903 = scalar_lea.vmem %s6, 56
  %v4904 = vld [vmem:[%s4903] sm:$0xff]
  %v4906 = vsel %vm3842, %v4904, 0
  %4908 = vmatprep.subr.mxu0 0.0
  %4909 = vmatpush1.msra.mxu0 %v3834
  %4910 = vmatprep.subr.mxu0 0.0
  %4911 = vmatpush1.msra.mxu0 %v3835
  %4912 = vmatprep.subr.mxu0 0.0
  %4913 = vmatpush1.msra.mxu0 %v3836
  %4914 = vmatprep.subr.mxu0 0.0
  %4915 = vmatpush1.msra.mxu0 %v3837
  %4916 = vmatprep.subr.mxu0 0.0
  %4917 = vmatpush1.msra.mxu0 %v3838
  %4918 = vmatprep.subr.mxu0 0.0
  %4919 = vmatpush1.msra.mxu0 %v3839
  %4920 = vmatprep.subr.mxu0 0.0
  %4921 = vmatpush1.msra.mxu0 %v3840
  %4922 = vmatprep.subr.mxu0 0.0
  %4923 = vmatpush1.msra.mxu0 0.0
  %4924 = vmatprep.subr.mxu0 0.0
  %4925 = vmatpush1.msra.mxu0 0.0
  %4926 = vmatprep.subr.mxu0 0.0
  %4927 = vmatpush1.msra.mxu0 0.0
  %4928 = vmatprep.subr.mxu0 0.0
  %4929 = vmatpush1.msra.mxu0 0.0
  %4930 = vmatprep.subr.mxu0 0.0
  %4931 = vmatpush1.msra.mxu0 0.0
  %4932 = vmatprep.subr.mxu0 0.0
  %4933 = vmatpush1.msra.mxu0 0.0
  %4934 = vmatprep.subr.mxu0 0.0
  %4935 = vmatpush1.msra.mxu0 0.0
  %4936 = vmatprep.subr.mxu0 0.0
  %4937 = vmatpush1.msra.mxu0 0.0
  %4938 = vmatprep.subr.mxu0 0.0
  %4939 = vmatpush1.msra.mxu0 0.0
  %4940 = vmatprep.subr.mxu0 0.0
  %4941 = vmatpush1.msra.mxu0 0.0
  %4942 = vmatprep.subr.mxu0 0.0
  %4943 = vmatpush1.msra.mxu0 0.0
  %4944 = vmatprep.subr.mxu0 0.0
  %4945 = vmatpush1.msra.mxu0 0.0
  %4946 = vmatprep.subr.mxu0 0.0
  %4947 = vmatpush1.msra.mxu0 0.0
  %4948 = vmatprep.subr.mxu0 0.0
  %4949 = vmatpush1.msra.mxu0 0.0
  %4950 = vmatprep.subr.mxu0 0.0
  %4951 = vmatpush1.msra.mxu0 0.0
  %4952 = vmatprep.subr.mxu0 0.0
  %4953 = vmatpush1.msra.mxu0 0.0
  %4954 = vmatprep.subr.mxu0 0.0
  %4955 = vmatpush1.msra.mxu0 0.0
  %4956 = vmatprep.subr.mxu0 0.0
  %4957 = vmatpush1.msra.mxu0 0.0
  %4958 = vmatprep.subr.mxu0 0.0
  %4959 = vmatpush1.msra.mxu0 0.0
  %4960 = vmatprep.subr.mxu0 0.0
  %4961 = vmatpush1.msra.mxu0 0.0
  %4962 = vmatprep.subr.mxu0 0.0
  %4963 = vmatpush1.msra.mxu0 0.0
  %4964 = vmatprep.subr.mxu0 0.0
  %4965 = vmatpush1.msra.mxu0 0.0
  %4966 = vmatprep.subr.mxu0 0.0
  %4967 = vmatpush1.msra.mxu0 0.0
  %4968 = vmatprep.subr.mxu0 0.0
  %4969 = vmatpush1.msra.mxu0 0.0
  %4970 = vmatprep.subr.mxu0 0.0
  %4971 = vmatpush1.msra.mxu0 0.0
  %4972 = vmatprep.mubr.f32.mxu0 0.0
  %4973 = vmatmul.mubr.f32.gmra.mrb[0].mxu0 %v4906
  %v4974 = vpop.f32.mrb[0].mxu0
  %v4975 = vadd.f32 0.0, %v4974
  %v4976 = vpop.f32.mrb[0].mxu0
  %4977 = vdwg.mxu0
  %s4978 = scalar_lea.vmem %s7, 112
  %v4979 = vld [vmem:[%s4978] sm:$0xff]
  %v4980 = vld [vmem:[%s4978 + $0x8] sm:$0xff]
  %v4982 = vsel %vm3996, %v4975, 0
  %4984 = vmatprep.subr.mxu0 0.0
  %4985 = vmatpush1.msra.mxu0 %v4979
  %4986 = vmatprep.subr.mxu0 0.0
  %4987 = vmatpush1.msra.mxu0 %v4980
  %4988 = vmatprep.subr.mxu0 0.0
  %4989 = vmatpush1.msra.mxu0 0.0
  %4990 = vmatprep.subr.mxu0 0.0
  %4991 = vmatpush1.msra.mxu0 0.0
  %4992 = vmatprep.subr.mxu0 0.0
  %4993 = vmatpush1.msra.mxu0 0.0
  %4994 = vmatprep.subr.mxu0 0.0
  %4995 = vmatpush1.msra.mxu0 0.0
  %4996 = vmatprep.subr.mxu0 0.0
  %4997 = vmatpush1.msra.mxu0 0.0
  %4998 = vmatprep.subr.mxu0 0.0
  %4999 = vmatpush1.msra.mxu0 0.0
  %5000 = vmatprep.subr.mxu0 0.0
  %5001 = vmatpush1.msra.mxu0 0.0
  %5002 = vmatprep.subr.mxu0 0.0
  %5003 = vmatpush1.msra.mxu0 0.0
  %5004 = vmatprep.subr.mxu0 0.0
  %5005 = vmatpush1.msra.mxu0 0.0
  %5006 = vmatprep.subr.mxu0 0.0
  %5007 = vmatpush1.msra.mxu0 0.0
  %5008 = vmatprep.subr.mxu0 0.0
  %5009 = vmatpush1.msra.mxu0 0.0
  %5010 = vmatprep.subr.mxu0 0.0
  %5011 = vmatpush1.msra.mxu0 0.0
  %5012 = vmatprep.subr.mxu0 0.0
  %5013 = vmatpush1.msra.mxu0 0.0
  %5014 = vmatprep.subr.mxu0 0.0
  %5015 = vmatpush1.msra.mxu0 0.0
  %5016 = vmatprep.subr.mxu0 0.0
  %5017 = vmatpush1.msra.mxu0 0.0
  %5018 = vmatprep.subr.mxu0 0.0
  %5019 = vmatpush1.msra.mxu0 0.0
  %5020 = vmatprep.subr.mxu0 0.0
  %5021 = vmatpush1.msra.mxu0 0.0
  %5022 = vmatprep.subr.mxu0 0.0
  %5023 = vmatpush1.msra.mxu0 0.0
  %5024 = vmatprep.subr.mxu0 0.0
  %5025 = vmatpush1.msra.mxu0 0.0
  %5026 = vmatprep.subr.mxu0 0.0
  %5027 = vmatpush1.msra.mxu0 0.0
  %5028 = vmatprep.subr.mxu0 0.0
  %5029 = vmatpush1.msra.mxu0 0.0
  %5030 = vmatprep.subr.mxu0 0.0
  %5031 = vmatpush1.msra.mxu0 0.0
  %5032 = vmatprep.subr.mxu0 0.0
  %5033 = vmatpush1.msra.mxu0 0.0
  %5034 = vmatprep.subr.mxu0 0.0
  %5035 = vmatpush1.msra.mxu0 0.0
  %5036 = vmatprep.subr.mxu0 0.0
  %5037 = vmatpush1.msra.mxu0 0.0
  %5038 = vmatprep.subr.mxu0 0.0
  %5039 = vmatpush1.msra.mxu0 0.0
  %5040 = vmatprep.subr.mxu0 0.0
  %5041 = vmatpush1.msra.mxu0 0.0
  %5042 = vmatprep.subr.mxu0 0.0
  %5043 = vmatpush1.msra.mxu0 0.0
  %5044 = vmatprep.subr.mxu0 0.0
  %5045 = vmatpush1.msra.mxu0 0.0
  %5046 = vmatprep.subr.mxu0 0.0
  %5047 = vmatpush1.msra.mxu0 0.0
  %5048 = vmatprep.mubr.f32.mxu0 0.0
  %5049 = vmatmul.mubr.f32.gmra.mrb[0].mxu0 %v4982
  %v5050 = vpop.f32.mrb[0].mxu0
  %v5051 = vadd.f32 0.0, %v5050
  %v5052 = vpop.f32.mrb[0].mxu0
  %5053 = vdwg.mxu0
  %v5054 = vadd.f32 %v4902, %v5051
  %s5055 = scalar_lea.vmem %s6, 64
  %v5056 = vld [vmem:[%s5055] sm:$0xff]
  %v5058 = vsel %vm3842, %v5056, 0
  %5060 = vmatprep.subr.mxu0 0.0
  %5061 = vmatpush1.msra.mxu0 %v3834
  %5062 = vmatprep.subr.mxu0 0.0
  %5063 = vmatpush1.msra.mxu0 %v3835
  %5064 = vmatprep.subr.mxu0 0.0
  %5065 = vmatpush1.msra.mxu0 %v3836
  %5066 = vmatprep.subr.mxu0 0.0
  %5067 = vmatpush1.msra.mxu0 %v3837
  %5068 = vmatprep.subr.mxu0 0.0
  %5069 = vmatpush1.msra.mxu0 %v3838
  %5070 = vmatprep.subr.mxu0 0.0
  %5071 = vmatpush1.msra.mxu0 %v3839
  %5072 = vmatprep.subr.mxu0 0.0
  %5073 = vmatpush1.msra.mxu0 %v3840
  %5074 = vmatprep.subr.mxu0 0.0
  %5075 = vmatpush1.msra.mxu0 0.0
  %5076 = vmatprep.subr.mxu0 0.0
  %5077 = vmatpush1.msra.mxu0 0.0
  %5078 = vmatprep.subr.mxu0 0.0
  %5079 = vmatpush1.msra.mxu0 0.0
  %5080 = vmatprep.subr.mxu0 0.0
  %5081 = vmatpush1.msra.mxu0 0.0
  %5082 = vmatprep.subr.mxu0 0.0
  %5083 = vmatpush1.msra.mxu0 0.0
  %5084 = vmatprep.subr.mxu0 0.0
  %5085 = vmatpush1.msra.mxu0 0.0
  %5086 = vmatprep.subr.mxu0 0.0
  %5087 = vmatpush1.msra.mxu0 0.0
  %5088 = vmatprep.subr.mxu0 0.0
  %5089 = vmatpush1.msra.mxu0 0.0
  %5090 = vmatprep.subr.mxu0 0.0
  %5091 = vmatpush1.msra.mxu0 0.0
  %5092 = vmatprep.subr.mxu0 0.0
  %5093 = vmatpush1.msra.mxu0 0.0
  %5094 = vmatprep.subr.mxu0 0.0
  %5095 = vmatpush1.msra.mxu0 0.0
  %5096 = vmatprep.subr.mxu0 0.0
  %5097 = vmatpush1.msra.mxu0 0.0
  %5098 = vmatprep.subr.mxu0 0.0
  %5099 = vmatpush1.msra.mxu0 0.0
  %5100 = vmatprep.subr.mxu0 0.0
  %5101 = vmatpush1.msra.mxu0 0.0
  %5102 = vmatprep.subr.mxu0 0.0
  %5103 = vmatpush1.msra.mxu0 0.0
  %5104 = vmatprep.subr.mxu0 0.0
  %5105 = vmatpush1.msra.mxu0 0.0
  %5106 = vmatprep.subr.mxu0 0.0
  %5107 = vmatpush1.msra.mxu0 0.0
  %5108 = vmatprep.subr.mxu0 0.0
  %5109 = vmatpush1.msra.mxu0 0.0
  %5110 = vmatprep.subr.mxu0 0.0
  %5111 = vmatpush1.msra.mxu0 0.0
  %5112 = vmatprep.subr.mxu0 0.0
  %5113 = vmatpush1.msra.mxu0 0.0
  %5114 = vmatprep.subr.mxu0 0.0
  %5115 = vmatpush1.msra.mxu0 0.0
  %5116 = vmatprep.subr.mxu0 0.0
  %5117 = vmatpush1.msra.mxu0 0.0
  %5118 = vmatprep.subr.mxu0 0.0
  %5119 = vmatpush1.msra.mxu0 0.0
  %5120 = vmatprep.subr.mxu0 0.0
  %5121 = vmatpush1.msra.mxu0 0.0
  %5122 = vmatprep.subr.mxu0 0.0
  %5123 = vmatpush1.msra.mxu0 0.0
  %5124 = vmatprep.mubr.f32.mxu0 0.0
  %5125 = vmatmul.mubr.f32.gmra.mrb[0].mxu0 %v5058
  %v5126 = vpop.f32.mrb[0].mxu0
  %v5127 = vadd.f32 0.0, %v5126
  %v5128 = vpop.f32.mrb[0].mxu0
  %5129 = vdwg.mxu0
  %s5130 = scalar_lea.vmem %s7, 128
  %v5131 = vld [vmem:[%s5130] sm:$0xff]
  %v5132 = vld [vmem:[%s5130 + $0x8] sm:$0xff]
  %v5134 = vsel %vm3996, %v5127, 0
  %5136 = vmatprep.subr.mxu0 0.0
  %5137 = vmatpush1.msra.mxu0 %v5131
  %5138 = vmatprep.subr.mxu0 0.0
  %5139 = vmatpush1.msra.mxu0 %v5132
  %5140 = vmatprep.subr.mxu0 0.0
  %5141 = vmatpush1.msra.mxu0 0.0
  %5142 = vmatprep.subr.mxu0 0.0
  %5143 = vmatpush1.msra.mxu0 0.0
  %5144 = vmatprep.subr.mxu0 0.0
  %5145 = vmatpush1.msra.mxu0 0.0
  %5146 = vmatprep.subr.mxu0 0.0
  %5147 = vmatpush1.msra.mxu0 0.0
  %5148 = vmatprep.subr.mxu0 0.0
  %5149 = vmatpush1.msra.mxu0 0.0
  %5150 = vmatprep.subr.mxu0 0.0
  %5151 = vmatpush1.msra.mxu0 0.0
  %5152 = vmatprep.subr.mxu0 0.0
  %5153 = vmatpush1.msra.mxu0 0.0
  %5154 = vmatprep.subr.mxu0 0.0
  %5155 = vmatpush1.msra.mxu0 0.0
  %5156 = vmatprep.subr.mxu0 0.0
  %5157 = vmatpush1.msra.mxu0 0.0
  %5158 = vmatprep.subr.mxu0 0.0
  %5159 = vmatpush1.msra.mxu0 0.0
  %5160 = vmatprep.subr.mxu0 0.0
  %5161 = vmatpush1.msra.mxu0 0.0
  %5162 = vmatprep.subr.mxu0 0.0
  %5163 = vmatpush1.msra.mxu0 0.0
  %5164 = vmatprep.subr.mxu0 0.0
  %5165 = vmatpush1.msra.mxu0 0.0
  %5166 = vmatprep.subr.mxu0 0.0
  %5167 = vmatpush1.msra.mxu0 0.0
  %5168 = vmatprep.subr.mxu0 0.0
  %5169 = vmatpush1.msra.mxu0 0.0
  %5170 = vmatprep.subr.mxu0 0.0
  %5171 = vmatpush1.msra.mxu0 0.0
  %5172 = vmatprep.subr.mxu0 0.0
  %5173 = vmatpush1.msra.mxu0 0.0
  %5174 = vmatprep.subr.mxu0 0.0
  %5175 = vmatpush1.msra.mxu0 0.0
  %5176 = vmatprep.subr.mxu0 0.0
  %5177 = vmatpush1.msra.mxu0 0.0
  %5178 = vmatprep.subr.mxu0 0.0
  %5179 = vmatpush1.msra.mxu0 0.0
  %5180 = vmatprep.subr.mxu0 0.0
  %5181 = vmatpush1.msra.mxu0 0.0
  %5182 = vmatprep.subr.mxu0 0.0
  %5183 = vmatpush1.msra.mxu0 0.0
  %5184 = vmatprep.subr.mxu0 0.0
  %5185 = vmatpush1.msra.mxu0 0.0
  %5186 = vmatprep.subr.mxu0 0.0
  %5187 = vmatpush1.msra.mxu0 0.0
  %5188 = vmatprep.subr.mxu0 0.0
  %5189 = vmatpush1.msra.mxu0 0.0
  %5190 = vmatprep.subr.mxu0 0.0
  %5191 = vmatpush1.msra.mxu0 0.0
  %5192 = vmatprep.subr.mxu0 0.0
  %5193 = vmatpush1.msra.mxu0 0.0
  %5194 = vmatprep.subr.mxu0 0.0
  %5195 = vmatpush1.msra.mxu0 0.0
  %5196 = vmatprep.subr.mxu0 0.0
  %5197 = vmatpush1.msra.mxu0 0.0
  %5198 = vmatprep.subr.mxu0 0.0
  %5199 = vmatpush1.msra.mxu0 0.0
  %5200 = vmatprep.mubr.f32.mxu0 0.0
  %5201 = vmatmul.mubr.f32.gmra.mrb[0].mxu0 %v5134
  %v5202 = vpop.f32.mrb[0].mxu0
  %v5203 = vadd.f32 0.0, %v5202
  %v5204 = vpop.f32.mrb[0].mxu0
  %5205 = vdwg.mxu0
  %v5206 = vadd.f32 %v5054, %v5203
  %v5207 = vld [vmem:[%s8] sm:$0x1]
  %v5209 = vlaneseq
  %v5210 = vshrl.u32 %v5209, 7
  %v5211 = vsub.s32 0, %v5210
  %v5212 = vrot.slane %v5207, %v5211
  %v5214 = vadd.f32 %v5206, %v5212
  %v5215 = vmax.f32 %v5214, 0.0
  %v5216 = vld [vmem:[%s9] sm:$0xff]
  %v5218 = vsel %vm966, %v5216, 0
  %5220 = vmatprep.subr.mxu0 0.0
  %5221 = vmatpush1.msra.mxu0 %v5215
  %5222 = vmatprep.subr.mxu0 0.0
  %5223 = vmatpush1.msra.mxu0 0.0
  %5224 = vmatprep.subr.mxu0 0.0
  %5225 = vmatpush1.msra.mxu0 0.0
  %5226 = vmatprep.subr.mxu0 0.0
  %5227 = vmatpush1.msra.mxu0 0.0
  %5228 = vmatprep.subr.mxu0 0.0
  %5229 = vmatpush1.msra.mxu0 0.0
  %5230 = vmatprep.subr.mxu0 0.0
  %5231 = vmatpush1.msra.mxu0 0.0
  %5232 = vmatprep.subr.mxu0 0.0
  %5233 = vmatpush1.msra.mxu0 0.0
  %5234 = vmatprep.subr.mxu0 0.0
  %5235 = vmatpush1.msra.mxu0 0.0
  %5236 = vmatprep.subr.mxu0 0.0
  %5237 = vmatpush1.msra.mxu0 0.0
  %5238 = vmatprep.subr.mxu0 0.0
  %5239 = vmatpush1.msra.mxu0 0.0
  %5240 = vmatprep.subr.mxu0 0.0
  %5241 = vmatpush1.msra.mxu0 0.0
  %5242 = vmatprep.subr.mxu0 0.0
  %5243 = vmatpush1.msra.mxu0 0.0
  %5244 = vmatprep.subr.mxu0 0.0
  %5245 = vmatpush1.msra.mxu0 0.0
  %5246 = vmatprep.subr.mxu0 0.0
  %5247 = vmatpush1.msra.mxu0 0.0
  %5248 = vmatprep.subr.mxu0 0.0
  %5249 = vmatpush1.msra.mxu0 0.0
  %5250 = vmatprep.subr.mxu0 0.0
  %5251 = vmatpush1.msra.mxu0 0.0
  %5252 = vmatprep.subr.mxu0 0.0
  %5253 = vmatpush1.msra.mxu0 0.0
  %5254 = vmatprep.subr.mxu0 0.0
  %5255 = vmatpush1.msra.mxu0 0.0
  %5256 = vmatprep.subr.mxu0 0.0
  %5257 = vmatpush1.msra.mxu0 0.0
  %5258 = vmatprep.subr.mxu0 0.0
  %5259 = vmatpush1.msra.mxu0 0.0
  %5260 = vmatprep.subr.mxu0 0.0
  %5261 = vmatpush1.msra.mxu0 0.0
  %5262 = vmatprep.subr.mxu0 0.0
  %5263 = vmatpush1.msra.mxu0 0.0
  %5264 = vmatprep.subr.mxu0 0.0
  %5265 = vmatpush1.msra.mxu0 0.0
  %5266 = vmatprep.subr.mxu0 0.0
  %5267 = vmatpush1.msra.mxu0 0.0
  %5268 = vmatprep.subr.mxu0 0.0
  %5269 = vmatpush1.msra.mxu0 0.0
  %5270 = vmatprep.subr.mxu0 0.0
  %5271 = vmatpush1.msra.mxu0 0.0
  %5272 = vmatprep.subr.mxu0 0.0
  %5273 = vmatpush1.msra.mxu0 0.0
  %5274 = vmatprep.subr.mxu0 0.0
  %5275 = vmatpush1.msra.mxu0 0.0
  %5276 = vmatprep.subr.mxu0 0.0
  %5277 = vmatpush1.msra.mxu0 0.0
  %5278 = vmatprep.subr.mxu0 0.0
  %5279 = vmatpush1.msra.mxu0 0.0
  %5280 = vmatprep.subr.mxu0 0.0
  %5281 = vmatpush1.msra.mxu0 0.0
  %5282 = vmatprep.subr.mxu0 0.0
  %5283 = vmatpush1.msra.mxu0 0.0
  %5284 = vmatprep.mubr.f32.mxu0 0.0
  %5285 = vmatmul.mubr.f32.gmra.mrb[0].mxu0 %v5218
  %v5286 = vpop.f32.mrb[0].mxu0
  %v5287 = vadd.f32 0.0, %v5286
  %v5288 = vpop.f32.mrb[0].mxu0
  %5289 = vdwg.mxu0
  %v5290 = vld [vmem:[%s10] sm:$0xff]
  %v5291 = vld [vmem:[%s10 + $0x8] sm:$0xff]
  %s5292 = scalar_lea.vmem %s9, 8
  %v5293 = vld [vmem:[%s5292] sm:$0xff]
  %v5295 = vsel %vm966, %v5293, 0
  %5297 = vmatprep.subr.mxu0 0.0
  %5298 = vmatpush1.msra.mxu0 %v5215
  %5299 = vmatprep.subr.mxu0 0.0
  %5300 = vmatpush1.msra.mxu0 0.0
  %5301 = vmatprep.subr.mxu0 0.0
  %5302 = vmatpush1.msra.mxu0 0.0
  %5303 = vmatprep.subr.mxu0 0.0
  %5304 = vmatpush1.msra.mxu0 0.0
  %5305 = vmatprep.subr.mxu0 0.0
  %5306 = vmatpush1.msra.mxu0 0.0
  %5307 = vmatprep.subr.mxu0 0.0
  %5308 = vmatpush1.msra.mxu0 0.0
  %5309 = vmatprep.subr.mxu0 0.0
  %5310 = vmatpush1.msra.mxu0 0.0
  %5311 = vmatprep.subr.mxu0 0.0
  %5312 = vmatpush1.msra.mxu0 0.0
  %5313 = vmatprep.subr.mxu0 0.0
  %5314 = vmatpush1.msra.mxu0 0.0
  %5315 = vmatprep.subr.mxu0 0.0
  %5316 = vmatpush1.msra.mxu0 0.0
  %5317 = vmatprep.subr.mxu0 0.0
  %5318 = vmatpush1.msra.mxu0 0.0
  %5319 = vmatprep.subr.mxu0 0.0
  %5320 = vmatpush1.msra.mxu0 0.0
  %5321 = vmatprep.subr.mxu0 0.0
  %5322 = vmatpush1.msra.mxu0 0.0
  %5323 = vmatprep.subr.mxu0 0.0
  %5324 = vmatpush1.msra.mxu0 0.0
  %5325 = vmatprep.subr.mxu0 0.0
  %5326 = vmatpush1.msra.mxu0 0.0
  %5327 = vmatprep.subr.mxu0 0.0
  %5328 = vmatpush1.msra.mxu0 0.0
  %5329 = vmatprep.subr.mxu0 0.0
  %5330 = vmatpush1.msra.mxu0 0.0
  %5331 = vmatprep.subr.mxu0 0.0
  %5332 = vmatpush1.msra.mxu0 0.0
  %5333 = vmatprep.subr.mxu0 0.0
  %5334 = vmatpush1.msra.mxu0 0.0
  %5335 = vmatprep.subr.mxu0 0.0
  %5336 = vmatpush1.msra.mxu0 0.0
  %5337 = vmatprep.subr.mxu0 0.0
  %5338 = vmatpush1.msra.mxu0 0.0
  %5339 = vmatprep.subr.mxu0 0.0
  %5340 = vmatpush1.msra.mxu0 0.0
  %5341 = vmatprep.subr.mxu0 0.0
  %5342 = vmatpush1.msra.mxu0 0.0
  %5343 = vmatprep.subr.mxu0 0.0
  %5344 = vmatpush1.msra.mxu0 0.0
  %5345 = vmatprep.subr.mxu0 0.0
  %5346 = vmatpush1.msra.mxu0 0.0
  %5347 = vmatprep.subr.mxu0 0.0
  %5348 = vmatpush1.msra.mxu0 0.0
  %5349 = vmatprep.subr.mxu0 0.0
  %5350 = vmatpush1.msra.mxu0 0.0
  %5351 = vmatprep.subr.mxu0 0.0
  %5352 = vmatpush1.msra.mxu0 0.0
  %5353 = vmatprep.subr.mxu0 0.0
  %5354 = vmatpush1.msra.mxu0 0.0
  %5355 = vmatprep.subr.mxu0 0.0
  %5356 = vmatpush1.msra.mxu0 0.0
  %5357 = vmatprep.subr.mxu0 0.0
  %5358 = vmatpush1.msra.mxu0 0.0
  %5359 = vmatprep.subr.mxu0 0.0
  %5360 = vmatpush1.msra.mxu0 0.0
  %5361 = vmatprep.mubr.f32.mxu0 0.0
  %5362 = vmatmul.mubr.f32.gmra.mrb[0].mxu0 %v5295
  %v5363 = vpop.f32.mrb[0].mxu0
  %v5364 = vadd.f32 0.0, %v5363
  %v5365 = vpop.f32.mrb[0].mxu0
  %5366 = vdwg.mxu0
  %s5367 = scalar_lea.vmem %s10, 16
  %v5368 = vld [vmem:[%s5367] sm:$0xff]
  %v5369 = vld [vmem:[%s5367 + $0x8] sm:$0xff]
  %v5371 = vsel %vm3996, %v5364, 0
  %5373 = vmatprep.subr.mxu0 0.0
  %5374 = vmatpush1.msra.mxu0 %v5368
  %5375 = vmatprep.subr.mxu0 0.0
  %5376 = vmatpush1.msra.mxu0 %v5369
  %5377 = vmatprep.subr.mxu0 0.0
  %5378 = vmatpush1.msra.mxu0 0.0
  %5379 = vmatprep.subr.mxu0 0.0
  %5380 = vmatpush1.msra.mxu0 0.0
  %5381 = vmatprep.subr.mxu0 0.0
  %5382 = vmatpush1.msra.mxu0 0.0
  %5383 = vmatprep.subr.mxu0 0.0
  %5384 = vmatpush1.msra.mxu0 0.0
  %5385 = vmatprep.subr.mxu0 0.0
  %5386 = vmatpush1.msra.mxu0 0.0
  %5387 = vmatprep.subr.mxu0 0.0
  %5388 = vmatpush1.msra.mxu0 0.0
  %5389 = vmatprep.subr.mxu0 0.0
  %5390 = vmatpush1.msra.mxu0 0.0
  %5391 = vmatprep.subr.mxu0 0.0
  %5392 = vmatpush1.msra.mxu0 0.0
  %5393 = vmatprep.subr.mxu0 0.0
  %5394 = vmatpush1.msra.mxu0 0.0
  %5395 = vmatprep.subr.mxu0 0.0
  %5396 = vmatpush1.msra.mxu0 0.0
  %5397 = vmatprep.subr.mxu0 0.0
  %5398 = vmatpush1.msra.mxu0 0.0
  %5399 = vmatprep.subr.mxu0 0.0
  %5400 = vmatpush1.msra.mxu0 0.0
  %5401 = vmatprep.subr.mxu0 0.0
  %5402 = vmatpush1.msra.mxu0 0.0
  %5403 = vmatprep.subr.mxu0 0.0
  %5404 = vmatpush1.msra.mxu0 0.0
  %5405 = vmatprep.subr.mxu0 0.0
  %5406 = vmatpush1.msra.mxu0 0.0
  %5407 = vmatprep.subr.mxu0 0.0
  %5408 = vmatpush1.msra.mxu0 0.0
  %5409 = vmatprep.subr.mxu0 0.0
  %5410 = vmatpush1.msra.mxu0 0.0
  %5411 = vmatprep.subr.mxu0 0.0
  %5412 = vmatpush1.msra.mxu0 0.0
  %5413 = vmatprep.subr.mxu0 0.0
  %5414 = vmatpush1.msra.mxu0 0.0
  %5415 = vmatprep.subr.mxu0 0.0
  %5416 = vmatpush1.msra.mxu0 0.0
  %5417 = vmatprep.subr.mxu0 0.0
  %5418 = vmatpush1.msra.mxu0 0.0
  %5419 = vmatprep.subr.mxu0 0.0
  %5420 = vmatpush1.msra.mxu0 0.0
  %5421 = vmatprep.subr.mxu0 0.0
  %5422 = vmatpush1.msra.mxu0 0.0
  %5423 = vmatprep.subr.mxu0 0.0
  %5424 = vmatpush1.msra.mxu0 0.0
  %5425 = vmatprep.subr.mxu0 0.0
  %5426 = vmatpush1.msra.mxu0 0.0
  %5427 = vmatprep.subr.mxu0 0.0
  %5428 = vmatpush1.msra.mxu0 0.0
  %5429 = vmatprep.subr.mxu0 0.0
  %5430 = vmatpush1.msra.mxu0 0.0
  %5431 = vmatprep.subr.mxu0 0.0
  %5432 = vmatpush1.msra.mxu0 0.0
  %5433 = vmatprep.subr.mxu0 0.0
  %5434 = vmatpush1.msra.mxu0 0.0
  %5435 = vmatprep.subr.mxu0 0.0
  %5436 = vmatpush1.msra.mxu0 0.0
  %5437 = vmatprep.mubr.f32.mxu0 0.0
  %5438 = vmatmul.mubr.f32.gmra.mrb[0].mxu0 %v5371
  %v5439 = vpop.f32.mrb[0].mxu0
  %v5440 = vadd.f32 0.0, %v5439
  %v5441 = vpop.f32.mrb[0].mxu0
  %5442 = vdwg.mxu0
  %v5444 = vsel %vm3996, %v5287, 0
  %5446 = vmatprep.subr.mxu0 0.0
  %5447 = vmatpush1.msra.mxu0 %v5290
  %5448 = vmatprep.subr.mxu0 0.0
  %5449 = vmatpush1.msra.mxu0 %v5291
  %5450 = vmatprep.subr.mxu0 0.0
  %5451 = vmatpush1.msra.mxu0 0.0
  %5452 = vmatprep.subr.mxu0 0.0
  %5453 = vmatpush1.msra.mxu0 0.0
  %5454 = vmatprep.subr.mxu0 0.0
  %5455 = vmatpush1.msra.mxu0 0.0
  %5456 = vmatprep.subr.mxu0 0.0
  %5457 = vmatpush1.msra.mxu0 0.0
  %5458 = vmatprep.subr.mxu0 0.0
  %5459 = vmatpush1.msra.mxu0 0.0
  %5460 = vmatprep.subr.mxu0 0.0
  %5461 = vmatpush1.msra.mxu0 0.0
  %5462 = vmatprep.subr.mxu0 0.0
  %5463 = vmatpush1.msra.mxu0 0.0
  %5464 = vmatprep.subr.mxu0 0.0
  %5465 = vmatpush1.msra.mxu0 0.0
  %5466 = vmatprep.subr.mxu0 0.0
  %5467 = vmatpush1.msra.mxu0 0.0
  %5468 = vmatprep.subr.mxu0 0.0
  %5469 = vmatpush1.msra.mxu0 0.0
  %5470 = vmatprep.subr.mxu0 0.0
  %5471 = vmatpush1.msra.mxu0 0.0
  %5472 = vmatprep.subr.mxu0 0.0
  %5473 = vmatpush1.msra.mxu0 0.0
  %5474 = vmatprep.subr.mxu0 0.0
  %5475 = vmatpush1.msra.mxu0 0.0
  %5476 = vmatprep.subr.mxu0 0.0
  %5477 = vmatpush1.msra.mxu0 0.0
  %5478 = vmatprep.subr.mxu0 0.0
  %5479 = vmatpush1.msra.mxu0 0.0
  %5480 = vmatprep.subr.mxu0 0.0
  %5481 = vmatpush1.msra.mxu0 0.0
  %5482 = vmatprep.subr.mxu0 0.0
  %5483 = vmatpush1.msra.mxu0 0.0
  %5484 = vmatprep.subr.mxu0 0.0
  %5485 = vmatpush1.msra.mxu0 0.0
  %5486 = vmatprep.subr.mxu0 0.0
  %5487 = vmatpush1.msra.mxu0 0.0
  %5488 = vmatprep.subr.mxu0 0.0
  %5489 = vmatpush1.msra.mxu0 0.0
  %5490 = vmatprep.subr.mxu0 0.0
  %5491 = vmatpush1.msra.mxu0 0.0
  %5492 = vmatprep.subr.mxu0 0.0
  %5493 = vmatpush1.msra.mxu0 0.0
  %5494 = vmatprep.subr.mxu0 0.0
  %5495 = vmatpush1.msra.mxu0 0.0
  %5496 = vmatprep.subr.mxu0 0.0
  %5497 = vmatpush1.msra.mxu0 0.0
  %5498 = vmatprep.subr.mxu0 0.0
  %5499 = vmatpush1.msra.mxu0 0.0
  %5500 = vmatprep.subr.mxu0 0.0
  %5501 = vmatpush1.msra.mxu0 0.0
  %5502 = vmatprep.subr.mxu0 0.0
  %5503 = vmatpush1.msra.mxu0 0.0
  %5504 = vmatprep.subr.mxu0 0.0
  %5505 = vmatpush1.msra.mxu0 0.0
  %5506 = vmatprep.subr.mxu0 0.0
  %5507 = vmatpush1.msra.mxu0 0.0
  %5508 = vmatprep.subr.mxu0 0.0
  %5509 = vmatpush1.msra.mxu0 0.0
  %5510 = vmatprep.mubr.f32.mxu0 0.0
  %5511 = vmatmul.mubr.f32.gmra.mrb[0].mxu0 %v5444
  %v5512 = vpop.f32.mrb[0].mxu0
  %v5513 = vadd.f32 %v5440, %v5512
  %v5514 = vpop.f32.mrb[0].mxu0
  %5515 = vdwg.mxu0
  %s5516 = scalar_lea.vmem %s9, 16
  %v5517 = vld [vmem:[%s5516] sm:$0xff]
  %v5519 = vsel %vm966, %v5517, 0
  %5521 = vmatprep.subr.mxu0 0.0
  %5522 = vmatpush1.msra.mxu0 %v5215
  %5523 = vmatprep.subr.mxu0 0.0
  %5524 = vmatpush1.msra.mxu0 0.0
  %5525 = vmatprep.subr.mxu0 0.0
  %5526 = vmatpush1.msra.mxu0 0.0
  %5527 = vmatprep.subr.mxu0 0.0
  %5528 = vmatpush1.msra.mxu0 0.0
  %5529 = vmatprep.subr.mxu0 0.0
  %5530 = vmatpush1.msra.mxu0 0.0
  %5531 = vmatprep.subr.mxu0 0.0
  %5532 = vmatpush1.msra.mxu0 0.0
  %5533 = vmatprep.subr.mxu0 0.0
  %5534 = vmatpush1.msra.mxu0 0.0
  %5535 = vmatprep.subr.mxu0 0.0
  %5536 = vmatpush1.msra.mxu0 0.0
  %5537 = vmatprep.subr.mxu0 0.0
  %5538 = vmatpush1.msra.mxu0 0.0
  %5539 = vmatprep.subr.mxu0 0.0
  %5540 = vmatpush1.msra.mxu0 0.0
  %5541 = vmatprep.subr.mxu0 0.0
  %5542 = vmatpush1.msra.mxu0 0.0
  %5543 = vmatprep.subr.mxu0 0.0
  %5544 = vmatpush1.msra.mxu0 0.0
  %5545 = vmatprep.subr.mxu0 0.0
  %5546 = vmatpush1.msra.mxu0 0.0
  %5547 = vmatprep.subr.mxu0 0.0
  %5548 = vmatpush1.msra.mxu0 0.0
  %5549 = vmatprep.subr.mxu0 0.0
  %5550 = vmatpush1.msra.mxu0 0.0
  %5551 = vmatprep.subr.mxu0 0.0
  %5552 = vmatpush1.msra.mxu0 0.0
  %5553 = vmatprep.subr.mxu0 0.0
  %5554 = vmatpush1.msra.mxu0 0.0
  %5555 = vmatprep.subr.mxu0 0.0
  %5556 = vmatpush1.msra.mxu0 0.0
  %5557 = vmatprep.subr.mxu0 0.0
  %5558 = vmatpush1.msra.mxu0 0.0
  %5559 = vmatprep.subr.mxu0 0.0
  %5560 = vmatpush1.msra.mxu0 0.0
  %5561 = vmatprep.subr.mxu0 0.0
  %5562 = vmatpush1.msra.mxu0 0.0
  %5563 = vmatprep.subr.mxu0 0.0
  %5564 = vmatpush1.msra.mxu0 0.0
  %5565 = vmatprep.subr.mxu0 0.0
  %5566 = vmatpush1.msra.mxu0 0.0
  %5567 = vmatprep.subr.mxu0 0.0
  %5568 = vmatpush1.msra.mxu0 0.0
  %5569 = vmatprep.subr.mxu0 0.0
  %5570 = vmatpush1.msra.mxu0 0.0
  %5571 = vmatprep.subr.mxu0 0.0
  %5572 = vmatpush1.msra.mxu0 0.0
  %5573 = vmatprep.subr.mxu0 0.0
  %5574 = vmatpush1.msra.mxu0 0.0
  %5575 = vmatprep.subr.mxu0 0.0
  %5576 = vmatpush1.msra.mxu0 0.0
  %5577 = vmatprep.subr.mxu0 0.0
  %5578 = vmatpush1.msra.mxu0 0.0
  %5579 = vmatprep.subr.mxu0 0.0
  %5580 = vmatpush1.msra.mxu0 0.0
  %5581 = vmatprep.subr.mxu0 0.0
  %5582 = vmatpush1.msra.mxu0 0.0
  %5583 = vmatprep.subr.mxu0 0.0
  %5584 = vmatpush1.msra.mxu0 0.0
  %5585 = vmatprep.mubr.f32.mxu0 0.0
  %5586 = vmatmul.mubr.f32.gmra.mrb[0].mxu0 %v5519
  %v5587 = vpop.f32.mrb[0].mxu0
  %v5588 = vadd.f32 0.0, %v5587
  %v5589 = vpop.f32.mrb[0].mxu0
  %5590 = vdwg.mxu0
  %s5591 = scalar_lea.vmem %s10, 32
  %v5592 = vld [vmem:[%s5591] sm:$0xff]
  %v5593 = vld [vmem:[%s5591 + $0x8] sm:$0xff]
  %v5595 = vsel %vm3996, %v5588, 0
  %5597 = vmatprep.subr.mxu0 0.0
  %5598 = vmatpush1.msra.mxu0 %v5592
  %5599 = vmatprep.subr.mxu0 0.0
  %5600 = vmatpush1.msra.mxu0 %v5593
  %5601 = vmatprep.subr.mxu0 0.0
  %5602 = vmatpush1.msra.mxu0 0.0
  %5603 = vmatprep.subr.mxu0 0.0
  %5604 = vmatpush1.msra.mxu0 0.0
  %5605 = vmatprep.subr.mxu0 0.0
  %5606 = vmatpush1.msra.mxu0 0.0
  %5607 = vmatprep.subr.mxu0 0.0
  %5608 = vmatpush1.msra.mxu0 0.0
  %5609 = vmatprep.subr.mxu0 0.0
  %5610 = vmatpush1.msra.mxu0 0.0
  %5611 = vmatprep.subr.mxu0 0.0
  %5612 = vmatpush1.msra.mxu0 0.0
  %5613 = vmatprep.subr.mxu0 0.0
  %5614 = vmatpush1.msra.mxu0 0.0
  %5615 = vmatprep.subr.mxu0 0.0
  %5616 = vmatpush1.msra.mxu0 0.0
  %5617 = vmatprep.subr.mxu0 0.0
  %5618 = vmatpush1.msra.mxu0 0.0
  %5619 = vmatprep.subr.mxu0 0.0
  %5620 = vmatpush1.msra.mxu0 0.0
  %5621 = vmatprep.subr.mxu0 0.0
  %5622 = vmatpush1.msra.mxu0 0.0
  %5623 = vmatprep.subr.mxu0 0.0
  %5624 = vmatpush1.msra.mxu0 0.0
  %5625 = vmatprep.subr.mxu0 0.0
  %5626 = vmatpush1.msra.mxu0 0.0
  %5627 = vmatprep.subr.mxu0 0.0
  %5628 = vmatpush1.msra.mxu0 0.0
  %5629 = vmatprep.subr.mxu0 0.0
  %5630 = vmatpush1.msra.mxu0 0.0
  %5631 = vmatprep.subr.mxu0 0.0
  %5632 = vmatpush1.msra.mxu0 0.0
  %5633 = vmatprep.subr.mxu0 0.0
  %5634 = vmatpush1.msra.mxu0 0.0
  %5635 = vmatprep.subr.mxu0 0.0
  %5636 = vmatpush1.msra.mxu0 0.0
  %5637 = vmatprep.subr.mxu0 0.0
  %5638 = vmatpush1.msra.mxu0 0.0
  %5639 = vmatprep.subr.mxu0 0.0
  %5640 = vmatpush1.msra.mxu0 0.0
  %5641 = vmatprep.subr.mxu0 0.0
  %5642 = vmatpush1.msra.mxu0 0.0
  %5643 = vmatprep.subr.mxu0 0.0
  %5644 = vmatpush1.msra.mxu0 0.0
  %5645 = vmatprep.subr.mxu0 0.0
  %5646 = vmatpush1.msra.mxu0 0.0
  %5647 = vmatprep.subr.mxu0 0.0
  %5648 = vmatpush1.msra.mxu0 0.0
  %5649 = vmatprep.subr.mxu0 0.0
  %5650 = vmatpush1.msra.mxu0 0.0
  %5651 = vmatprep.subr.mxu0 0.0
  %5652 = vmatpush1.msra.mxu0 0.0
  %5653 = vmatprep.subr.mxu0 0.0
  %5654 = vmatpush1.msra.mxu0 0.0
  %5655 = vmatprep.subr.mxu0 0.0
  %5656 = vmatpush1.msra.mxu0 0.0
  %5657 = vmatprep.subr.mxu0 0.0
  %5658 = vmatpush1.msra.mxu0 0.0
  %5659 = vmatprep.subr.mxu0 0.0
  %5660 = vmatpush1.msra.mxu0 0.0
  %5661 = vmatprep.mubr.f32.mxu0 0.0
  %5662 = vmatmul.mubr.f32.gmra.mrb[0].mxu0 %v5595
  %v5663 = vpop.f32.mrb[0].mxu0
  %v5664 = vadd.f32 0.0, %v5663
  %v5665 = vpop.f32.mrb[0].mxu0
  %5666 = vdwg.mxu0
  %v5667 = vadd.f32 %v5513, %v5664
  %s5668 = scalar_lea.vmem %s9, 24
  %v5669 = vld [vmem:[%s5668] sm:$0xff]
  %v5671 = vsel %vm966, %v5669, 0
  %5673 = vmatprep.subr.mxu0 0.0
  %5674 = vmatpush1.msra.mxu0 %v5215
  %5675 = vmatprep.subr.mxu0 0.0
  %5676 = vmatpush1.msra.mxu0 0.0
  %5677 = vmatprep.subr.mxu0 0.0
  %5678 = vmatpush1.msra.mxu0 0.0
  %5679 = vmatprep.subr.mxu0 0.0
  %5680 = vmatpush1.msra.mxu0 0.0
  %5681 = vmatprep.subr.mxu0 0.0
  %5682 = vmatpush1.msra.mxu0 0.0
  %5683 = vmatprep.subr.mxu0 0.0
  %5684 = vmatpush1.msra.mxu0 0.0
  %5685 = vmatprep.subr.mxu0 0.0
  %5686 = vmatpush1.msra.mxu0 0.0
  %5687 = vmatprep.subr.mxu0 0.0
  %5688 = vmatpush1.msra.mxu0 0.0
  %5689 = vmatprep.subr.mxu0 0.0
  %5690 = vmatpush1.msra.mxu0 0.0
  %5691 = vmatprep.subr.mxu0 0.0
  %5692 = vmatpush1.msra.mxu0 0.0
  %5693 = vmatprep.subr.mxu0 0.0
  %5694 = vmatpush1.msra.mxu0 0.0
  %5695 = vmatprep.subr.mxu0 0.0
  %5696 = vmatpush1.msra.mxu0 0.0
  %5697 = vmatprep.subr.mxu0 0.0
  %5698 = vmatpush1.msra.mxu0 0.0
  %5699 = vmatprep.subr.mxu0 0.0
  %5700 = vmatpush1.msra.mxu0 0.0
  %5701 = vmatprep.subr.mxu0 0.0
  %5702 = vmatpush1.msra.mxu0 0.0
  %5703 = vmatprep.subr.mxu0 0.0
  %5704 = vmatpush1.msra.mxu0 0.0
  %5705 = vmatprep.subr.mxu0 0.0
  %5706 = vmatpush1.msra.mxu0 0.0
  %5707 = vmatprep.subr.mxu0 0.0
  %5708 = vmatpush1.msra.mxu0 0.0
  %5709 = vmatprep.subr.mxu0 0.0
  %5710 = vmatpush1.msra.mxu0 0.0
  %5711 = vmatprep.subr.mxu0 0.0
  %5712 = vmatpush1.msra.mxu0 0.0
  %5713 = vmatprep.subr.mxu0 0.0
  %5714 = vmatpush1.msra.mxu0 0.0
  %5715 = vmatprep.subr.mxu0 0.0
  %5716 = vmatpush1.msra.mxu0 0.0
  %5717 = vmatprep.subr.mxu0 0.0
  %5718 = vmatpush1.msra.mxu0 0.0
  %5719 = vmatprep.subr.mxu0 0.0
  %5720 = vmatpush1.msra.mxu0 0.0
  %5721 = vmatprep.subr.mxu0 0.0
  %5722 = vmatpush1.msra.mxu0 0.0
  %5723 = vmatprep.subr.mxu0 0.0
  %5724 = vmatpush1.msra.mxu0 0.0
  %5725 = vmatprep.subr.mxu0 0.0
  %5726 = vmatpush1.msra.mxu0 0.0
  %5727 = vmatprep.subr.mxu0 0.0
  %5728 = vmatpush1.msra.mxu0 0.0
  %5729 = vmatprep.subr.mxu0 0.0
  %5730 = vmatpush1.msra.mxu0 0.0
  %5731 = vmatprep.subr.mxu0 0.0
  %5732 = vmatpush1.msra.mxu0 0.0
  %5733 = vmatprep.subr.mxu0 0.0
  %5734 = vmatpush1.msra.mxu0 0.0
  %5735 = vmatprep.subr.mxu0 0.0
  %5736 = vmatpush1.msra.mxu0 0.0
  %5737 = vmatprep.mubr.f32.mxu0 0.0
  %5738 = vmatmul.mubr.f32.gmra.mrb[0].mxu0 %v5671
  %v5739 = vpop.f32.mrb[0].mxu0
  %v5740 = vadd.f32 0.0, %v5739
  %v5741 = vpop.f32.mrb[0].mxu0
  %5742 = vdwg.mxu0
  %s5743 = scalar_lea.vmem %s10, 48
  %v5744 = vld [vmem:[%s5743] sm:$0xff]
  %v5745 = vld [vmem:[%s5743 + $0x8] sm:$0xff]
  %v5747 = vsel %vm3996, %v5740, 0
  %5749 = vmatprep.subr.mxu0 0.0
  %5750 = vmatpush1.msra.mxu0 %v5744
  %5751 = vmatprep.subr.mxu0 0.0
  %5752 = vmatpush1.msra.mxu0 %v5745
  %5753 = vmatprep.subr.mxu0 0.0
  %5754 = vmatpush1.msra.mxu0 0.0
  %5755 = vmatprep.subr.mxu0 0.0
  %5756 = vmatpush1.msra.mxu0 0.0
  %5757 = vmatprep.subr.mxu0 0.0
  %5758 = vmatpush1.msra.mxu0 0.0
  %5759 = vmatprep.subr.mxu0 0.0
  %5760 = vmatpush1.msra.mxu0 0.0
  %5761 = vmatprep.subr.mxu0 0.0
  %5762 = vmatpush1.msra.mxu0 0.0
  %5763 = vmatprep.subr.mxu0 0.0
  %5764 = vmatpush1.msra.mxu0 0.0
  %5765 = vmatprep.subr.mxu0 0.0
  %5766 = vmatpush1.msra.mxu0 0.0
  %5767 = vmatprep.subr.mxu0 0.0
  %5768 = vmatpush1.msra.mxu0 0.0
  %5769 = vmatprep.subr.mxu0 0.0
  %5770 = vmatpush1.msra.mxu0 0.0
  %5771 = vmatprep.subr.mxu0 0.0
  %5772 = vmatpush1.msra.mxu0 0.0
  %5773 = vmatprep.subr.mxu0 0.0
  %5774 = vmatpush1.msra.mxu0 0.0
  %5775 = vmatprep.subr.mxu0 0.0
  %5776 = vmatpush1.msra.mxu0 0.0
  %5777 = vmatprep.subr.mxu0 0.0
  %5778 = vmatpush1.msra.mxu0 0.0
  %5779 = vmatprep.subr.mxu0 0.0
  %5780 = vmatpush1.msra.mxu0 0.0
  %5781 = vmatprep.subr.mxu0 0.0
  %5782 = vmatpush1.msra.mxu0 0.0
  %5783 = vmatprep.subr.mxu0 0.0
  %5784 = vmatpush1.msra.mxu0 0.0
  %5785 = vmatprep.subr.mxu0 0.0
  %5786 = vmatpush1.msra.mxu0 0.0
  %5787 = vmatprep.subr.mxu0 0.0
  %5788 = vmatpush1.msra.mxu0 0.0
  %5789 = vmatprep.subr.mxu0 0.0
  %5790 = vmatpush1.msra.mxu0 0.0
  %5791 = vmatprep.subr.mxu0 0.0
  %5792 = vmatpush1.msra.mxu0 0.0
  %5793 = vmatprep.subr.mxu0 0.0
  %5794 = vmatpush1.msra.mxu0 0.0
  %5795 = vmatprep.subr.mxu0 0.0
  %5796 = vmatpush1.msra.mxu0 0.0
  %5797 = vmatprep.subr.mxu0 0.0
  %5798 = vmatpush1.msra.mxu0 0.0
  %5799 = vmatprep.subr.mxu0 0.0
  %5800 = vmatpush1.msra.mxu0 0.0
  %5801 = vmatprep.subr.mxu0 0.0
  %5802 = vmatpush1.msra.mxu0 0.0
  %5803 = vmatprep.subr.mxu0 0.0
  %5804 = vmatpush1.msra.mxu0 0.0
  %5805 = vmatprep.subr.mxu0 0.0
  %5806 = vmatpush1.msra.mxu0 0.0
  %5807 = vmatprep.subr.mxu0 0.0
  %5808 = vmatpush1.msra.mxu0 0.0
  %5809 = vmatprep.subr.mxu0 0.0
  %5810 = vmatpush1.msra.mxu0 0.0
  %5811 = vmatprep.subr.mxu0 0.0
  %5812 = vmatpush1.msra.mxu0 0.0
  %5813 = vmatprep.mubr.f32.mxu0 0.0
  %5814 = vmatmul.mubr.f32.gmra.mrb[0].mxu0 %v5747
  %v5815 = vpop.f32.mrb[0].mxu0
  %v5816 = vadd.f32 0.0, %v5815
  %v5817 = vpop.f32.mrb[0].mxu0
  %5818 = vdwg.mxu0
  %v5819 = vadd.f32 %v5667, %v5816
  %v5820 = vld [vmem:[%s11] sm:$0x1]
  %v5822 = vlaneseq
  %v5823 = vshrl.u32 %v5822, 7
  %v5824 = vsub.s32 0, %v5823
  %v5825 = vrot.slane %v5820, %v5824
  %v5827 = vadd.f32 %v5819, %v5825
  %5828 = vst.msk [vmem:[%s12] sm:$0xff] %vm3996, %v5827
  // Predicated region
  $region50: #{encoder_forward.1} parent=0 // pred_check
    _
  $region51: #{encoder_forward.1} parent=0 // pred_check_branch
    %5830 = sbr.rel (0) target = $region53
  $region52: #{encoder_forward.1} parent=0 // pred_region
    _
  $region53: #{encoder_forward.1} parent=0 // pred_fallthru
    _
  // Predicated region
  $region54: #{encoder_forward.1} parent=0 // pred_check
    _
  $region55: #{encoder_forward.1} parent=0 // pred_check_branch
    %5832 = sbr.rel (0) target = $region57
  $region56: #{encoder_forward.1} parent=0 // pred_region
    _
  $region57: #{encoder_forward.1} parent=0 // pred_fallthru
    _

</llo_original>
